<compile_context>
chip_gen: v6e
topology: v6e:2x2x1
jax: 0.10.0
libtpu: 0.0.40
codegen_flags: <defaults>
</compile_context>

<pallas_src>
import math
import numpy as np
import jax
import jax.numpy as jnp
from jax.experimental import pallas as pl
from jax.experimental.pallas import tpu as pltpu


_LANE = 128
_SUBLANE = 8


def _round_up(x, m):
    return (x + m - 1) // m * m


def _build_fixed_table(c_in, d_model):
    """The PyTorch FixedEmbedding init, built once on the host with numpy."""
    w = np.zeros((c_in, d_model), np.float32)
    position = np.arange(c_in, dtype=np.float32)[:, None]
    div_term = np.exp(
        np.arange(0, d_model, 2, dtype=np.float32) * -(math.log(10000.0) / d_model)
    )
    w[:, 0::2] = np.sin(position * div_term)
    w[:, 1::2] = np.cos(position * div_term)
    return w


def _embed_kernel(idx_ref, tbl_ref, out_ref):
    """Gather one tile of rows: out[r, :] = tbl[idx[r], :].

    idx_ref : (t, 1)            int32
    tbl_ref : (c_pad, d_model)  float32   (full lane-padded table, resident)
    out_ref : (t, d_model)      float32

    The gather is a one-hot (t, c_pad) x (c_pad, d_model) MXU matmul;
    precision=HIGHEST keeps the f32 emulation exact for 0/1 weights.
    """
    t = idx_ref.shape[0]
    c_pad = tbl_ref.shape[0]
    idx = idx_ref[...]                                            # (t, 1)
    cols = jax.lax.broadcasted_iota(jnp.int32, (t, c_pad), 1)     # (t, c_pad)
    one_hot = (cols == idx).astype(jnp.float32)                   # (t, c_pad)
    out_ref[...] = jnp.dot(
        one_hot,
        tbl_ref[...],
        preferred_element_type=jnp.float32,
        precision=jax.lax.Precision.HIGHEST,
    ).astype(out_ref.dtype)


def _choose_tile(n, d_model, c_pad):
    """Pick a row-tile size from a VMEM budget that counts every consumer."""
    # Per-row VMEM cost (bytes) of a tile of t rows:
    #   output   : 2 pipeline buffers * d_model * 4, + ~1x d_model * 4 for the
    #              dot result before the store
    #   indices  : 2 buffers * 128 * 4   ((t, 1) int32 is lane-padded in VMEM)
    #   one-hot  : ~2 * c_pad * 4        (one-hot + iota temporaries)
    per_row = 3 * 4 * d_model + 2 * 4 * _LANE + 2 * 4 * c_pad
    # Fixed VMEM: the table is double-buffered by the pipeline even though its
    # index_map is constant across the grid.
    fixed = 2 * c_pad * d_model * 4
    budget = 12 << 20            # fits the v5e 16 MiB scoped-VMEM default
    t = (budget - fixed) // per_row
    t = min(t, 8192)             # big tiles amortize the ~0.35 us/step overhead
    if t >= n:                   # never collapse to a single grid step:
        t = -(-n // 2)           # both v7x TensorCores should get work
    t = max(256, int(t))
    return max(_SUBLANE, (t // _SUBLANE) * _SUBLANE)


class FixedEmbeddingPallas:
    """JAX/Pallas equivalent of FixedEmbedding: frozen sinusoidal table lookup."""

    # Below this many indices a plain XLA gather beats the fixed pallas_call
    # overhead and fuses with its neighbours.
    _MIN_PALLAS_INDICES = 1024

    def __init__(self, c_in, d_model):
        assert d_model % 2 == 0, "d_model must be even (matches the PyTorch init)"
        self.c_in = int(c_in)
        self.d_model = int(d_model)
        self.c_pad = _round_up(self.c_in, _LANE)

        w = _build_fixed_table(self.c_in, self.d_model)
        self.weight = jnp.asarray(w)                      # exact PyTorch table
        w_pad = np.zeros((self.c_pad, self.d_model), np.float32)
        w_pad[: self.c_in] = w                            # zero rows: never hit
        self.weight_padded = jnp.asarray(w_pad)

    def __call__(self, x):
        x = jnp.asarray(x)
        orig_shape = x.shape
        idx = x.reshape(-1).astype(jnp.int32)
        n = int(idx.shape[0])
        d_model, c_pad = self.d_model, self.c_pad

        if n < self._MIN_PALLAS_INDICES:
            # Small calendar-feature batches: launch overhead dominates the
            # gather itself; let XLA do (and fuse) it.
            out = jnp.take(self.weight, idx, axis=0)
            return jax.lax.stop_gradient(out.reshape(*orig_shape, d_model))

        t = _choose_tile(n, d_model, c_pad)
        grid = (pl.cdiv(n, t),)

        cost = pl.CostEstimate(
            flops=2 * n * c_pad * d_model,
            transcendentals=0,
            bytes_accessed=n * 4 + c_pad * d_model * 4 + n * d_model * 4,
        )

        out = pl.pallas_call(
            _embed_kernel,
            out_shape=jax.ShapeDtypeStruct((n, d_model), jnp.float32),
            grid=grid,
            in_specs=[
                pl.BlockSpec((t, 1), lambda i: (i, 0)),
                pl.BlockSpec((c_pad, d_model), lambda i: (0, 0)),
            ],
            out_specs=pl.BlockSpec((t, d_model), lambda i: (i, 0)),
            compiler_params=pltpu.CompilerParams(
                dimension_semantics=("parallel",),
            ),
            cost_estimate=cost,
        )(idx.reshape(n, 1), self.weight_padded)

        out = out.reshape(*orig_shape, d_model)
        return jax.lax.stop_gradient(out)                 # .detach() equivalent


if __name__ == "__main__":
    c_in, d_model = 24, 128            # e.g. an hour-of-day embedding
    mod = FixedEmbeddingPallas(c_in, d_model)
    ref_tbl = _build_fixed_table(c_in, d_model)

    # 1) Small batch -> fast path (plain XLA gather).
    x_small = jax.random.randint(jax.random.PRNGKey(0), (2, 8), 0, c_in, jnp.int32)
    out_small = mod(x_small)
    jax.block_until_ready(out_small)
    assert out_small.shape == (2, 8, d_model)
    np.testing.assert_allclose(
        np.asarray(out_small), ref_tbl[np.asarray(x_small)], rtol=0, atol=1e-6
    )

    # 2) Larger ragged batch -> Pallas kernel path (n = 1141 is not a multiple
    #    of the tile, exercising the masked partial last block).
    x_big = jax.random.randint(jax.random.PRNGKey(1), (7, 163), 0, c_in, jnp.int32)
    out_big = mod(x_big)
    jax.block_until_ready(out_big)
    assert out_big.shape == (7, 163, d_model)
    np.testing.assert_allclose(
        np.asarray(out_big), ref_tbl[np.asarray(x_big)], rtol=0, atol=1e-6
    )

    print("KERNEL_OK")
</pallas_src>

<mosaic_0001>
module attributes {stable_mosaic.version = 11 : i64} {
  func.func @_embed_kernel(%arg0: i32, %arg1: memref<568x1xi32, #tpu.memory_space<vmem>>, %arg2: memref<128x128xf32, #tpu.memory_space<vmem>>, %arg3: memref<568x128xf32, #tpu.memory_space<vmem>>) attributes {dimension_semantics = [#tpu.dimension_semantics<parallel>], iteration_bounds = array<i64: 3>, scalar_prefetch = 0 : i64, scratch_operands = 0 : i64, tpu.core_type = #tpu.core_type<tc>, window_params = [{transform_indices = @transform_0, window_bounds = array<i64: 568, 1>}, {pipeline_mode = #tpu.pipeline_mode<synchronous>, transform_indices = @transform_1, window_bounds = array<i64: 128, 128>}, {transform_indices = @transform_2, window_bounds = array<i64: 568, 128>}]} {
    %c0 = arith.constant 0 : index
    %c0_0 = arith.constant 0 : index
    %0 = vector.load %arg1[%c0, %c0_0] : memref<568x1xi32, #tpu.memory_space<vmem>>, vector<568x1xi32>
    %1 = tpu.iota {dimensions = array<i32: 1>} : vector<568x128xi32>
    %2 = vector.broadcast %0 : vector<568x1xi32> to vector<568x128xi32>
    %3 = arith.cmpi eq, %1, %2 : vector<568x128xi32>
    %4 = arith.extui %3 : vector<568x128xi1> to vector<568x128xi32>
    %5 = arith.sitofp %4 : vector<568x128xi32> to vector<568x128xf32>
    %c0_1 = arith.constant 0 : index
    %c0_2 = arith.constant 0 : index
    %6 = vector.load %arg2[%c0_1, %c0_2] : memref<128x128xf32, #tpu.memory_space<vmem>>, vector<128x128xf32>
    %cst = arith.constant dense<0.000000e+00> : vector<568x128xf32>
    %7 = tpu.matmul %5, %6, %cst {dimension_numbers = #tpu.dot_dimension_numbers<[1], [0], [0], [1], [0, 0, 1, 1], [], []>, precision = #tpu.contract_precision<fp32>} : vector<568x128xf32>, vector<128x128xf32>, vector<568x128xf32> -> vector<568x128xf32>
    %c0_3 = arith.constant 0 : index
    %c0_4 = arith.constant 0 : index
    %8 = vector.load %arg3[%c0_3, %c0_4] : memref<568x128xf32, #tpu.memory_space<vmem>>, vector<568x128xf32>
    tpu.vector_store %arg3[%c0_3, %c0_4], %7 {strides = array<i32>} : memref<568x128xf32, #tpu.memory_space<vmem>>, vector<568x128xf32>,
    return
  }
  func.func @transform_0(%arg0: i32) -> (i32, i32) {
    %c0_i32 = arith.constant 0 : i32
    %c0_i32_0 = arith.constant 0 : i32
    return %arg0, %c0_i32 : i32, i32
  }
  func.func @transform_1(%arg0: i32) -> (i32, i32) {
    %c0_i32 = arith.constant 0 : i32
    %c0_i32_0 = arith.constant 0 : i32
    %c0_i32_1 = arith.constant 0 : i32
    return %c0_i32, %c0_i32_0 : i32, i32
  }
  func.func @transform_2(%arg0: i32) -> (i32, i32) {
    %c0_i32 = arith.constant 0 : i32
    %c0_i32_0 = arith.constant 0 : i32
    return %arg0, %c0_i32 : i32, i32
  }
}

</mosaic_0001>

<llo_original>
// kernel: tpu_custom_call.1
$region0: #{tpu_custom_call.1}
  #allocation0 [shape = 'u32[]', space=smem, size = 0x4, offset = 0x4, fixed_abs, tag = 'smem constant byte address 0x4 - core index']
  #allocation1 [shape = 'u32[144,128]{1,0:T(1,128)}', space=vmem, size = 0x12000, scoped, tag = 'internal scratch']
  %s0 = inlined_call_operand.vmem [shape: s32[1141,1], index: 0, kind: input, shape index: {}]
  %s1 = inlined_call_operand.vmem [shape: f32[128,128], index: 1, kind: input, shape index: {}]
  %s2 = inlined_call_operand.hbm [shape: f32[1141,128], index: 2, kind: output, shape index: {}]
  %s3 = sld [smem:[#allocation0]]
  $region41: #{tpu_custom_call.1} parent=0
    _
  %s5 = ssub.s32 1, %s3
  %s6 = scalar_select 0, %s5, %s3
  $region1: #{tpu_custom_call.1} parent=0
    #allocation2 [shape = 'u8[581632]{0}', space=vmem, size = 0x8e000, scoped, tag = 'output window, operand 0']
    #allocation3 [shape = 's32[2]{0}', space=sflag, size = 0x8, scoped, tag = 'scoped memory for tpu_custom_call.1']
    %7 = vsyncpa [#allocation3], 0
    %s8 = scalar_lea.sflag [#allocation3], 1
    %9 = vsyncpa %s8, 0
    loop: start=0, step=1, limit=5
    $region2: #{tpu_custom_call.1} parent=1 // loop_pre_header
      _
    $region3: #{tpu_custom_call.1} parent=1 // loop_header
      %s11 = sphi 0, %s15
      %p12 = scmp.ge.s32.totalorder %s11, 5
      %s21 = sphi 0, %s23
      %s24 = sphi 0, %s21
      %s25 = sphi 0, %s24
      %s41 = sphi 0, %s25
      %s45 = sphi 0, %s45
      %s47 = sphi 0, %s45
      %s48 = sphi 0, %s47
      %s62 = sphi 0, %s48
      %s68 = sphi 0, %s70
      %s71 = sphi 0, %s68
      %s72 = sphi 0, %s71
      %s88 = sphi 0, %s72
    $region4: #{tpu_custom_call.1} parent=1 // loop_header_branch
      %14 = sbr.rel (%p12) target = $region8
    $region5: #{tpu_custom_call.1} parent=1 // loop_body
      %s16 = ssub.s32 %s11, 1
      %s17 = ssub.s32 %s11, 2
      %s18 = sadd.s32 %s11, 1
      %s19 = ssub.s32 %s11, %s18
      %p20 = scmp.eq.s32.totalorder %s19, 0
      %s22 = sadd.s32 %s21, 1
      %s23 = scalar_select %p20, %s21, %s22
      %p26 = pneg %p20
      %p27 = scmp.eq.s32.totalorder %s11, 2
      %p28 = por %p26, %p27
      %p29 = scmp.ne.s32.totalorder %s21, %s24
      %p30 = scmp.eq.s32.totalorder %s11, 0
      %p31 = por %p29, %p30
      %p32 = scmp.ne.s32.totalorder %s21, %s24
      %p33 = scmp.eq.s32.totalorder %s16, 2
      %p34 = por %p32, %p33
      %p35 = scmp.ne.s32.totalorder %s24, %s25
      %p36 = scmp.eq.s32.totalorder %s16, 0
      %p37 = por %p35, %p36
      %p38 = scmp.ne.s32.totalorder %s24, %s25
      %p39 = scmp.eq.s32.totalorder %s17, 2
      %p40 = por %p38, %p39
      %p42 = scmp.ne.s32.totalorder %s25, %s41
      %p43 = scmp.eq.s32.totalorder %s17, 0
      %p44 = por %p42, %p43
      %s46 = sadd.s32 %s45, 1
      %p49 = scmp.eq.s32.totalorder %s11, 2
      %p50 = scmp.ne.s32.totalorder %s45, %s47
      %p51 = scmp.eq.s32.totalorder %s11, 0
      %p52 = por %p50, %p51
      %p53 = scmp.ne.s32.totalorder %s45, %s47
      %p54 = scmp.eq.s32.totalorder %s16, 2
      %p55 = por %p53, %p54
      %p56 = scmp.ne.s32.totalorder %s47, %s48
      %p57 = scmp.eq.s32.totalorder %s16, 0
      %p58 = por %p56, %p57
      %p59 = scmp.ne.s32.totalorder %s47, %s48
      %p60 = scmp.eq.s32.totalorder %s17, 2
      %p61 = por %p59, %p60
      %p63 = scmp.ne.s32.totalorder %s48, %s62
      %p64 = scmp.eq.s32.totalorder %s17, 0
      %p65 = por %p63, %p64
      %s66 = ssub.s32 %s11, %s18
      %p67 = scmp.eq.s32.totalorder %s66, 0
      %s69 = sadd.s32 %s68, 1
      %s70 = scalar_select %p67, %s68, %s69
      %p73 = pneg %p67
      %p74 = scmp.eq.s32.totalorder %s11, 2
      %p75 = por %p73, %p74
      %p76 = scmp.ne.s32.totalorder %s68, %s71
      %p77 = scmp.eq.s32.totalorder %s11, 0
      %p78 = por %p76, %p77
      %p79 = scmp.ne.s32.totalorder %s68, %s71
      %p80 = scmp.eq.s32.totalorder %s16, 2
      %p81 = por %p79, %p80
      %p82 = scmp.ne.s32.totalorder %s71, %s72
      %p83 = scmp.eq.s32.totalorder %s16, 0
      %p84 = por %p82, %p83
      %p85 = scmp.ne.s32.totalorder %s71, %s72
      %p86 = scmp.eq.s32.totalorder %s17, 2
      %p87 = por %p85, %p86
      %p89 = scmp.ne.s32.totalorder %s72, %s88
      %p90 = scmp.eq.s32.totalorder %s17, 0
      %p91 = por %p89, %p90
      %p92 = scmp.le.s32.totalorder 1, %s11
      %p93 = scmp.lt.s32.totalorder %s11, 4
      %p94 = pnand %p92, %p93
      %p95 = pneg %p94
      // Predicated region
      $region9: #{tpu_custom_call.1} parent=5 // pred_check
        _
      $region10: #{tpu_custom_call.1} parent=5 // pred_check_branch
        %97 = sbr.rel (%p94) target = $region12
      $region11: #{tpu_custom_call.1} parent=5 // pred_region
        %s98 = ssub.s32 %s11, 1
        // Predicated region
        $region13: #{tpu_custom_call.1} parent=11 // pred_check
          %p99 = pneg %p58
        $region14: #{tpu_custom_call.1} parent=11 // pred_check_branch
          %101 = sbr.rel (%p99) target = $region16
        $region15: #{tpu_custom_call.1} parent=11 // pred_region
          _
        $region16: #{tpu_custom_call.1} parent=11 // pred_fallthru
          _
      $region12: #{tpu_custom_call.1} parent=5 // pred_fallthru
        _
      %p102 = scmp.lt.s32.totalorder %s11, 3
      // Predicated region
      $region17: #{tpu_custom_call.1} parent=5 // pred_check
        %p103 = pneg %p102
      $region18: #{tpu_custom_call.1} parent=5 // pred_check_branch
        %105 = sbr.rel (%p103) target = $region20
      $region19: #{tpu_custom_call.1} parent=5 // pred_region
        // Predicated region
        $region21: #{tpu_custom_call.1} parent=19 // pred_check
          %p106 = pneg %p31
        $region22: #{tpu_custom_call.1} parent=19 // pred_check_branch
          %108 = sbr.rel (%p106) target = $region24
        $region23: #{tpu_custom_call.1} parent=19 // pred_region
          %s109 = smul.u32 71, %s11
          %s110 = ssub.s32 143, %s109
          %p111 = scmp.lt.s32.totalorder %s110, 71
          %s112 = scalar_select %p111, %s110, 71
          %s113 = smul.u32 128, %s112
          %p114 = scmp.lt.s32.totalorder %s109, 142
          %s115 = scalar_select %p114, %s109, 142
          %s116 = smul.addr %s115, 8
          %s117 = scalar_lea.vmem %s0, %s116
          %s118 = smul.u32 71, %s11
          %s119 = ssub.s32 143, %s118
          %p120 = scmp.lt.s32.totalorder %s119, 71
          %s121 = scalar_select %p120, %s119, 71
          %s122 = smul.u32 128, %s121
        $region24: #{tpu_custom_call.1} parent=19 // pred_fallthru
          _
      $region20: #{tpu_custom_call.1} parent=5 // pred_fallthru
        _
      %p123 = scmp.le.s32.totalorder 1, %s11
      %p124 = scmp.lt.s32.totalorder %s11, 4
      %p125 = pnand %p123, %p124
      %p126 = pneg %p125
      // Predicated region
      $region25: #{tpu_custom_call.1} parent=5 // pred_check
        _
      $region26: #{tpu_custom_call.1} parent=5 // pred_check_branch
        %128 = sbr.rel (%p125) target = $region28
      $region27: #{tpu_custom_call.1} parent=5 // pred_region
        %s129 = ssub.s32 %s11, 1
        %s130 = smul.u32 71, %s16
        %s131 = ssub.s32 143, %s130
        %p132 = scmp.lt.s32.totalorder %s131, 71
        %s133 = scalar_select %p132, %s131, 71
        %s134 = smul.u32 128, %s133
        %p135 = scmp.lt.s32.totalorder %s130, 142
        %s136 = scalar_select %p135, %s130, 142
        %s137 = smul.addr %s136, 8
        %s138 = scalar_lea.vmem %s0, %s137
        %p139 = pneg %p37
        %p140 = pneg %p34
        %p141 = pneg %p58
        %p142 = pneg %p55
        %p143 = pneg %p84
        %p144 = pneg %p81
        %s145 = sand.u32 %s71, 1
        %s146 = scalar_lea.sflag [#allocation3], %s145
        %s147 = sand.u32 %s71, 1
        %s148 = smul.addr %s147, 568
        %s149 = scalar_lea.vmem [#allocation2], %s148
        %s150 = smul.u32 71, %s16
        %s151 = ssub.s32 143, %s150
        %p152 = scmp.lt.s32.totalorder %s151, 71
        %s153 = scalar_select %p152, %s151, 71
        %s154 = smul.u32 128, %s153
        %p155 = scmp.lt.s32.totalorder %s150, 142
        %s156 = scalar_select %p155, %s150, 142
        %s157 = smul.addr %s156, 8
        %s158 = scalar_lea.vmem %s0, %s157
        %s159 = smul.u32 71, %s16
        %s160 = ssub.s32 143, %s159
        %p161 = scmp.lt.s32.totalorder %s160, 71
        %s162 = scalar_select %p161, %s160, 71
        %s163 = smul.u32 128, %s162
        %s164 = smul.u32 71, %s16
        %s165 = ssub.s32 143, %s164
        %p166 = scmp.lt.s32.totalorder %s165, 71
        %s167 = scalar_select %p166, %s165, 71
        %s168 = smul.u32 128, %s167
        %v169 = vld [vmem:[%s158] sm:$0xff]
        %v170 = vld [vmem:[%s158 + $0x8] sm:$0xff]
        %v171 = vld [vmem:[%s158 + $0x10] sm:$0xff]
        %v172 = vld [vmem:[%s158 + $0x18] sm:$0xff]
        %v173 = vld [vmem:[%s158 + $0x20] sm:$0xff]
        %v174 = vld [vmem:[%s158 + $0x28] sm:$0xff]
        %v175 = vld [vmem:[%s158 + $0x30] sm:$0xff]
        %v176 = vld [vmem:[%s158 + $0x38] sm:$0xff]
        %v177 = vld [vmem:[%s158 + $0x40] sm:$0xff]
        %v178 = vld [vmem:[%s158 + $0x48] sm:$0xff]
        %v179 = vld [vmem:[%s158 + $0x50] sm:$0xff]
        %v180 = vld [vmem:[%s158 + $0x58] sm:$0xff]
        %v181 = vld [vmem:[%s158 + $0x60] sm:$0xff]
        %v182 = vld [vmem:[%s158 + $0x68] sm:$0xff]
        %v183 = vld [vmem:[%s158 + $0x70] sm:$0xff]
        %v184 = vld [vmem:[%s158 + $0x78] sm:$0xff]
        %v185 = vld [vmem:[%s158 + $0x80] sm:$0xff]
        %v186 = vld [vmem:[%s158 + $0x88] sm:$0xff]
        %v187 = vld [vmem:[%s158 + $0x90] sm:$0xff]
        %v188 = vld [vmem:[%s158 + $0x98] sm:$0xff]
        %v189 = vld [vmem:[%s158 + $0xa0] sm:$0xff]
        %v190 = vld [vmem:[%s158 + $0xa8] sm:$0xff]
        %v191 = vld [vmem:[%s158 + $0xb0] sm:$0xff]
        %v192 = vld [vmem:[%s158 + $0xb8] sm:$0xff]
        %v193 = vld [vmem:[%s158 + $0xc0] sm:$0xff]
        %v194 = vld [vmem:[%s158 + $0xc8] sm:$0xff]
        %v195 = vld [vmem:[%s158 + $0xd0] sm:$0xff]
        %v196 = vld [vmem:[%s158 + $0xd8] sm:$0xff]
        %v197 = vld [vmem:[%s158 + $0xe0] sm:$0xff]
        %v198 = vld [vmem:[%s158 + $0xe8] sm:$0xff]
        %v199 = vld [vmem:[%s158 + $0xf0] sm:$0xff]
        %v200 = vld [vmem:[%s158 + $0xf8] sm:$0xff]
        %v201 = vld [vmem:[%s158 + $0x100] sm:$0xff]
        %v202 = vld [vmem:[%s158 + $0x108] sm:$0xff]
        %v203 = vld [vmem:[%s158 + $0x110] sm:$0xff]
        %v204 = vld [vmem:[%s158 + $0x118] sm:$0xff]
        %v205 = vld [vmem:[%s158 + $0x120] sm:$0xff]
        %v206 = vld [vmem:[%s158 + $0x128] sm:$0xff]
        %v207 = vld [vmem:[%s158 + $0x130] sm:$0xff]
        %v208 = vld [vmem:[%s158 + $0x138] sm:$0xff]
        %v209 = vld [vmem:[%s158 + $0x140] sm:$0xff]
        %v210 = vld [vmem:[%s158 + $0x148] sm:$0xff]
        %v211 = vld [vmem:[%s158 + $0x150] sm:$0xff]
        %v212 = vld [vmem:[%s158 + $0x158] sm:$0xff]
        %v213 = vld [vmem:[%s158 + $0x160] sm:$0xff]
        %v214 = vld [vmem:[%s158 + $0x168] sm:$0xff]
        %v215 = vld [vmem:[%s158 + $0x170] sm:$0xff]
        %v216 = vld [vmem:[%s158 + $0x178] sm:$0xff]
        %v217 = vld [vmem:[%s158 + $0x180] sm:$0xff]
        %v218 = vld [vmem:[%s158 + $0x188] sm:$0xff]
        %v219 = vld [vmem:[%s158 + $0x190] sm:$0xff]
        %v220 = vld [vmem:[%s158 + $0x198] sm:$0xff]
        %v221 = vld [vmem:[%s158 + $0x1a0] sm:$0xff]
        %v222 = vld [vmem:[%s158 + $0x1a8] sm:$0xff]
        %v223 = vld [vmem:[%s158 + $0x1b0] sm:$0xff]
        %v224 = vld [vmem:[%s158 + $0x1b8] sm:$0xff]
        %v225 = vld [vmem:[%s158 + $0x1c0] sm:$0xff]
        %v226 = vld [vmem:[%s158 + $0x1c8] sm:$0xff]
        %v227 = vld [vmem:[%s158 + $0x1d0] sm:$0xff]
        %v228 = vld [vmem:[%s158 + $0x1d8] sm:$0xff]
        %v229 = vld [vmem:[%s158 + $0x1e0] sm:$0xff]
        %v230 = vld [vmem:[%s158 + $0x1e8] sm:$0xff]
        %v231 = vld [vmem:[%s158 + $0x1f0] sm:$0xff]
        %v232 = vld [vmem:[%s158 + $0x1f8] sm:$0xff]
        %v233 = vld [vmem:[%s158 + $0x200] sm:$0xff]
        %v234 = vld [vmem:[%s158 + $0x208] sm:$0xff]
        %v235 = vld [vmem:[%s158 + $0x210] sm:$0xff]
        %v236 = vld [vmem:[%s158 + $0x218] sm:$0xff]
        %v237 = vld [vmem:[%s158 + $0x220] sm:$0xff]
        %v238 = vld [vmem:[%s158 + $0x228] sm:$0xff]
        %v239 = vld [vmem:[%s158 + $0x230] sm:$0xff]
        %v240 = vlaneseq
        %v241 = vand.u32 %v240, 127
        %242 = vset.pattern.permute.xlu0 0
        %243 = vperm.xlu0 %242, %v169
        %v244 = vpop.permute.xlu0 %243
        %245 = vset.pattern.permute.xlu0 0
        %246 = vperm.xlu0 %245, %v170
        %v247 = vpop.permute.xlu0 %246
        %248 = vset.pattern.permute.xlu0 0
        %249 = vperm.xlu0 %248, %v171
        %v250 = vpop.permute.xlu0 %249
        %251 = vset.pattern.permute.xlu0 0
        %252 = vperm.xlu0 %251, %v172
        %v253 = vpop.permute.xlu0 %252
        %254 = vset.pattern.permute.xlu0 0
        %255 = vperm.xlu0 %254, %v173
        %v256 = vpop.permute.xlu0 %255
        %257 = vset.pattern.permute.xlu0 0
        %258 = vperm.xlu0 %257, %v174
        %v259 = vpop.permute.xlu0 %258
        %260 = vset.pattern.permute.xlu0 0
        %261 = vperm.xlu0 %260, %v175
        %v262 = vpop.permute.xlu0 %261
        %263 = vset.pattern.permute.xlu0 0
        %264 = vperm.xlu0 %263, %v176
        %v265 = vpop.permute.xlu0 %264
        %266 = vset.pattern.permute.xlu0 0
        %267 = vperm.xlu0 %266, %v177
        %v268 = vpop.permute.xlu0 %267
        %269 = vset.pattern.permute.xlu0 0
        %270 = vperm.xlu0 %269, %v178
        %v271 = vpop.permute.xlu0 %270
        %272 = vset.pattern.permute.xlu0 0
        %273 = vperm.xlu0 %272, %v179
        %v274 = vpop.permute.xlu0 %273
        %275 = vset.pattern.permute.xlu0 0
        %276 = vperm.xlu0 %275, %v180
        %v277 = vpop.permute.xlu0 %276
        %278 = vset.pattern.permute.xlu0 0
        %279 = vperm.xlu0 %278, %v181
        %v280 = vpop.permute.xlu0 %279
        %281 = vset.pattern.permute.xlu0 0
        %282 = vperm.xlu0 %281, %v182
        %v283 = vpop.permute.xlu0 %282
        %284 = vset.pattern.permute.xlu0 0
        %285 = vperm.xlu0 %284, %v183
        %v286 = vpop.permute.xlu0 %285
        %287 = vset.pattern.permute.xlu0 0
        %288 = vperm.xlu0 %287, %v184
        %v289 = vpop.permute.xlu0 %288
        %290 = vset.pattern.permute.xlu0 0
        %291 = vperm.xlu0 %290, %v185
        %v292 = vpop.permute.xlu0 %291
        %293 = vset.pattern.permute.xlu0 0
        %294 = vperm.xlu0 %293, %v186
        %v295 = vpop.permute.xlu0 %294
        %296 = vset.pattern.permute.xlu0 0
        %297 = vperm.xlu0 %296, %v187
        %v298 = vpop.permute.xlu0 %297
        %299 = vset.pattern.permute.xlu0 0
        %300 = vperm.xlu0 %299, %v188
        %v301 = vpop.permute.xlu0 %300
        %302 = vset.pattern.permute.xlu0 0
        %303 = vperm.xlu0 %302, %v189
        %v304 = vpop.permute.xlu0 %303
        %305 = vset.pattern.permute.xlu0 0
        %306 = vperm.xlu0 %305, %v190
        %v307 = vpop.permute.xlu0 %306
        %308 = vset.pattern.permute.xlu0 0
        %309 = vperm.xlu0 %308, %v191
        %v310 = vpop.permute.xlu0 %309
        %311 = vset.pattern.permute.xlu0 0
        %312 = vperm.xlu0 %311, %v192
        %v313 = vpop.permute.xlu0 %312
        %314 = vset.pattern.permute.xlu0 0
        %315 = vperm.xlu0 %314, %v193
        %v316 = vpop.permute.xlu0 %315
        %317 = vset.pattern.permute.xlu0 0
        %318 = vperm.xlu0 %317, %v194
        %v319 = vpop.permute.xlu0 %318
        %320 = vset.pattern.permute.xlu0 0
        %321 = vperm.xlu0 %320, %v195
        %v322 = vpop.permute.xlu0 %321
        %323 = vset.pattern.permute.xlu0 0
        %324 = vperm.xlu0 %323, %v196
        %v325 = vpop.permute.xlu0 %324
        %326 = vset.pattern.permute.xlu0 0
        %327 = vperm.xlu0 %326, %v197
        %v328 = vpop.permute.xlu0 %327
        %329 = vset.pattern.permute.xlu0 0
        %330 = vperm.xlu0 %329, %v198
        %v331 = vpop.permute.xlu0 %330
        %332 = vset.pattern.permute.xlu0 0
        %333 = vperm.xlu0 %332, %v199
        %v334 = vpop.permute.xlu0 %333
        %335 = vset.pattern.permute.xlu0 0
        %336 = vperm.xlu0 %335, %v200
        %v337 = vpop.permute.xlu0 %336
        %338 = vset.pattern.permute.xlu0 0
        %339 = vperm.xlu0 %338, %v201
        %v340 = vpop.permute.xlu0 %339
        %341 = vset.pattern.permute.xlu0 0
        %342 = vperm.xlu0 %341, %v202
        %v343 = vpop.permute.xlu0 %342
        %344 = vset.pattern.permute.xlu0 0
        %345 = vperm.xlu0 %344, %v203
        %v346 = vpop.permute.xlu0 %345
        %347 = vset.pattern.permute.xlu0 0
        %348 = vperm.xlu0 %347, %v204
        %v349 = vpop.permute.xlu0 %348
        %350 = vset.pattern.permute.xlu0 0
        %351 = vperm.xlu0 %350, %v205
        %v352 = vpop.permute.xlu0 %351
        %353 = vset.pattern.permute.xlu0 0
        %354 = vperm.xlu0 %353, %v206
        %v355 = vpop.permute.xlu0 %354
        %356 = vset.pattern.permute.xlu0 0
        %357 = vperm.xlu0 %356, %v207
        %v358 = vpop.permute.xlu0 %357
        %359 = vset.pattern.permute.xlu0 0
        %360 = vperm.xlu0 %359, %v208
        %v361 = vpop.permute.xlu0 %360
        %362 = vset.pattern.permute.xlu0 0
        %363 = vperm.xlu0 %362, %v209
        %v364 = vpop.permute.xlu0 %363
        %365 = vset.pattern.permute.xlu0 0
        %366 = vperm.xlu0 %365, %v210
        %v367 = vpop.permute.xlu0 %366
        %368 = vset.pattern.permute.xlu0 0
        %369 = vperm.xlu0 %368, %v211
        %v370 = vpop.permute.xlu0 %369
        %371 = vset.pattern.permute.xlu0 0
        %372 = vperm.xlu0 %371, %v212
        %v373 = vpop.permute.xlu0 %372
        %374 = vset.pattern.permute.xlu0 0
        %375 = vperm.xlu0 %374, %v213
        %v376 = vpop.permute.xlu0 %375
        %377 = vset.pattern.permute.xlu0 0
        %378 = vperm.xlu0 %377, %v214
        %v379 = vpop.permute.xlu0 %378
        %380 = vset.pattern.permute.xlu0 0
        %381 = vperm.xlu0 %380, %v215
        %v382 = vpop.permute.xlu0 %381
        %383 = vset.pattern.permute.xlu0 0
        %384 = vperm.xlu0 %383, %v216
        %v385 = vpop.permute.xlu0 %384
        %386 = vset.pattern.permute.xlu0 0
        %387 = vperm.xlu0 %386, %v217
        %v388 = vpop.permute.xlu0 %387
        %389 = vset.pattern.permute.xlu0 0
        %390 = vperm.xlu0 %389, %v218
        %v391 = vpop.permute.xlu0 %390
        %392 = vset.pattern.permute.xlu0 0
        %393 = vperm.xlu0 %392, %v219
        %v394 = vpop.permute.xlu0 %393
        %395 = vset.pattern.permute.xlu0 0
        %396 = vperm.xlu0 %395, %v220
        %v397 = vpop.permute.xlu0 %396
        %398 = vset.pattern.permute.xlu0 0
        %399 = vperm.xlu0 %398, %v221
        %v400 = vpop.permute.xlu0 %399
        %401 = vset.pattern.permute.xlu0 0
        %402 = vperm.xlu0 %401, %v222
        %v403 = vpop.permute.xlu0 %402
        %404 = vset.pattern.permute.xlu0 0
        %405 = vperm.xlu0 %404, %v223
        %v406 = vpop.permute.xlu0 %405
        %407 = vset.pattern.permute.xlu0 0
        %408 = vperm.xlu0 %407, %v224
        %v409 = vpop.permute.xlu0 %408
        %410 = vset.pattern.permute.xlu0 0
        %411 = vperm.xlu0 %410, %v225
        %v412 = vpop.permute.xlu0 %411
        %413 = vset.pattern.permute.xlu0 0
        %414 = vperm.xlu0 %413, %v226
        %v415 = vpop.permute.xlu0 %414
        %416 = vset.pattern.permute.xlu0 0
        %417 = vperm.xlu0 %416, %v227
        %v418 = vpop.permute.xlu0 %417
        %419 = vset.pattern.permute.xlu0 0
        %420 = vperm.xlu0 %419, %v228
        %v421 = vpop.permute.xlu0 %420
        %422 = vset.pattern.permute.xlu0 0
        %423 = vperm.xlu0 %422, %v229
        %v424 = vpop.permute.xlu0 %423
        %425 = vset.pattern.permute.xlu0 0
        %426 = vperm.xlu0 %425, %v230
        %v427 = vpop.permute.xlu0 %426
        %428 = vset.pattern.permute.xlu0 0
        %429 = vperm.xlu0 %428, %v231
        %v430 = vpop.permute.xlu0 %429
        %431 = vset.pattern.permute.xlu0 0
        %432 = vperm.xlu0 %431, %v232
        %v433 = vpop.permute.xlu0 %432
        %434 = vset.pattern.permute.xlu0 0
        %435 = vperm.xlu0 %434, %v233
        %v436 = vpop.permute.xlu0 %435
        %437 = vset.pattern.permute.xlu0 0
        %438 = vperm.xlu0 %437, %v234
        %v439 = vpop.permute.xlu0 %438
        %440 = vset.pattern.permute.xlu0 0
        %441 = vperm.xlu0 %440, %v235
        %v442 = vpop.permute.xlu0 %441
        %443 = vset.pattern.permute.xlu0 0
        %444 = vperm.xlu0 %443, %v236
        %v445 = vpop.permute.xlu0 %444
        %446 = vset.pattern.permute.xlu0 0
        %447 = vperm.xlu0 %446, %v237
        %v448 = vpop.permute.xlu0 %447
        %449 = vset.pattern.permute.xlu0 0
        %450 = vperm.xlu0 %449, %v238
        %v451 = vpop.permute.xlu0 %450
        %452 = vset.pattern.permute.xlu0 0
        %453 = vperm.xlu0 %452, %v239
        %v454 = vpop.permute.xlu0 %453
        %vm455 = vcmp.eq.s32.totalorder %v241, %v244
        %vm456 = vcmp.eq.s32.totalorder %v241, %v247
        %vm457 = vcmp.eq.s32.totalorder %v241, %v250
        %vm458 = vcmp.eq.s32.totalorder %v241, %v253
        %vm459 = vcmp.eq.s32.totalorder %v241, %v256
        %vm460 = vcmp.eq.s32.totalorder %v241, %v259
        %vm461 = vcmp.eq.s32.totalorder %v241, %v262
        %vm462 = vcmp.eq.s32.totalorder %v241, %v265
        %vm463 = vcmp.eq.s32.totalorder %v241, %v268
        %vm464 = vcmp.eq.s32.totalorder %v241, %v271
        %vm465 = vcmp.eq.s32.totalorder %v241, %v274
        %vm466 = vcmp.eq.s32.totalorder %v241, %v277
        %vm467 = vcmp.eq.s32.totalorder %v241, %v280
        %vm468 = vcmp.eq.s32.totalorder %v241, %v283
        %vm469 = vcmp.eq.s32.totalorder %v241, %v286
        %vm470 = vcmp.eq.s32.totalorder %v241, %v289
        %vm471 = vcmp.eq.s32.totalorder %v241, %v292
        %vm472 = vcmp.eq.s32.totalorder %v241, %v295
        %vm473 = vcmp.eq.s32.totalorder %v241, %v298
        %vm474 = vcmp.eq.s32.totalorder %v241, %v301
        %vm475 = vcmp.eq.s32.totalorder %v241, %v304
        %vm476 = vcmp.eq.s32.totalorder %v241, %v307
        %vm477 = vcmp.eq.s32.totalorder %v241, %v310
        %vm478 = vcmp.eq.s32.totalorder %v241, %v313
        %vm479 = vcmp.eq.s32.totalorder %v241, %v316
        %vm480 = vcmp.eq.s32.totalorder %v241, %v319
        %vm481 = vcmp.eq.s32.totalorder %v241, %v322
        %vm482 = vcmp.eq.s32.totalorder %v241, %v325
        %vm483 = vcmp.eq.s32.totalorder %v241, %v328
        %vm484 = vcmp.eq.s32.totalorder %v241, %v331
        %vm485 = vcmp.eq.s32.totalorder %v241, %v334
        %vm486 = vcmp.eq.s32.totalorder %v241, %v337
        %vm487 = vcmp.eq.s32.totalorder %v241, %v340
        %vm488 = vcmp.eq.s32.totalorder %v241, %v343
        %vm489 = vcmp.eq.s32.totalorder %v241, %v346
        %vm490 = vcmp.eq.s32.totalorder %v241, %v349
        %vm491 = vcmp.eq.s32.totalorder %v241, %v352
        %vm492 = vcmp.eq.s32.totalorder %v241, %v355
        %vm493 = vcmp.eq.s32.totalorder %v241, %v358
        %vm494 = vcmp.eq.s32.totalorder %v241, %v361
        %vm495 = vcmp.eq.s32.totalorder %v241, %v364
        %vm496 = vcmp.eq.s32.totalorder %v241, %v367
        %vm497 = vcmp.eq.s32.totalorder %v241, %v370
        %vm498 = vcmp.eq.s32.totalorder %v241, %v373
        %vm499 = vcmp.eq.s32.totalorder %v241, %v376
        %vm500 = vcmp.eq.s32.totalorder %v241, %v379
        %vm501 = vcmp.eq.s32.totalorder %v241, %v382
        %vm502 = vcmp.eq.s32.totalorder %v241, %v385
        %vm503 = vcmp.eq.s32.totalorder %v241, %v388
        %vm504 = vcmp.eq.s32.totalorder %v241, %v391
        %vm505 = vcmp.eq.s32.totalorder %v241, %v394
        %vm506 = vcmp.eq.s32.totalorder %v241, %v397
        %vm507 = vcmp.eq.s32.totalorder %v241, %v400
        %vm508 = vcmp.eq.s32.totalorder %v241, %v403
        %vm509 = vcmp.eq.s32.totalorder %v241, %v406
        %vm510 = vcmp.eq.s32.totalorder %v241, %v409
        %vm511 = vcmp.eq.s32.totalorder %v241, %v412
        %vm512 = vcmp.eq.s32.totalorder %v241, %v415
        %vm513 = vcmp.eq.s32.totalorder %v241, %v418
        %vm514 = vcmp.eq.s32.totalorder %v241, %v421
        %vm515 = vcmp.eq.s32.totalorder %v241, %v424
        %vm516 = vcmp.eq.s32.totalorder %v241, %v427
        %vm517 = vcmp.eq.s32.totalorder %v241, %v430
        %vm518 = vcmp.eq.s32.totalorder %v241, %v433
        %vm519 = vcmp.eq.s32.totalorder %v241, %v436
        %vm520 = vcmp.eq.s32.totalorder %v241, %v439
        %vm521 = vcmp.eq.s32.totalorder %v241, %v442
        %vm522 = vcmp.eq.s32.totalorder %v241, %v445
        %vm523 = vcmp.eq.s32.totalorder %v241, %v448
        %vm524 = vcmp.eq.s32.totalorder %v241, %v451
        %vm525 = vcmp.eq.s32.totalorder %v241, %v454
        %v526 = vsel %vm455, 1, 0
        %v527 = vsel %vm456, 1, 0
        %v528 = vsel %vm457, 1, 0
        %v529 = vsel %vm458, 1, 0
        %v530 = vsel %vm459, 1, 0
        %v531 = vsel %vm460, 1, 0
        %v532 = vsel %vm461, 1, 0
        %v533 = vsel %vm462, 1, 0
        %v534 = vsel %vm463, 1, 0
        %v535 = vsel %vm464, 1, 0
        %v536 = vsel %vm465, 1, 0
        %v537 = vsel %vm466, 1, 0
        %v538 = vsel %vm467, 1, 0
        %v539 = vsel %vm468, 1, 0
        %v540 = vsel %vm469, 1, 0
        %v541 = vsel %vm470, 1, 0
        %v542 = vsel %vm471, 1, 0
        %v543 = vsel %vm472, 1, 0
        %v544 = vsel %vm473, 1, 0
        %v545 = vsel %vm474, 1, 0
        %v546 = vsel %vm475, 1, 0
        %v547 = vsel %vm476, 1, 0
        %v548 = vsel %vm477, 1, 0
        %v549 = vsel %vm478, 1, 0
        %v550 = vsel %vm479, 1, 0
        %v551 = vsel %vm480, 1, 0
        %v552 = vsel %vm481, 1, 0
        %v553 = vsel %vm482, 1, 0
        %v554 = vsel %vm483, 1, 0
        %v555 = vsel %vm484, 1, 0
        %v556 = vsel %vm485, 1, 0
        %v557 = vsel %vm486, 1, 0
        %v558 = vsel %vm487, 1, 0
        %v559 = vsel %vm488, 1, 0
        %v560 = vsel %vm489, 1, 0
        %v561 = vsel %vm490, 1, 0
        %v562 = vsel %vm491, 1, 0
        %v563 = vsel %vm492, 1, 0
        %v564 = vsel %vm493, 1, 0
        %v565 = vsel %vm494, 1, 0
        %v566 = vsel %vm495, 1, 0
        %v567 = vsel %vm496, 1, 0
        %v568 = vsel %vm497, 1, 0
        %v569 = vsel %vm498, 1, 0
        %v570 = vsel %vm499, 1, 0
        %v571 = vsel %vm500, 1, 0
        %v572 = vsel %vm501, 1, 0
        %v573 = vsel %vm502, 1, 0
        %v574 = vsel %vm503, 1, 0
        %v575 = vsel %vm504, 1, 0
        %v576 = vsel %vm505, 1, 0
        %v577 = vsel %vm506, 1, 0
        %v578 = vsel %vm507, 1, 0
        %v579 = vsel %vm508, 1, 0
        %v580 = vsel %vm509, 1, 0
        %v581 = vsel %vm510, 1, 0
        %v582 = vsel %vm511, 1, 0
        %v583 = vsel %vm512, 1, 0
        %v584 = vsel %vm513, 1, 0
        %v585 = vsel %vm514, 1, 0
        %v586 = vsel %vm515, 1, 0
        %v587 = vsel %vm516, 1, 0
        %v588 = vsel %vm517, 1, 0
        %v589 = vsel %vm518, 1, 0
        %v590 = vsel %vm519, 1, 0
        %v591 = vsel %vm520, 1, 0
        %v592 = vsel %vm521, 1, 0
        %v593 = vsel %vm522, 1, 0
        %v594 = vsel %vm523, 1, 0
        %v595 = vsel %vm524, 1, 0
        %v596 = vsel %vm525, 1, 0
        %v597 = vcvt.s32.f32 %v526
        %v598 = vcvt.s32.f32 %v527
        %v599 = vcvt.s32.f32 %v528
        %v600 = vcvt.s32.f32 %v529
        %v601 = vcvt.s32.f32 %v530
        %v602 = vcvt.s32.f32 %v531
        %v603 = vcvt.s32.f32 %v532
        %v604 = vcvt.s32.f32 %v533
        %v605 = vcvt.s32.f32 %v534
        %v606 = vcvt.s32.f32 %v535
        %v607 = vcvt.s32.f32 %v536
        %v608 = vcvt.s32.f32 %v537
        %v609 = vcvt.s32.f32 %v538
        %v610 = vcvt.s32.f32 %v539
        %v611 = vcvt.s32.f32 %v540
        %v612 = vcvt.s32.f32 %v541
        %v613 = vcvt.s32.f32 %v542
        %v614 = vcvt.s32.f32 %v543
        %v615 = vcvt.s32.f32 %v544
        %v616 = vcvt.s32.f32 %v545
        %v617 = vcvt.s32.f32 %v546
        %v618 = vcvt.s32.f32 %v547
        %v619 = vcvt.s32.f32 %v548
        %v620 = vcvt.s32.f32 %v549
        %v621 = vcvt.s32.f32 %v550
        %v622 = vcvt.s32.f32 %v551
        %v623 = vcvt.s32.f32 %v552
        %v624 = vcvt.s32.f32 %v553
        %v625 = vcvt.s32.f32 %v554
        %v626 = vcvt.s32.f32 %v555
        %v627 = vcvt.s32.f32 %v556
        %v628 = vcvt.s32.f32 %v557
        %v629 = vcvt.s32.f32 %v558
        %v630 = vcvt.s32.f32 %v559
        %v631 = vcvt.s32.f32 %v560
        %v632 = vcvt.s32.f32 %v561
        %v633 = vcvt.s32.f32 %v562
        %v634 = vcvt.s32.f32 %v563
        %v635 = vcvt.s32.f32 %v564
        %v636 = vcvt.s32.f32 %v565
        %v637 = vcvt.s32.f32 %v566
        %v638 = vcvt.s32.f32 %v567
        %v639 = vcvt.s32.f32 %v568
        %v640 = vcvt.s32.f32 %v569
        %v641 = vcvt.s32.f32 %v570
        %v642 = vcvt.s32.f32 %v571
        %v643 = vcvt.s32.f32 %v572
        %v644 = vcvt.s32.f32 %v573
        %v645 = vcvt.s32.f32 %v574
        %v646 = vcvt.s32.f32 %v575
        %v647 = vcvt.s32.f32 %v576
        %v648 = vcvt.s32.f32 %v577
        %v649 = vcvt.s32.f32 %v578
        %v650 = vcvt.s32.f32 %v579
        %v651 = vcvt.s32.f32 %v580
        %v652 = vcvt.s32.f32 %v581
        %v653 = vcvt.s32.f32 %v582
        %v654 = vcvt.s32.f32 %v583
        %v655 = vcvt.s32.f32 %v584
        %v656 = vcvt.s32.f32 %v585
        %v657 = vcvt.s32.f32 %v586
        %v658 = vcvt.s32.f32 %v587
        %v659 = vcvt.s32.f32 %v588
        %v660 = vcvt.s32.f32 %v589
        %v661 = vcvt.s32.f32 %v590
        %v662 = vcvt.s32.f32 %v591
        %v663 = vcvt.s32.f32 %v592
        %v664 = vcvt.s32.f32 %v593
        %v665 = vcvt.s32.f32 %v594
        %v666 = vcvt.s32.f32 %v595
        %v667 = vcvt.s32.f32 %v596
        %v668 = vld [vmem:[%s1] sm:$0xff]
        %v669 = vld [vmem:[%s1 + $0x8] sm:$0xff]
        %v670 = vld [vmem:[%s1 + $0x10] sm:$0xff]
        %v671 = vld [vmem:[%s1 + $0x18] sm:$0xff]
        %v672 = vld [vmem:[%s1 + $0x20] sm:$0xff]
        %v673 = vld [vmem:[%s1 + $0x28] sm:$0xff]
        %v674 = vld [vmem:[%s1 + $0x30] sm:$0xff]
        %v675 = vld [vmem:[%s1 + $0x38] sm:$0xff]
        %v676 = vld [vmem:[%s1 + $0x40] sm:$0xff]
        %v677 = vld [vmem:[%s1 + $0x48] sm:$0xff]
        %v678 = vld [vmem:[%s1 + $0x50] sm:$0xff]
        %v679 = vld [vmem:[%s1 + $0x58] sm:$0xff]
        %v680 = vld [vmem:[%s1 + $0x60] sm:$0xff]
        %v681 = vld [vmem:[%s1 + $0x68] sm:$0xff]
        %v682 = vld [vmem:[%s1 + $0x70] sm:$0xff]
        %v683 = vld [vmem:[%s1 + $0x78] sm:$0xff]
        %684 = vmatprep.subr.mxu0 0.0
        %v685 = vand.u32 %v683, 4294901760
        %686 = vmatpush1.msra.mxu0 %v685
        %687 = vmatprep.subr.mxu0 0.0
        %v688 = vand.u32 %v682, 4294901760
        %689 = vmatpush1.msra.mxu0 %v688
        %690 = vmatprep.subr.mxu0 0.0
        %v691 = vand.u32 %v681, 4294901760
        %692 = vmatpush1.msra.mxu0 %v691
        %693 = vmatprep.subr.mxu0 0.0
        %v694 = vand.u32 %v680, 4294901760
        %695 = vmatpush1.msra.mxu0 %v694
        %696 = vmatprep.subr.mxu0 0.0
        %v697 = vand.u32 %v679, 4294901760
        %698 = vmatpush1.msra.mxu0 %v697
        %699 = vmatprep.subr.mxu0 0.0
        %v700 = vand.u32 %v678, 4294901760
        %701 = vmatpush1.msra.mxu0 %v700
        %702 = vmatprep.subr.mxu0 0.0
        %v703 = vand.u32 %v677, 4294901760
        %704 = vmatpush1.msra.mxu0 %v703
        %705 = vmatprep.subr.mxu0 0.0
        %v706 = vand.u32 %v676, 4294901760
        %707 = vmatpush1.msra.mxu0 %v706
        %708 = vmatprep.subr.mxu0 0.0
        %v709 = vand.u32 %v675, 4294901760
        %710 = vmatpush1.msra.mxu0 %v709
        %711 = vmatprep.subr.mxu0 0.0
        %v712 = vand.u32 %v674, 4294901760
        %713 = vmatpush1.msra.mxu0 %v712
        %714 = vmatprep.subr.mxu0 0.0
        %v715 = vand.u32 %v673, 4294901760
        %716 = vmatpush1.msra.mxu0 %v715
        %717 = vmatprep.subr.mxu0 0.0
        %v718 = vand.u32 %v672, 4294901760
        %719 = vmatpush1.msra.mxu0 %v718
        %720 = vmatprep.subr.mxu0 0.0
        %v721 = vand.u32 %v671, 4294901760
        %722 = vmatpush1.msra.mxu0 %v721
        %723 = vmatprep.subr.mxu0 0.0
        %v724 = vand.u32 %v670, 4294901760
        %725 = vmatpush1.msra.mxu0 %v724
        %726 = vmatprep.subr.mxu0 0.0
        %v727 = vand.u32 %v669, 4294901760
        %728 = vmatpush1.msra.mxu0 %v727
        %729 = vmatprep.subr.mxu0 0.0
        %v730 = vand.u32 %v668, 4294901760
        %731 = vmatpush1.msra.mxu0 %v730
        %732 = vmatprep.subr.mxu0 0.0
        %733 = vmatpush2.msra.mxu0 0.0
        %734 = vmatprep.subr.mxu0 0.0
        %735 = vmatpush2.msra.mxu0 0.0
        %736 = vmatprep.subr.mxu0 0.0
        %737 = vmatpush2.msra.mxu0 0.0
        %738 = vmatprep.subr.mxu0 0.0
        %739 = vmatpush2.msra.mxu0 0.0
        %740 = vmatprep.subr.mxu0 0.0
        %741 = vmatpush2.msra.mxu0 0.0
        %742 = vmatprep.subr.mxu0 0.0
        %743 = vmatpush2.msra.mxu0 0.0
        %744 = vmatprep.subr.mxu0 0.0
        %745 = vmatpush2.msra.mxu0 0.0
        %746 = vmatprep.subr.mxu0 0.0
        %747 = vmatpush2.msra.mxu0 0.0
        %748 = vmatprep.subr.mxu0 0.0
        %749 = vmatpush2.msra.mxu0 0.0
        %750 = vmatprep.subr.mxu0 0.0
        %751 = vmatpush2.msra.mxu0 0.0
        %752 = vmatprep.subr.mxu0 0.0
        %753 = vmatpush2.msra.mxu0 0.0
        %754 = vmatprep.subr.mxu0 0.0
        %755 = vmatpush2.msra.mxu0 0.0
        %756 = vmatprep.subr.mxu0 0.0
        %757 = vmatpush2.msra.mxu0 0.0
        %758 = vmatprep.subr.mxu0 0.0
        %759 = vmatpush2.msra.mxu0 0.0
        %760 = vmatprep.subr.mxu0 0.0
        %761 = vmatpush2.msra.mxu0 0.0
        %762 = vmatprep.subr.mxu0 0.0
        %763 = vmatpush2.msra.mxu0 0.0
        %764 = vmatprep.mubr.f32.mxu0 0.0
        %v765 = vand.u32 %v597, 4294901760
        %v766 = vsub.f32 %v597, %v765
        %v767 = vand.u32 %v766, 4294901760
        %v768 = vsub.f32 %v766, %v767
        %v769 = vand.u32 %v768, 4294901760
        %770 = vmatmul.mubr.f32.gmra.mxu0 %v769
        %v771 = vpop.f32.mrf.mxu0
        %v772 = vadd.f32 0.0, %v771
        %v773 = vpop.f32.mrf.mxu0
        %774 = vmatprep.mubr.f32.mxu0 0.0
        %v775 = vand.u32 %v598, 4294901760
        %v776 = vsub.f32 %v598, %v775
        %v777 = vand.u32 %v776, 4294901760
        %v778 = vsub.f32 %v776, %v777
        %v779 = vand.u32 %v778, 4294901760
        %780 = vmatmul.mubr.f32.gmra.mxu0 %v779
        %v781 = vpop.f32.mrf.mxu0
        %v782 = vadd.f32 0.0, %v781
        %v783 = vpop.f32.mrf.mxu0
        %784 = vmatprep.mubr.f32.mxu0 0.0
        %v785 = vand.u32 %v599, 4294901760
        %v786 = vsub.f32 %v599, %v785
        %v787 = vand.u32 %v786, 4294901760
        %v788 = vsub.f32 %v786, %v787
        %v789 = vand.u32 %v788, 4294901760
        %790 = vmatmul.mubr.f32.gmra.mxu0 %v789
        %v791 = vpop.f32.mrf.mxu0
        %v792 = vadd.f32 0.0, %v791
        %v793 = vpop.f32.mrf.mxu0
        %794 = vmatprep.mubr.f32.mxu0 0.0
        %v795 = vand.u32 %v600, 4294901760
        %v796 = vsub.f32 %v600, %v795
        %v797 = vand.u32 %v796, 4294901760
        %v798 = vsub.f32 %v796, %v797
        %v799 = vand.u32 %v798, 4294901760
        %800 = vmatmul.mubr.f32.gmra.mxu0 %v799
        %v801 = vpop.f32.mrf.mxu0
        %v802 = vadd.f32 0.0, %v801
        %v803 = vpop.f32.mrf.mxu0
        %804 = vmatprep.mubr.f32.mxu0 0.0
        %v805 = vand.u32 %v601, 4294901760
        %v806 = vsub.f32 %v601, %v805
        %v807 = vand.u32 %v806, 4294901760
        %v808 = vsub.f32 %v806, %v807
        %v809 = vand.u32 %v808, 4294901760
        %810 = vmatmul.mubr.f32.gmra.mxu0 %v809
        %v811 = vpop.f32.mrf.mxu0
        %v812 = vadd.f32 0.0, %v811
        %v813 = vpop.f32.mrf.mxu0
        %814 = vmatprep.mubr.f32.mxu0 0.0
        %v815 = vand.u32 %v602, 4294901760
        %v816 = vsub.f32 %v602, %v815
        %v817 = vand.u32 %v816, 4294901760
        %v818 = vsub.f32 %v816, %v817
        %v819 = vand.u32 %v818, 4294901760
        %820 = vmatmul.mubr.f32.gmra.mxu0 %v819
        %v821 = vpop.f32.mrf.mxu0
        %v822 = vadd.f32 0.0, %v821
        %v823 = vpop.f32.mrf.mxu0
        %824 = vmatprep.mubr.f32.mxu0 0.0
        %v825 = vand.u32 %v603, 4294901760
        %v826 = vsub.f32 %v603, %v825
        %v827 = vand.u32 %v826, 4294901760
        %v828 = vsub.f32 %v826, %v827
        %v829 = vand.u32 %v828, 4294901760
        %830 = vmatmul.mubr.f32.gmra.mxu0 %v829
        %v831 = vpop.f32.mrf.mxu0
        %v832 = vadd.f32 0.0, %v831
        %v833 = vpop.f32.mrf.mxu0
        %834 = vmatprep.mubr.f32.mxu0 0.0
        %v835 = vand.u32 %v604, 4294901760
        %v836 = vsub.f32 %v604, %v835
        %v837 = vand.u32 %v836, 4294901760
        %v838 = vsub.f32 %v836, %v837
        %v839 = vand.u32 %v838, 4294901760
        %840 = vmatmul.mubr.f32.gmra.mxu0 %v839
        %v841 = vpop.f32.mrf.mxu0
        %v842 = vadd.f32 0.0, %v841
        %v843 = vpop.f32.mrf.mxu0
        %844 = vmatprep.mubr.f32.mxu0 0.0
        %v845 = vand.u32 %v605, 4294901760
        %v846 = vsub.f32 %v605, %v845
        %v847 = vand.u32 %v846, 4294901760
        %v848 = vsub.f32 %v846, %v847
        %v849 = vand.u32 %v848, 4294901760
        %850 = vmatmul.mubr.f32.gmra.mxu0 %v849
        %v851 = vpop.f32.mrf.mxu0
        %v852 = vadd.f32 0.0, %v851
        %v853 = vpop.f32.mrf.mxu0
        %854 = vmatprep.mubr.f32.mxu0 0.0
        %v855 = vand.u32 %v606, 4294901760
        %v856 = vsub.f32 %v606, %v855
        %v857 = vand.u32 %v856, 4294901760
        %v858 = vsub.f32 %v856, %v857
        %v859 = vand.u32 %v858, 4294901760
        %860 = vmatmul.mubr.f32.gmra.mxu0 %v859
        %v861 = vpop.f32.mrf.mxu0
        %v862 = vadd.f32 0.0, %v861
        %v863 = vpop.f32.mrf.mxu0
        %864 = vmatprep.mubr.f32.mxu0 0.0
        %v865 = vand.u32 %v607, 4294901760
        %v866 = vsub.f32 %v607, %v865
        %v867 = vand.u32 %v866, 4294901760
        %v868 = vsub.f32 %v866, %v867
        %v869 = vand.u32 %v868, 4294901760
        %870 = vmatmul.mubr.f32.gmra.mxu0 %v869
        %v871 = vpop.f32.mrf.mxu0
        %v872 = vadd.f32 0.0, %v871
        %v873 = vpop.f32.mrf.mxu0
        %874 = vmatprep.mubr.f32.mxu0 0.0
        %v875 = vand.u32 %v608, 4294901760
        %v876 = vsub.f32 %v608, %v875
        %v877 = vand.u32 %v876, 4294901760
        %v878 = vsub.f32 %v876, %v877
        %v879 = vand.u32 %v878, 4294901760
        %880 = vmatmul.mubr.f32.gmra.mxu0 %v879
        %v881 = vpop.f32.mrf.mxu0
        %v882 = vadd.f32 0.0, %v881
        %v883 = vpop.f32.mrf.mxu0
        %884 = vmatprep.mubr.f32.mxu0 0.0
        %v885 = vand.u32 %v609, 4294901760
        %v886 = vsub.f32 %v609, %v885
        %v887 = vand.u32 %v886, 4294901760
        %v888 = vsub.f32 %v886, %v887
        %v889 = vand.u32 %v888, 4294901760
        %890 = vmatmul.mubr.f32.gmra.mxu0 %v889
        %v891 = vpop.f32.mrf.mxu0
        %v892 = vadd.f32 0.0, %v891
        %v893 = vpop.f32.mrf.mxu0
        %894 = vmatprep.mubr.f32.mxu0 0.0
        %v895 = vand.u32 %v610, 4294901760
        %v896 = vsub.f32 %v610, %v895
        %v897 = vand.u32 %v896, 4294901760
        %v898 = vsub.f32 %v896, %v897
        %v899 = vand.u32 %v898, 4294901760
        %900 = vmatmul.mubr.f32.gmra.mxu0 %v899
        %v901 = vpop.f32.mrf.mxu0
        %v902 = vadd.f32 0.0, %v901
        %v903 = vpop.f32.mrf.mxu0
        %904 = vmatprep.mubr.f32.mxu0 0.0
        %v905 = vand.u32 %v611, 4294901760
        %v906 = vsub.f32 %v611, %v905
        %v907 = vand.u32 %v906, 4294901760
        %v908 = vsub.f32 %v906, %v907
        %v909 = vand.u32 %v908, 4294901760
        %910 = vmatmul.mubr.f32.gmra.mxu0 %v909
        %v911 = vpop.f32.mrf.mxu0
        %v912 = vadd.f32 0.0, %v911
        %v913 = vpop.f32.mrf.mxu0
        %914 = vmatprep.mubr.f32.mxu0 0.0
        %v915 = vand.u32 %v612, 4294901760
        %v916 = vsub.f32 %v612, %v915
        %v917 = vand.u32 %v916, 4294901760
        %v918 = vsub.f32 %v916, %v917
        %v919 = vand.u32 %v918, 4294901760
        %920 = vmatmul.mubr.f32.gmra.mxu0 %v919
        %v921 = vpop.f32.mrf.mxu0
        %v922 = vadd.f32 0.0, %v921
        %v923 = vpop.f32.mrf.mxu0
        %924 = vmatprep.mubr.f32.mxu0 0.0
        %v925 = vand.u32 %v613, 4294901760
        %v926 = vsub.f32 %v613, %v925
        %v927 = vand.u32 %v926, 4294901760
        %v928 = vsub.f32 %v926, %v927
        %v929 = vand.u32 %v928, 4294901760
        %930 = vmatmul.mubr.f32.gmra.mxu0 %v929
        %v931 = vpop.f32.mrf.mxu0
        %v932 = vadd.f32 0.0, %v931
        %v933 = vpop.f32.mrf.mxu0
        %934 = vmatprep.mubr.f32.mxu0 0.0
        %v935 = vand.u32 %v614, 4294901760
        %v936 = vsub.f32 %v614, %v935
        %v937 = vand.u32 %v936, 4294901760
        %v938 = vsub.f32 %v936, %v937
        %v939 = vand.u32 %v938, 4294901760
        %940 = vmatmul.mubr.f32.gmra.mxu0 %v939
        %v941 = vpop.f32.mrf.mxu0
        %v942 = vadd.f32 0.0, %v941
        %v943 = vpop.f32.mrf.mxu0
        %944 = vmatprep.mubr.f32.mxu0 0.0
        %v945 = vand.u32 %v615, 4294901760
        %v946 = vsub.f32 %v615, %v945
        %v947 = vand.u32 %v946, 4294901760
        %v948 = vsub.f32 %v946, %v947
        %v949 = vand.u32 %v948, 4294901760
        %950 = vmatmul.mubr.f32.gmra.mxu0 %v949
        %v951 = vpop.f32.mrf.mxu0
        %v952 = vadd.f32 0.0, %v951
        %v953 = vpop.f32.mrf.mxu0
        %954 = vmatprep.mubr.f32.mxu0 0.0
        %v955 = vand.u32 %v616, 4294901760
        %v956 = vsub.f32 %v616, %v955
        %v957 = vand.u32 %v956, 4294901760
        %v958 = vsub.f32 %v956, %v957
        %v959 = vand.u32 %v958, 4294901760
        %960 = vmatmul.mubr.f32.gmra.mxu0 %v959
        %v961 = vpop.f32.mrf.mxu0
        %v962 = vadd.f32 0.0, %v961
        %v963 = vpop.f32.mrf.mxu0
        %964 = vmatprep.mubr.f32.mxu0 0.0
        %v965 = vand.u32 %v617, 4294901760
        %v966 = vsub.f32 %v617, %v965
        %v967 = vand.u32 %v966, 4294901760
        %v968 = vsub.f32 %v966, %v967
        %v969 = vand.u32 %v968, 4294901760
        %970 = vmatmul.mubr.f32.gmra.mxu0 %v969
        %v971 = vpop.f32.mrf.mxu0
        %v972 = vadd.f32 0.0, %v971
        %v973 = vpop.f32.mrf.mxu0
        %974 = vmatprep.mubr.f32.mxu0 0.0
        %v975 = vand.u32 %v618, 4294901760
        %v976 = vsub.f32 %v618, %v975
        %v977 = vand.u32 %v976, 4294901760
        %v978 = vsub.f32 %v976, %v977
        %v979 = vand.u32 %v978, 4294901760
        %980 = vmatmul.mubr.f32.gmra.mxu0 %v979
        %v981 = vpop.f32.mrf.mxu0
        %v982 = vadd.f32 0.0, %v981
        %v983 = vpop.f32.mrf.mxu0
        %984 = vmatprep.mubr.f32.mxu0 0.0
        %v985 = vand.u32 %v619, 4294901760
        %v986 = vsub.f32 %v619, %v985
        %v987 = vand.u32 %v986, 4294901760
        %v988 = vsub.f32 %v986, %v987
        %v989 = vand.u32 %v988, 4294901760
        %990 = vmatmul.mubr.f32.gmra.mxu0 %v989
        %v991 = vpop.f32.mrf.mxu0
        %v992 = vadd.f32 0.0, %v991
        %v993 = vpop.f32.mrf.mxu0
        %994 = vmatprep.mubr.f32.mxu0 0.0
        %v995 = vand.u32 %v620, 4294901760
        %v996 = vsub.f32 %v620, %v995
        %v997 = vand.u32 %v996, 4294901760
        %v998 = vsub.f32 %v996, %v997
        %v999 = vand.u32 %v998, 4294901760
        %1000 = vmatmul.mubr.f32.gmra.mxu0 %v999
        %v1001 = vpop.f32.mrf.mxu0
        %v1002 = vadd.f32 0.0, %v1001
        %v1003 = vpop.f32.mrf.mxu0
        %1004 = vmatprep.mubr.f32.mxu0 0.0
        %v1005 = vand.u32 %v621, 4294901760
        %v1006 = vsub.f32 %v621, %v1005
        %v1007 = vand.u32 %v1006, 4294901760
        %v1008 = vsub.f32 %v1006, %v1007
        %v1009 = vand.u32 %v1008, 4294901760
        %1010 = vmatmul.mubr.f32.gmra.mxu0 %v1009
        %v1011 = vpop.f32.mrf.mxu0
        %v1012 = vadd.f32 0.0, %v1011
        %v1013 = vpop.f32.mrf.mxu0
        %1014 = vmatprep.mubr.f32.mxu0 0.0
        %v1015 = vand.u32 %v622, 4294901760
        %v1016 = vsub.f32 %v622, %v1015
        %v1017 = vand.u32 %v1016, 4294901760
        %v1018 = vsub.f32 %v1016, %v1017
        %v1019 = vand.u32 %v1018, 4294901760
        %1020 = vmatmul.mubr.f32.gmra.mxu0 %v1019
        %v1021 = vpop.f32.mrf.mxu0
        %v1022 = vadd.f32 0.0, %v1021
        %v1023 = vpop.f32.mrf.mxu0
        %1024 = vmatprep.mubr.f32.mxu0 0.0
        %v1025 = vand.u32 %v623, 4294901760
        %v1026 = vsub.f32 %v623, %v1025
        %v1027 = vand.u32 %v1026, 4294901760
        %v1028 = vsub.f32 %v1026, %v1027
        %v1029 = vand.u32 %v1028, 4294901760
        %1030 = vmatmul.mubr.f32.gmra.mxu0 %v1029
        %v1031 = vpop.f32.mrf.mxu0
        %v1032 = vadd.f32 0.0, %v1031
        %v1033 = vpop.f32.mrf.mxu0
        %1034 = vmatprep.mubr.f32.mxu0 0.0
        %v1035 = vand.u32 %v624, 4294901760
        %v1036 = vsub.f32 %v624, %v1035
        %v1037 = vand.u32 %v1036, 4294901760
        %v1038 = vsub.f32 %v1036, %v1037
        %v1039 = vand.u32 %v1038, 4294901760
        %1040 = vmatmul.mubr.f32.gmra.mxu0 %v1039
        %v1041 = vpop.f32.mrf.mxu0
        %v1042 = vadd.f32 0.0, %v1041
        %v1043 = vpop.f32.mrf.mxu0
        %1044 = vmatprep.mubr.f32.mxu0 0.0
        %v1045 = vand.u32 %v625, 4294901760
        %v1046 = vsub.f32 %v625, %v1045
        %v1047 = vand.u32 %v1046, 4294901760
        %v1048 = vsub.f32 %v1046, %v1047
        %v1049 = vand.u32 %v1048, 4294901760
        %1050 = vmatmul.mubr.f32.gmra.mxu0 %v1049
        %v1051 = vpop.f32.mrf.mxu0
        %v1052 = vadd.f32 0.0, %v1051
        %v1053 = vpop.f32.mrf.mxu0
        %1054 = vmatprep.mubr.f32.mxu0 0.0
        %v1055 = vand.u32 %v626, 4294901760
        %v1056 = vsub.f32 %v626, %v1055
        %v1057 = vand.u32 %v1056, 4294901760
        %v1058 = vsub.f32 %v1056, %v1057
        %v1059 = vand.u32 %v1058, 4294901760
        %1060 = vmatmul.mubr.f32.gmra.mxu0 %v1059
        %v1061 = vpop.f32.mrf.mxu0
        %v1062 = vadd.f32 0.0, %v1061
        %v1063 = vpop.f32.mrf.mxu0
        %1064 = vmatprep.mubr.f32.mxu0 0.0
        %v1065 = vand.u32 %v627, 4294901760
        %v1066 = vsub.f32 %v627, %v1065
        %v1067 = vand.u32 %v1066, 4294901760
        %v1068 = vsub.f32 %v1066, %v1067
        %v1069 = vand.u32 %v1068, 4294901760
        %1070 = vmatmul.mubr.f32.gmra.mxu0 %v1069
        %v1071 = vpop.f32.mrf.mxu0
        %v1072 = vadd.f32 0.0, %v1071
        %v1073 = vpop.f32.mrf.mxu0
        %1074 = vmatprep.mubr.f32.mxu0 0.0
        %v1075 = vand.u32 %v628, 4294901760
        %v1076 = vsub.f32 %v628, %v1075
        %v1077 = vand.u32 %v1076, 4294901760
        %v1078 = vsub.f32 %v1076, %v1077
        %v1079 = vand.u32 %v1078, 4294901760
        %1080 = vmatmul.mubr.f32.gmra.mxu0 %v1079
        %v1081 = vpop.f32.mrf.mxu0
        %v1082 = vadd.f32 0.0, %v1081
        %v1083 = vpop.f32.mrf.mxu0
        %1084 = vmatprep.mubr.f32.mxu0 0.0
        %v1085 = vand.u32 %v629, 4294901760
        %v1086 = vsub.f32 %v629, %v1085
        %v1087 = vand.u32 %v1086, 4294901760
        %v1088 = vsub.f32 %v1086, %v1087
        %v1089 = vand.u32 %v1088, 4294901760
        %1090 = vmatmul.mubr.f32.gmra.mxu0 %v1089
        %v1091 = vpop.f32.mrf.mxu0
        %v1092 = vadd.f32 0.0, %v1091
        %v1093 = vpop.f32.mrf.mxu0
        %1094 = vmatprep.mubr.f32.mxu0 0.0
        %v1095 = vand.u32 %v630, 4294901760
        %v1096 = vsub.f32 %v630, %v1095
        %v1097 = vand.u32 %v1096, 4294901760
        %v1098 = vsub.f32 %v1096, %v1097
        %v1099 = vand.u32 %v1098, 4294901760
        %1100 = vmatmul.mubr.f32.gmra.mxu0 %v1099
        %v1101 = vpop.f32.mrf.mxu0
        %v1102 = vadd.f32 0.0, %v1101
        %v1103 = vpop.f32.mrf.mxu0
        %1104 = vmatprep.mubr.f32.mxu0 0.0
        %v1105 = vand.u32 %v631, 4294901760
        %v1106 = vsub.f32 %v631, %v1105
        %v1107 = vand.u32 %v1106, 4294901760
        %v1108 = vsub.f32 %v1106, %v1107
        %v1109 = vand.u32 %v1108, 4294901760
        %1110 = vmatmul.mubr.f32.gmra.mxu0 %v1109
        %v1111 = vpop.f32.mrf.mxu0
        %v1112 = vadd.f32 0.0, %v1111
        %v1113 = vpop.f32.mrf.mxu0
        %1114 = vmatprep.mubr.f32.mxu0 0.0
        %v1115 = vand.u32 %v632, 4294901760
        %v1116 = vsub.f32 %v632, %v1115
        %v1117 = vand.u32 %v1116, 4294901760
        %v1118 = vsub.f32 %v1116, %v1117
        %v1119 = vand.u32 %v1118, 4294901760
        %1120 = vmatmul.mubr.f32.gmra.mxu0 %v1119
        %v1121 = vpop.f32.mrf.mxu0
        %v1122 = vadd.f32 0.0, %v1121
        %v1123 = vpop.f32.mrf.mxu0
        %1124 = vmatprep.mubr.f32.mxu0 0.0
        %v1125 = vand.u32 %v633, 4294901760
        %v1126 = vsub.f32 %v633, %v1125
        %v1127 = vand.u32 %v1126, 4294901760
        %v1128 = vsub.f32 %v1126, %v1127
        %v1129 = vand.u32 %v1128, 4294901760
        %1130 = vmatmul.mubr.f32.gmra.mxu0 %v1129
        %v1131 = vpop.f32.mrf.mxu0
        %v1132 = vadd.f32 0.0, %v1131
        %v1133 = vpop.f32.mrf.mxu0
        %1134 = vmatprep.mubr.f32.mxu0 0.0
        %v1135 = vand.u32 %v634, 4294901760
        %v1136 = vsub.f32 %v634, %v1135
        %v1137 = vand.u32 %v1136, 4294901760
        %v1138 = vsub.f32 %v1136, %v1137
        %v1139 = vand.u32 %v1138, 4294901760
        %1140 = vmatmul.mubr.f32.gmra.mxu0 %v1139
        %v1141 = vpop.f32.mrf.mxu0
        %v1142 = vadd.f32 0.0, %v1141
        %v1143 = vpop.f32.mrf.mxu0
        %1144 = vmatprep.mubr.f32.mxu0 0.0
        %v1145 = vand.u32 %v635, 4294901760
        %v1146 = vsub.f32 %v635, %v1145
        %v1147 = vand.u32 %v1146, 4294901760
        %v1148 = vsub.f32 %v1146, %v1147
        %v1149 = vand.u32 %v1148, 4294901760
        %1150 = vmatmul.mubr.f32.gmra.mxu0 %v1149
        %v1151 = vpop.f32.mrf.mxu0
        %v1152 = vadd.f32 0.0, %v1151
        %v1153 = vpop.f32.mrf.mxu0
        %1154 = vmatprep.mubr.f32.mxu0 0.0
        %v1155 = vand.u32 %v636, 4294901760
        %v1156 = vsub.f32 %v636, %v1155
        %v1157 = vand.u32 %v1156, 4294901760
        %v1158 = vsub.f32 %v1156, %v1157
        %v1159 = vand.u32 %v1158, 4294901760
        %1160 = vmatmul.mubr.f32.gmra.mxu0 %v1159
        %v1161 = vpop.f32.mrf.mxu0
        %v1162 = vadd.f32 0.0, %v1161
        %v1163 = vpop.f32.mrf.mxu0
        %1164 = vmatprep.mubr.f32.mxu0 0.0
        %v1165 = vand.u32 %v637, 4294901760
        %v1166 = vsub.f32 %v637, %v1165
        %v1167 = vand.u32 %v1166, 4294901760
        %v1168 = vsub.f32 %v1166, %v1167
        %v1169 = vand.u32 %v1168, 4294901760
        %1170 = vmatmul.mubr.f32.gmra.mxu0 %v1169
        %v1171 = vpop.f32.mrf.mxu0
        %v1172 = vadd.f32 0.0, %v1171
        %v1173 = vpop.f32.mrf.mxu0
        %1174 = vmatprep.mubr.f32.mxu0 0.0
        %v1175 = vand.u32 %v638, 4294901760
        %v1176 = vsub.f32 %v638, %v1175
        %v1177 = vand.u32 %v1176, 4294901760
        %v1178 = vsub.f32 %v1176, %v1177
        %v1179 = vand.u32 %v1178, 4294901760
        %1180 = vmatmul.mubr.f32.gmra.mxu0 %v1179
        %v1181 = vpop.f32.mrf.mxu0
        %v1182 = vadd.f32 0.0, %v1181
        %v1183 = vpop.f32.mrf.mxu0
        %1184 = vmatprep.mubr.f32.mxu0 0.0
        %v1185 = vand.u32 %v639, 4294901760
        %v1186 = vsub.f32 %v639, %v1185
        %v1187 = vand.u32 %v1186, 4294901760
        %v1188 = vsub.f32 %v1186, %v1187
        %v1189 = vand.u32 %v1188, 4294901760
        %1190 = vmatmul.mubr.f32.gmra.mxu0 %v1189
        %v1191 = vpop.f32.mrf.mxu0
        %v1192 = vadd.f32 0.0, %v1191
        %v1193 = vpop.f32.mrf.mxu0
        %1194 = vmatprep.mubr.f32.mxu0 0.0
        %v1195 = vand.u32 %v640, 4294901760
        %v1196 = vsub.f32 %v640, %v1195
        %v1197 = vand.u32 %v1196, 4294901760
        %v1198 = vsub.f32 %v1196, %v1197
        %v1199 = vand.u32 %v1198, 4294901760
        %1200 = vmatmul.mubr.f32.gmra.mxu0 %v1199
        %v1201 = vpop.f32.mrf.mxu0
        %v1202 = vadd.f32 0.0, %v1201
        %v1203 = vpop.f32.mrf.mxu0
        %1204 = vmatprep.mubr.f32.mxu0 0.0
        %v1205 = vand.u32 %v641, 4294901760
        %v1206 = vsub.f32 %v641, %v1205
        %v1207 = vand.u32 %v1206, 4294901760
        %v1208 = vsub.f32 %v1206, %v1207
        %v1209 = vand.u32 %v1208, 4294901760
        %1210 = vmatmul.mubr.f32.gmra.mxu0 %v1209
        %v1211 = vpop.f32.mrf.mxu0
        %v1212 = vadd.f32 0.0, %v1211
        %v1213 = vpop.f32.mrf.mxu0
        %1214 = vmatprep.mubr.f32.mxu0 0.0
        %v1215 = vand.u32 %v642, 4294901760
        %v1216 = vsub.f32 %v642, %v1215
        %v1217 = vand.u32 %v1216, 4294901760
        %v1218 = vsub.f32 %v1216, %v1217
        %v1219 = vand.u32 %v1218, 4294901760
        %1220 = vmatmul.mubr.f32.gmra.mxu0 %v1219
        %v1221 = vpop.f32.mrf.mxu0
        %v1222 = vadd.f32 0.0, %v1221
        %v1223 = vpop.f32.mrf.mxu0
        %1224 = vmatprep.mubr.f32.mxu0 0.0
        %v1225 = vand.u32 %v643, 4294901760
        %v1226 = vsub.f32 %v643, %v1225
        %v1227 = vand.u32 %v1226, 4294901760
        %v1228 = vsub.f32 %v1226, %v1227
        %v1229 = vand.u32 %v1228, 4294901760
        %1230 = vmatmul.mubr.f32.gmra.mxu0 %v1229
        %v1231 = vpop.f32.mrf.mxu0
        %v1232 = vadd.f32 0.0, %v1231
        %v1233 = vpop.f32.mrf.mxu0
        %1234 = vmatprep.mubr.f32.mxu0 0.0
        %v1235 = vand.u32 %v644, 4294901760
        %v1236 = vsub.f32 %v644, %v1235
        %v1237 = vand.u32 %v1236, 4294901760
        %v1238 = vsub.f32 %v1236, %v1237
        %v1239 = vand.u32 %v1238, 4294901760
        %1240 = vmatmul.mubr.f32.gmra.mxu0 %v1239
        %v1241 = vpop.f32.mrf.mxu0
        %v1242 = vadd.f32 0.0, %v1241
        %v1243 = vpop.f32.mrf.mxu0
        %1244 = vmatprep.mubr.f32.mxu0 0.0
        %v1245 = vand.u32 %v645, 4294901760
        %v1246 = vsub.f32 %v645, %v1245
        %v1247 = vand.u32 %v1246, 4294901760
        %v1248 = vsub.f32 %v1246, %v1247
        %v1249 = vand.u32 %v1248, 4294901760
        %1250 = vmatmul.mubr.f32.gmra.mxu0 %v1249
        %v1251 = vpop.f32.mrf.mxu0
        %v1252 = vadd.f32 0.0, %v1251
        %v1253 = vpop.f32.mrf.mxu0
        %1254 = vmatprep.mubr.f32.mxu0 0.0
        %v1255 = vand.u32 %v646, 4294901760
        %v1256 = vsub.f32 %v646, %v1255
        %v1257 = vand.u32 %v1256, 4294901760
        %v1258 = vsub.f32 %v1256, %v1257
        %v1259 = vand.u32 %v1258, 4294901760
        %1260 = vmatmul.mubr.f32.gmra.mxu0 %v1259
        %v1261 = vpop.f32.mrf.mxu0
        %v1262 = vadd.f32 0.0, %v1261
        %v1263 = vpop.f32.mrf.mxu0
        %1264 = vmatprep.mubr.f32.mxu0 0.0
        %v1265 = vand.u32 %v647, 4294901760
        %v1266 = vsub.f32 %v647, %v1265
        %v1267 = vand.u32 %v1266, 4294901760
        %v1268 = vsub.f32 %v1266, %v1267
        %v1269 = vand.u32 %v1268, 4294901760
        %1270 = vmatmul.mubr.f32.gmra.mxu0 %v1269
        %v1271 = vpop.f32.mrf.mxu0
        %v1272 = vadd.f32 0.0, %v1271
        %v1273 = vpop.f32.mrf.mxu0
        %1274 = vmatprep.mubr.f32.mxu0 0.0
        %v1275 = vand.u32 %v648, 4294901760
        %v1276 = vsub.f32 %v648, %v1275
        %v1277 = vand.u32 %v1276, 4294901760
        %v1278 = vsub.f32 %v1276, %v1277
        %v1279 = vand.u32 %v1278, 4294901760
        %1280 = vmatmul.mubr.f32.gmra.mxu0 %v1279
        %v1281 = vpop.f32.mrf.mxu0
        %v1282 = vadd.f32 0.0, %v1281
        %v1283 = vpop.f32.mrf.mxu0
        %1284 = vmatprep.mubr.f32.mxu0 0.0
        %v1285 = vand.u32 %v649, 4294901760
        %v1286 = vsub.f32 %v649, %v1285
        %v1287 = vand.u32 %v1286, 4294901760
        %v1288 = vsub.f32 %v1286, %v1287
        %v1289 = vand.u32 %v1288, 4294901760
        %1290 = vmatmul.mubr.f32.gmra.mxu0 %v1289
        %v1291 = vpop.f32.mrf.mxu0
        %v1292 = vadd.f32 0.0, %v1291
        %v1293 = vpop.f32.mrf.mxu0
        %1294 = vmatprep.mubr.f32.mxu0 0.0
        %v1295 = vand.u32 %v650, 4294901760
        %v1296 = vsub.f32 %v650, %v1295
        %v1297 = vand.u32 %v1296, 4294901760
        %v1298 = vsub.f32 %v1296, %v1297
        %v1299 = vand.u32 %v1298, 4294901760
        %1300 = vmatmul.mubr.f32.gmra.mxu0 %v1299
        %v1301 = vpop.f32.mrf.mxu0
        %v1302 = vadd.f32 0.0, %v1301
        %v1303 = vpop.f32.mrf.mxu0
        %1304 = vmatprep.mubr.f32.mxu0 0.0
        %v1305 = vand.u32 %v651, 4294901760
        %v1306 = vsub.f32 %v651, %v1305
        %v1307 = vand.u32 %v1306, 4294901760
        %v1308 = vsub.f32 %v1306, %v1307
        %v1309 = vand.u32 %v1308, 4294901760
        %1310 = vmatmul.mubr.f32.gmra.mxu0 %v1309
        %v1311 = vpop.f32.mrf.mxu0
        %v1312 = vadd.f32 0.0, %v1311
        %v1313 = vpop.f32.mrf.mxu0
        %1314 = vmatprep.mubr.f32.mxu0 0.0
        %v1315 = vand.u32 %v652, 4294901760
        %v1316 = vsub.f32 %v652, %v1315
        %v1317 = vand.u32 %v1316, 4294901760
        %v1318 = vsub.f32 %v1316, %v1317
        %v1319 = vand.u32 %v1318, 4294901760
        %1320 = vmatmul.mubr.f32.gmra.mxu0 %v1319
        %v1321 = vpop.f32.mrf.mxu0
        %v1322 = vadd.f32 0.0, %v1321
        %v1323 = vpop.f32.mrf.mxu0
        %1324 = vmatprep.mubr.f32.mxu0 0.0
        %v1325 = vand.u32 %v653, 4294901760
        %v1326 = vsub.f32 %v653, %v1325
        %v1327 = vand.u32 %v1326, 4294901760
        %v1328 = vsub.f32 %v1326, %v1327
        %v1329 = vand.u32 %v1328, 4294901760
        %1330 = vmatmul.mubr.f32.gmra.mxu0 %v1329
        %v1331 = vpop.f32.mrf.mxu0
        %v1332 = vadd.f32 0.0, %v1331
        %v1333 = vpop.f32.mrf.mxu0
        %1334 = vmatprep.mubr.f32.mxu0 0.0
        %v1335 = vand.u32 %v654, 4294901760
        %v1336 = vsub.f32 %v654, %v1335
        %v1337 = vand.u32 %v1336, 4294901760
        %v1338 = vsub.f32 %v1336, %v1337
        %v1339 = vand.u32 %v1338, 4294901760
        %1340 = vmatmul.mubr.f32.gmra.mxu0 %v1339
        %v1341 = vpop.f32.mrf.mxu0
        %v1342 = vadd.f32 0.0, %v1341
        %v1343 = vpop.f32.mrf.mxu0
        %1344 = vmatprep.mubr.f32.mxu0 0.0
        %v1345 = vand.u32 %v655, 4294901760
        %v1346 = vsub.f32 %v655, %v1345
        %v1347 = vand.u32 %v1346, 4294901760
        %v1348 = vsub.f32 %v1346, %v1347
        %v1349 = vand.u32 %v1348, 4294901760
        %1350 = vmatmul.mubr.f32.gmra.mxu0 %v1349
        %v1351 = vpop.f32.mrf.mxu0
        %v1352 = vadd.f32 0.0, %v1351
        %v1353 = vpop.f32.mrf.mxu0
        %1354 = vmatprep.mubr.f32.mxu0 0.0
        %v1355 = vand.u32 %v656, 4294901760
        %v1356 = vsub.f32 %v656, %v1355
        %v1357 = vand.u32 %v1356, 4294901760
        %v1358 = vsub.f32 %v1356, %v1357
        %v1359 = vand.u32 %v1358, 4294901760
        %1360 = vmatmul.mubr.f32.gmra.mxu0 %v1359
        %v1361 = vpop.f32.mrf.mxu0
        %v1362 = vadd.f32 0.0, %v1361
        %v1363 = vpop.f32.mrf.mxu0
        %1364 = vmatprep.mubr.f32.mxu0 0.0
        %v1365 = vand.u32 %v657, 4294901760
        %v1366 = vsub.f32 %v657, %v1365
        %v1367 = vand.u32 %v1366, 4294901760
        %v1368 = vsub.f32 %v1366, %v1367
        %v1369 = vand.u32 %v1368, 4294901760
        %1370 = vmatmul.mubr.f32.gmra.mxu0 %v1369
        %v1371 = vpop.f32.mrf.mxu0
        %v1372 = vadd.f32 0.0, %v1371
        %v1373 = vpop.f32.mrf.mxu0
        %1374 = vmatprep.mubr.f32.mxu0 0.0
        %v1375 = vand.u32 %v658, 4294901760
        %v1376 = vsub.f32 %v658, %v1375
        %v1377 = vand.u32 %v1376, 4294901760
        %v1378 = vsub.f32 %v1376, %v1377
        %v1379 = vand.u32 %v1378, 4294901760
        %1380 = vmatmul.mubr.f32.gmra.mxu0 %v1379
        %v1381 = vpop.f32.mrf.mxu0
        %v1382 = vadd.f32 0.0, %v1381
        %v1383 = vpop.f32.mrf.mxu0
        %1384 = vmatprep.mubr.f32.mxu0 0.0
        %v1385 = vand.u32 %v659, 4294901760
        %v1386 = vsub.f32 %v659, %v1385
        %v1387 = vand.u32 %v1386, 4294901760
        %v1388 = vsub.f32 %v1386, %v1387
        %v1389 = vand.u32 %v1388, 4294901760
        %1390 = vmatmul.mubr.f32.gmra.mxu0 %v1389
        %v1391 = vpop.f32.mrf.mxu0
        %v1392 = vadd.f32 0.0, %v1391
        %v1393 = vpop.f32.mrf.mxu0
        %1394 = vmatprep.mubr.f32.mxu0 0.0
        %v1395 = vand.u32 %v660, 4294901760
        %v1396 = vsub.f32 %v660, %v1395
        %v1397 = vand.u32 %v1396, 4294901760
        %v1398 = vsub.f32 %v1396, %v1397
        %v1399 = vand.u32 %v1398, 4294901760
        %1400 = vmatmul.mubr.f32.gmra.mxu0 %v1399
        %v1401 = vpop.f32.mrf.mxu0
        %v1402 = vadd.f32 0.0, %v1401
        %v1403 = vpop.f32.mrf.mxu0
        %1404 = vmatprep.mubr.f32.mxu0 0.0
        %v1405 = vand.u32 %v661, 4294901760
        %v1406 = vsub.f32 %v661, %v1405
        %v1407 = vand.u32 %v1406, 4294901760
        %v1408 = vsub.f32 %v1406, %v1407
        %v1409 = vand.u32 %v1408, 4294901760
        %1410 = vmatmul.mubr.f32.gmra.mxu0 %v1409
        %v1411 = vpop.f32.mrf.mxu0
        %v1412 = vadd.f32 0.0, %v1411
        %v1413 = vpop.f32.mrf.mxu0
        %1414 = vmatprep.mubr.f32.mxu0 0.0
        %v1415 = vand.u32 %v662, 4294901760
        %v1416 = vsub.f32 %v662, %v1415
        %v1417 = vand.u32 %v1416, 4294901760
        %v1418 = vsub.f32 %v1416, %v1417
        %v1419 = vand.u32 %v1418, 4294901760
        %1420 = vmatmul.mubr.f32.gmra.mxu0 %v1419
        %v1421 = vpop.f32.mrf.mxu0
        %v1422 = vadd.f32 0.0, %v1421
        %v1423 = vpop.f32.mrf.mxu0
        %1424 = vmatprep.mubr.f32.mxu0 0.0
        %v1425 = vand.u32 %v663, 4294901760
        %v1426 = vsub.f32 %v663, %v1425
        %v1427 = vand.u32 %v1426, 4294901760
        %v1428 = vsub.f32 %v1426, %v1427
        %v1429 = vand.u32 %v1428, 4294901760
        %1430 = vmatmul.mubr.f32.gmra.mxu0 %v1429
        %v1431 = vpop.f32.mrf.mxu0
        %v1432 = vadd.f32 0.0, %v1431
        %v1433 = vpop.f32.mrf.mxu0
        %1434 = vmatprep.mubr.f32.mxu0 0.0
        %v1435 = vand.u32 %v664, 4294901760
        %v1436 = vsub.f32 %v664, %v1435
        %v1437 = vand.u32 %v1436, 4294901760
        %v1438 = vsub.f32 %v1436, %v1437
        %v1439 = vand.u32 %v1438, 4294901760
        %1440 = vmatmul.mubr.f32.gmra.mxu0 %v1439
        %v1441 = vpop.f32.mrf.mxu0
        %v1442 = vadd.f32 0.0, %v1441
        %v1443 = vpop.f32.mrf.mxu0
        %1444 = vmatprep.mubr.f32.mxu0 0.0
        %v1445 = vand.u32 %v665, 4294901760
        %v1446 = vsub.f32 %v665, %v1445
        %v1447 = vand.u32 %v1446, 4294901760
        %v1448 = vsub.f32 %v1446, %v1447
        %v1449 = vand.u32 %v1448, 4294901760
        %1450 = vmatmul.mubr.f32.gmra.mxu0 %v1449
        %v1451 = vpop.f32.mrf.mxu0
        %v1452 = vadd.f32 0.0, %v1451
        %v1453 = vpop.f32.mrf.mxu0
        %1454 = vmatprep.mubr.f32.mxu0 0.0
        %v1455 = vand.u32 %v666, 4294901760
        %v1456 = vsub.f32 %v666, %v1455
        %v1457 = vand.u32 %v1456, 4294901760
        %v1458 = vsub.f32 %v1456, %v1457
        %v1459 = vand.u32 %v1458, 4294901760
        %1460 = vmatmul.mubr.f32.gmra.mxu0 %v1459
        %v1461 = vpop.f32.mrf.mxu0
        %v1462 = vadd.f32 0.0, %v1461
        %v1463 = vpop.f32.mrf.mxu0
        %1464 = vmatprep.mubr.f32.mxu0 0.0
        %v1465 = vand.u32 %v667, 4294901760
        %v1466 = vsub.f32 %v667, %v1465
        %v1467 = vand.u32 %v1466, 4294901760
        %v1468 = vsub.f32 %v1466, %v1467
        %v1469 = vand.u32 %v1468, 4294901760
        %1470 = vmatmul.mubr.f32.gmra.mxu0 %v1469
        %v1471 = vpop.f32.mrf.mxu0
        %v1472 = vadd.f32 0.0, %v1471
        %v1473 = vpop.f32.mrf.mxu0
        %1474 = vdwg.mxu0
        %1475 = vmatprep.subr.mxu0 0.0
        %v1476 = vand.u32 %v683, 4294901760
        %v1477 = vsub.f32 %v683, %v1476
        %v1478 = vand.u32 %v1477, 4294901760
        %v1479 = vsub.f32 %v1477, %v1478
        %v1480 = vand.u32 %v1479, 4294901760
        %1481 = vmatpush1.msra.mxu0 %v1480
        %1482 = vmatprep.subr.mxu0 0.0
        %v1483 = vand.u32 %v682, 4294901760
        %v1484 = vsub.f32 %v682, %v1483
        %v1485 = vand.u32 %v1484, 4294901760
        %v1486 = vsub.f32 %v1484, %v1485
        %v1487 = vand.u32 %v1486, 4294901760
        %1488 = vmatpush1.msra.mxu0 %v1487
        %1489 = vmatprep.subr.mxu0 0.0
        %v1490 = vand.u32 %v681, 4294901760
        %v1491 = vsub.f32 %v681, %v1490
        %v1492 = vand.u32 %v1491, 4294901760
        %v1493 = vsub.f32 %v1491, %v1492
        %v1494 = vand.u32 %v1493, 4294901760
        %1495 = vmatpush1.msra.mxu0 %v1494
        %1496 = vmatprep.subr.mxu0 0.0
        %v1497 = vand.u32 %v680, 4294901760
        %v1498 = vsub.f32 %v680, %v1497
        %v1499 = vand.u32 %v1498, 4294901760
        %v1500 = vsub.f32 %v1498, %v1499
        %v1501 = vand.u32 %v1500, 4294901760
        %1502 = vmatpush1.msra.mxu0 %v1501
        %1503 = vmatprep.subr.mxu0 0.0
        %v1504 = vand.u32 %v679, 4294901760
        %v1505 = vsub.f32 %v679, %v1504
        %v1506 = vand.u32 %v1505, 4294901760
        %v1507 = vsub.f32 %v1505, %v1506
        %v1508 = vand.u32 %v1507, 4294901760
        %1509 = vmatpush1.msra.mxu0 %v1508
        %1510 = vmatprep.subr.mxu0 0.0
        %v1511 = vand.u32 %v678, 4294901760
        %v1512 = vsub.f32 %v678, %v1511
        %v1513 = vand.u32 %v1512, 4294901760
        %v1514 = vsub.f32 %v1512, %v1513
        %v1515 = vand.u32 %v1514, 4294901760
        %1516 = vmatpush1.msra.mxu0 %v1515
        %1517 = vmatprep.subr.mxu0 0.0
        %v1518 = vand.u32 %v677, 4294901760
        %v1519 = vsub.f32 %v677, %v1518
        %v1520 = vand.u32 %v1519, 4294901760
        %v1521 = vsub.f32 %v1519, %v1520
        %v1522 = vand.u32 %v1521, 4294901760
        %1523 = vmatpush1.msra.mxu0 %v1522
        %1524 = vmatprep.subr.mxu0 0.0
        %v1525 = vand.u32 %v676, 4294901760
        %v1526 = vsub.f32 %v676, %v1525
        %v1527 = vand.u32 %v1526, 4294901760
        %v1528 = vsub.f32 %v1526, %v1527
        %v1529 = vand.u32 %v1528, 4294901760
        %1530 = vmatpush1.msra.mxu0 %v1529
        %1531 = vmatprep.subr.mxu0 0.0
        %v1532 = vand.u32 %v675, 4294901760
        %v1533 = vsub.f32 %v675, %v1532
        %v1534 = vand.u32 %v1533, 4294901760
        %v1535 = vsub.f32 %v1533, %v1534
        %v1536 = vand.u32 %v1535, 4294901760
        %1537 = vmatpush1.msra.mxu0 %v1536
        %1538 = vmatprep.subr.mxu0 0.0
        %v1539 = vand.u32 %v674, 4294901760
        %v1540 = vsub.f32 %v674, %v1539
        %v1541 = vand.u32 %v1540, 4294901760
        %v1542 = vsub.f32 %v1540, %v1541
        %v1543 = vand.u32 %v1542, 4294901760
        %1544 = vmatpush1.msra.mxu0 %v1543
        %1545 = vmatprep.subr.mxu0 0.0
        %v1546 = vand.u32 %v673, 4294901760
        %v1547 = vsub.f32 %v673, %v1546
        %v1548 = vand.u32 %v1547, 4294901760
        %v1549 = vsub.f32 %v1547, %v1548
        %v1550 = vand.u32 %v1549, 4294901760
        %1551 = vmatpush1.msra.mxu0 %v1550
        %1552 = vmatprep.subr.mxu0 0.0
        %v1553 = vand.u32 %v672, 4294901760
        %v1554 = vsub.f32 %v672, %v1553
        %v1555 = vand.u32 %v1554, 4294901760
        %v1556 = vsub.f32 %v1554, %v1555
        %v1557 = vand.u32 %v1556, 4294901760
        %1558 = vmatpush1.msra.mxu0 %v1557
        %1559 = vmatprep.subr.mxu0 0.0
        %v1560 = vand.u32 %v671, 4294901760
        %v1561 = vsub.f32 %v671, %v1560
        %v1562 = vand.u32 %v1561, 4294901760
        %v1563 = vsub.f32 %v1561, %v1562
        %v1564 = vand.u32 %v1563, 4294901760
        %1565 = vmatpush1.msra.mxu0 %v1564
        %1566 = vmatprep.subr.mxu0 0.0
        %v1567 = vand.u32 %v670, 4294901760
        %v1568 = vsub.f32 %v670, %v1567
        %v1569 = vand.u32 %v1568, 4294901760
        %v1570 = vsub.f32 %v1568, %v1569
        %v1571 = vand.u32 %v1570, 4294901760
        %1572 = vmatpush1.msra.mxu0 %v1571
        %1573 = vmatprep.subr.mxu0 0.0
        %v1574 = vand.u32 %v669, 4294901760
        %v1575 = vsub.f32 %v669, %v1574
        %v1576 = vand.u32 %v1575, 4294901760
        %v1577 = vsub.f32 %v1575, %v1576
        %v1578 = vand.u32 %v1577, 4294901760
        %1579 = vmatpush1.msra.mxu0 %v1578
        %1580 = vmatprep.subr.mxu0 0.0
        %v1581 = vand.u32 %v668, 4294901760
        %v1582 = vsub.f32 %v668, %v1581
        %v1583 = vand.u32 %v1582, 4294901760
        %v1584 = vsub.f32 %v1582, %v1583
        %v1585 = vand.u32 %v1584, 4294901760
        %1586 = vmatpush1.msra.mxu0 %v1585
        %1587 = vmatprep.subr.mxu0 0.0
        %1588 = vmatpush2.msra.mxu0 0.0
        %1589 = vmatprep.subr.mxu0 0.0
        %1590 = vmatpush2.msra.mxu0 0.0
        %1591 = vmatprep.subr.mxu0 0.0
        %1592 = vmatpush2.msra.mxu0 0.0
        %1593 = vmatprep.subr.mxu0 0.0
        %1594 = vmatpush2.msra.mxu0 0.0
        %1595 = vmatprep.subr.mxu0 0.0
        %1596 = vmatpush2.msra.mxu0 0.0
        %1597 = vmatprep.subr.mxu0 0.0
        %1598 = vmatpush2.msra.mxu0 0.0
        %1599 = vmatprep.subr.mxu0 0.0
        %1600 = vmatpush2.msra.mxu0 0.0
        %1601 = vmatprep.subr.mxu0 0.0
        %1602 = vmatpush2.msra.mxu0 0.0
        %1603 = vmatprep.subr.mxu0 0.0
        %1604 = vmatpush2.msra.mxu0 0.0
        %1605 = vmatprep.subr.mxu0 0.0
        %1606 = vmatpush2.msra.mxu0 0.0
        %1607 = vmatprep.subr.mxu0 0.0
        %1608 = vmatpush2.msra.mxu0 0.0
        %1609 = vmatprep.subr.mxu0 0.0
        %1610 = vmatpush2.msra.mxu0 0.0
        %1611 = vmatprep.subr.mxu0 0.0
        %1612 = vmatpush2.msra.mxu0 0.0
        %1613 = vmatprep.subr.mxu0 0.0
        %1614 = vmatpush2.msra.mxu0 0.0
        %1615 = vmatprep.subr.mxu0 0.0
        %1616 = vmatpush2.msra.mxu0 0.0
        %1617 = vmatprep.subr.mxu0 0.0
        %1618 = vmatpush2.msra.mxu0 0.0
        %1619 = vmatprep.mubr.f32.mxu0 0.0
        %v1620 = vand.u32 %v597, 4294901760
        %1621 = vmatmul.mubr.f32.gmra.mxu0 %v1620
        %v1622 = vpop.f32.mrf.mxu0
        %v1623 = vadd.f32 %v772, %v1622
        %v1624 = vpop.f32.mrf.mxu0
        %1625 = vmatprep.mubr.f32.mxu0 0.0
        %v1626 = vand.u32 %v598, 4294901760
        %1627 = vmatmul.mubr.f32.gmra.mxu0 %v1626
        %v1628 = vpop.f32.mrf.mxu0
        %v1629 = vadd.f32 %v782, %v1628
        %v1630 = vpop.f32.mrf.mxu0
        %1631 = vmatprep.mubr.f32.mxu0 0.0
        %v1632 = vand.u32 %v599, 4294901760
        %1633 = vmatmul.mubr.f32.gmra.mxu0 %v1632
        %v1634 = vpop.f32.mrf.mxu0
        %v1635 = vadd.f32 %v792, %v1634
        %v1636 = vpop.f32.mrf.mxu0
        %1637 = vmatprep.mubr.f32.mxu0 0.0
        %v1638 = vand.u32 %v600, 4294901760
        %1639 = vmatmul.mubr.f32.gmra.mxu0 %v1638
        %v1640 = vpop.f32.mrf.mxu0
        %v1641 = vadd.f32 %v802, %v1640
        %v1642 = vpop.f32.mrf.mxu0
        %1643 = vmatprep.mubr.f32.mxu0 0.0
        %v1644 = vand.u32 %v601, 4294901760
        %1645 = vmatmul.mubr.f32.gmra.mxu0 %v1644
        %v1646 = vpop.f32.mrf.mxu0
        %v1647 = vadd.f32 %v812, %v1646
        %v1648 = vpop.f32.mrf.mxu0
        %1649 = vmatprep.mubr.f32.mxu0 0.0
        %v1650 = vand.u32 %v602, 4294901760
        %1651 = vmatmul.mubr.f32.gmra.mxu0 %v1650
        %v1652 = vpop.f32.mrf.mxu0
        %v1653 = vadd.f32 %v822, %v1652
        %v1654 = vpop.f32.mrf.mxu0
        %1655 = vmatprep.mubr.f32.mxu0 0.0
        %v1656 = vand.u32 %v603, 4294901760
        %1657 = vmatmul.mubr.f32.gmra.mxu0 %v1656
        %v1658 = vpop.f32.mrf.mxu0
        %v1659 = vadd.f32 %v832, %v1658
        %v1660 = vpop.f32.mrf.mxu0
        %1661 = vmatprep.mubr.f32.mxu0 0.0
        %v1662 = vand.u32 %v604, 4294901760
        %1663 = vmatmul.mubr.f32.gmra.mxu0 %v1662
        %v1664 = vpop.f32.mrf.mxu0
        %v1665 = vadd.f32 %v842, %v1664
        %v1666 = vpop.f32.mrf.mxu0
        %1667 = vmatprep.mubr.f32.mxu0 0.0
        %v1668 = vand.u32 %v605, 4294901760
        %1669 = vmatmul.mubr.f32.gmra.mxu0 %v1668
        %v1670 = vpop.f32.mrf.mxu0
        %v1671 = vadd.f32 %v852, %v1670
        %v1672 = vpop.f32.mrf.mxu0
        %1673 = vmatprep.mubr.f32.mxu0 0.0
        %v1674 = vand.u32 %v606, 4294901760
        %1675 = vmatmul.mubr.f32.gmra.mxu0 %v1674
        %v1676 = vpop.f32.mrf.mxu0
        %v1677 = vadd.f32 %v862, %v1676
        %v1678 = vpop.f32.mrf.mxu0
        %1679 = vmatprep.mubr.f32.mxu0 0.0
        %v1680 = vand.u32 %v607, 4294901760
        %1681 = vmatmul.mubr.f32.gmra.mxu0 %v1680
        %v1682 = vpop.f32.mrf.mxu0
        %v1683 = vadd.f32 %v872, %v1682
        %v1684 = vpop.f32.mrf.mxu0
        %1685 = vmatprep.mubr.f32.mxu0 0.0
        %v1686 = vand.u32 %v608, 4294901760
        %1687 = vmatmul.mubr.f32.gmra.mxu0 %v1686
        %v1688 = vpop.f32.mrf.mxu0
        %v1689 = vadd.f32 %v882, %v1688
        %v1690 = vpop.f32.mrf.mxu0
        %1691 = vmatprep.mubr.f32.mxu0 0.0
        %v1692 = vand.u32 %v609, 4294901760
        %1693 = vmatmul.mubr.f32.gmra.mxu0 %v1692
        %v1694 = vpop.f32.mrf.mxu0
        %v1695 = vadd.f32 %v892, %v1694
        %v1696 = vpop.f32.mrf.mxu0
        %1697 = vmatprep.mubr.f32.mxu0 0.0
        %v1698 = vand.u32 %v610, 4294901760
        %1699 = vmatmul.mubr.f32.gmra.mxu0 %v1698
        %v1700 = vpop.f32.mrf.mxu0
        %v1701 = vadd.f32 %v902, %v1700
        %v1702 = vpop.f32.mrf.mxu0
        %1703 = vmatprep.mubr.f32.mxu0 0.0
        %v1704 = vand.u32 %v611, 4294901760
        %1705 = vmatmul.mubr.f32.gmra.mxu0 %v1704
        %v1706 = vpop.f32.mrf.mxu0
        %v1707 = vadd.f32 %v912, %v1706
        %v1708 = vpop.f32.mrf.mxu0
        %1709 = vmatprep.mubr.f32.mxu0 0.0
        %v1710 = vand.u32 %v612, 4294901760
        %1711 = vmatmul.mubr.f32.gmra.mxu0 %v1710
        %v1712 = vpop.f32.mrf.mxu0
        %v1713 = vadd.f32 %v922, %v1712
        %v1714 = vpop.f32.mrf.mxu0
        %1715 = vmatprep.mubr.f32.mxu0 0.0
        %v1716 = vand.u32 %v613, 4294901760
        %1717 = vmatmul.mubr.f32.gmra.mxu0 %v1716
        %v1718 = vpop.f32.mrf.mxu0
        %v1719 = vadd.f32 %v932, %v1718
        %v1720 = vpop.f32.mrf.mxu0
        %1721 = vmatprep.mubr.f32.mxu0 0.0
        %v1722 = vand.u32 %v614, 4294901760
        %1723 = vmatmul.mubr.f32.gmra.mxu0 %v1722
        %v1724 = vpop.f32.mrf.mxu0
        %v1725 = vadd.f32 %v942, %v1724
        %v1726 = vpop.f32.mrf.mxu0
        %1727 = vmatprep.mubr.f32.mxu0 0.0
        %v1728 = vand.u32 %v615, 4294901760
        %1729 = vmatmul.mubr.f32.gmra.mxu0 %v1728
        %v1730 = vpop.f32.mrf.mxu0
        %v1731 = vadd.f32 %v952, %v1730
        %v1732 = vpop.f32.mrf.mxu0
        %1733 = vmatprep.mubr.f32.mxu0 0.0
        %v1734 = vand.u32 %v616, 4294901760
        %1735 = vmatmul.mubr.f32.gmra.mxu0 %v1734
        %v1736 = vpop.f32.mrf.mxu0
        %v1737 = vadd.f32 %v962, %v1736
        %v1738 = vpop.f32.mrf.mxu0
        %1739 = vmatprep.mubr.f32.mxu0 0.0
        %v1740 = vand.u32 %v617, 4294901760
        %1741 = vmatmul.mubr.f32.gmra.mxu0 %v1740
        %v1742 = vpop.f32.mrf.mxu0
        %v1743 = vadd.f32 %v972, %v1742
        %v1744 = vpop.f32.mrf.mxu0
        %1745 = vmatprep.mubr.f32.mxu0 0.0
        %v1746 = vand.u32 %v618, 4294901760
        %1747 = vmatmul.mubr.f32.gmra.mxu0 %v1746
        %v1748 = vpop.f32.mrf.mxu0
        %v1749 = vadd.f32 %v982, %v1748
        %v1750 = vpop.f32.mrf.mxu0
        %1751 = vmatprep.mubr.f32.mxu0 0.0
        %v1752 = vand.u32 %v619, 4294901760
        %1753 = vmatmul.mubr.f32.gmra.mxu0 %v1752
        %v1754 = vpop.f32.mrf.mxu0
        %v1755 = vadd.f32 %v992, %v1754
        %v1756 = vpop.f32.mrf.mxu0
        %1757 = vmatprep.mubr.f32.mxu0 0.0
        %v1758 = vand.u32 %v620, 4294901760
        %1759 = vmatmul.mubr.f32.gmra.mxu0 %v1758
        %v1760 = vpop.f32.mrf.mxu0
        %v1761 = vadd.f32 %v1002, %v1760
        %v1762 = vpop.f32.mrf.mxu0
        %1763 = vmatprep.mubr.f32.mxu0 0.0
        %v1764 = vand.u32 %v621, 4294901760
        %1765 = vmatmul.mubr.f32.gmra.mxu0 %v1764
        %v1766 = vpop.f32.mrf.mxu0
        %v1767 = vadd.f32 %v1012, %v1766
        %v1768 = vpop.f32.mrf.mxu0
        %1769 = vmatprep.mubr.f32.mxu0 0.0
        %v1770 = vand.u32 %v622, 4294901760
        %1771 = vmatmul.mubr.f32.gmra.mxu0 %v1770
        %v1772 = vpop.f32.mrf.mxu0
        %v1773 = vadd.f32 %v1022, %v1772
        %v1774 = vpop.f32.mrf.mxu0
        %1775 = vmatprep.mubr.f32.mxu0 0.0
        %v1776 = vand.u32 %v623, 4294901760
        %1777 = vmatmul.mubr.f32.gmra.mxu0 %v1776
        %v1778 = vpop.f32.mrf.mxu0
        %v1779 = vadd.f32 %v1032, %v1778
        %v1780 = vpop.f32.mrf.mxu0
        %1781 = vmatprep.mubr.f32.mxu0 0.0
        %v1782 = vand.u32 %v624, 4294901760
        %1783 = vmatmul.mubr.f32.gmra.mxu0 %v1782
        %v1784 = vpop.f32.mrf.mxu0
        %v1785 = vadd.f32 %v1042, %v1784
        %v1786 = vpop.f32.mrf.mxu0
        %1787 = vmatprep.mubr.f32.mxu0 0.0
        %v1788 = vand.u32 %v625, 4294901760
        %1789 = vmatmul.mubr.f32.gmra.mxu0 %v1788
        %v1790 = vpop.f32.mrf.mxu0
        %v1791 = vadd.f32 %v1052, %v1790
        %v1792 = vpop.f32.mrf.mxu0
        %1793 = vmatprep.mubr.f32.mxu0 0.0
        %v1794 = vand.u32 %v626, 4294901760
        %1795 = vmatmul.mubr.f32.gmra.mxu0 %v1794
        %v1796 = vpop.f32.mrf.mxu0
        %v1797 = vadd.f32 %v1062, %v1796
        %v1798 = vpop.f32.mrf.mxu0
        %1799 = vmatprep.mubr.f32.mxu0 0.0
        %v1800 = vand.u32 %v627, 4294901760
        %1801 = vmatmul.mubr.f32.gmra.mxu0 %v1800
        %v1802 = vpop.f32.mrf.mxu0
        %v1803 = vadd.f32 %v1072, %v1802
        %v1804 = vpop.f32.mrf.mxu0
        %1805 = vmatprep.mubr.f32.mxu0 0.0
        %v1806 = vand.u32 %v628, 4294901760
        %1807 = vmatmul.mubr.f32.gmra.mxu0 %v1806
        %v1808 = vpop.f32.mrf.mxu0
        %v1809 = vadd.f32 %v1082, %v1808
        %v1810 = vpop.f32.mrf.mxu0
        %1811 = vmatprep.mubr.f32.mxu0 0.0
        %v1812 = vand.u32 %v629, 4294901760
        %1813 = vmatmul.mubr.f32.gmra.mxu0 %v1812
        %v1814 = vpop.f32.mrf.mxu0
        %v1815 = vadd.f32 %v1092, %v1814
        %v1816 = vpop.f32.mrf.mxu0
        %1817 = vmatprep.mubr.f32.mxu0 0.0
        %v1818 = vand.u32 %v630, 4294901760
        %1819 = vmatmul.mubr.f32.gmra.mxu0 %v1818
        %v1820 = vpop.f32.mrf.mxu0
        %v1821 = vadd.f32 %v1102, %v1820
        %v1822 = vpop.f32.mrf.mxu0
        %1823 = vmatprep.mubr.f32.mxu0 0.0
        %v1824 = vand.u32 %v631, 4294901760
        %1825 = vmatmul.mubr.f32.gmra.mxu0 %v1824
        %v1826 = vpop.f32.mrf.mxu0
        %v1827 = vadd.f32 %v1112, %v1826
        %v1828 = vpop.f32.mrf.mxu0
        %1829 = vmatprep.mubr.f32.mxu0 0.0
        %v1830 = vand.u32 %v632, 4294901760
        %1831 = vmatmul.mubr.f32.gmra.mxu0 %v1830
        %v1832 = vpop.f32.mrf.mxu0
        %v1833 = vadd.f32 %v1122, %v1832
        %v1834 = vpop.f32.mrf.mxu0
        %1835 = vmatprep.mubr.f32.mxu0 0.0
        %v1836 = vand.u32 %v633, 4294901760
        %1837 = vmatmul.mubr.f32.gmra.mxu0 %v1836
        %v1838 = vpop.f32.mrf.mxu0
        %v1839 = vadd.f32 %v1132, %v1838
        %v1840 = vpop.f32.mrf.mxu0
        %1841 = vmatprep.mubr.f32.mxu0 0.0
        %v1842 = vand.u32 %v634, 4294901760
        %1843 = vmatmul.mubr.f32.gmra.mxu0 %v1842
        %v1844 = vpop.f32.mrf.mxu0
        %v1845 = vadd.f32 %v1142, %v1844
        %v1846 = vpop.f32.mrf.mxu0
        %1847 = vmatprep.mubr.f32.mxu0 0.0
        %v1848 = vand.u32 %v635, 4294901760
        %1849 = vmatmul.mubr.f32.gmra.mxu0 %v1848
        %v1850 = vpop.f32.mrf.mxu0
        %v1851 = vadd.f32 %v1152, %v1850
        %v1852 = vpop.f32.mrf.mxu0
        %1853 = vmatprep.mubr.f32.mxu0 0.0
        %v1854 = vand.u32 %v636, 4294901760
        %1855 = vmatmul.mubr.f32.gmra.mxu0 %v1854
        %v1856 = vpop.f32.mrf.mxu0
        %v1857 = vadd.f32 %v1162, %v1856
        %v1858 = vpop.f32.mrf.mxu0
        %1859 = vmatprep.mubr.f32.mxu0 0.0
        %v1860 = vand.u32 %v637, 4294901760
        %1861 = vmatmul.mubr.f32.gmra.mxu0 %v1860
        %v1862 = vpop.f32.mrf.mxu0
        %v1863 = vadd.f32 %v1172, %v1862
        %v1864 = vpop.f32.mrf.mxu0
        %1865 = vmatprep.mubr.f32.mxu0 0.0
        %v1866 = vand.u32 %v638, 4294901760
        %1867 = vmatmul.mubr.f32.gmra.mxu0 %v1866
        %v1868 = vpop.f32.mrf.mxu0
        %v1869 = vadd.f32 %v1182, %v1868
        %v1870 = vpop.f32.mrf.mxu0
        %1871 = vmatprep.mubr.f32.mxu0 0.0
        %v1872 = vand.u32 %v639, 4294901760
        %1873 = vmatmul.mubr.f32.gmra.mxu0 %v1872
        %v1874 = vpop.f32.mrf.mxu0
        %v1875 = vadd.f32 %v1192, %v1874
        %v1876 = vpop.f32.mrf.mxu0
        %1877 = vmatprep.mubr.f32.mxu0 0.0
        %v1878 = vand.u32 %v640, 4294901760
        %1879 = vmatmul.mubr.f32.gmra.mxu0 %v1878
        %v1880 = vpop.f32.mrf.mxu0
        %v1881 = vadd.f32 %v1202, %v1880
        %v1882 = vpop.f32.mrf.mxu0
        %1883 = vmatprep.mubr.f32.mxu0 0.0
        %v1884 = vand.u32 %v641, 4294901760
        %1885 = vmatmul.mubr.f32.gmra.mxu0 %v1884
        %v1886 = vpop.f32.mrf.mxu0
        %v1887 = vadd.f32 %v1212, %v1886
        %v1888 = vpop.f32.mrf.mxu0
        %1889 = vmatprep.mubr.f32.mxu0 0.0
        %v1890 = vand.u32 %v642, 4294901760
        %1891 = vmatmul.mubr.f32.gmra.mxu0 %v1890
        %v1892 = vpop.f32.mrf.mxu0
        %v1893 = vadd.f32 %v1222, %v1892
        %v1894 = vpop.f32.mrf.mxu0
        %1895 = vmatprep.mubr.f32.mxu0 0.0
        %v1896 = vand.u32 %v643, 4294901760
        %1897 = vmatmul.mubr.f32.gmra.mxu0 %v1896
        %v1898 = vpop.f32.mrf.mxu0
        %v1899 = vadd.f32 %v1232, %v1898
        %v1900 = vpop.f32.mrf.mxu0
        %1901 = vmatprep.mubr.f32.mxu0 0.0
        %v1902 = vand.u32 %v644, 4294901760
        %1903 = vmatmul.mubr.f32.gmra.mxu0 %v1902
        %v1904 = vpop.f32.mrf.mxu0
        %v1905 = vadd.f32 %v1242, %v1904
        %v1906 = vpop.f32.mrf.mxu0
        %1907 = vmatprep.mubr.f32.mxu0 0.0
        %v1908 = vand.u32 %v645, 4294901760
        %1909 = vmatmul.mubr.f32.gmra.mxu0 %v1908
        %v1910 = vpop.f32.mrf.mxu0
        %v1911 = vadd.f32 %v1252, %v1910
        %v1912 = vpop.f32.mrf.mxu0
        %1913 = vmatprep.mubr.f32.mxu0 0.0
        %v1914 = vand.u32 %v646, 4294901760
        %1915 = vmatmul.mubr.f32.gmra.mxu0 %v1914
        %v1916 = vpop.f32.mrf.mxu0
        %v1917 = vadd.f32 %v1262, %v1916
        %v1918 = vpop.f32.mrf.mxu0
        %1919 = vmatprep.mubr.f32.mxu0 0.0
        %v1920 = vand.u32 %v647, 4294901760
        %1921 = vmatmul.mubr.f32.gmra.mxu0 %v1920
        %v1922 = vpop.f32.mrf.mxu0
        %v1923 = vadd.f32 %v1272, %v1922
        %v1924 = vpop.f32.mrf.mxu0
        %1925 = vmatprep.mubr.f32.mxu0 0.0
        %v1926 = vand.u32 %v648, 4294901760
        %1927 = vmatmul.mubr.f32.gmra.mxu0 %v1926
        %v1928 = vpop.f32.mrf.mxu0
        %v1929 = vadd.f32 %v1282, %v1928
        %v1930 = vpop.f32.mrf.mxu0
        %1931 = vmatprep.mubr.f32.mxu0 0.0
        %v1932 = vand.u32 %v649, 4294901760
        %1933 = vmatmul.mubr.f32.gmra.mxu0 %v1932
        %v1934 = vpop.f32.mrf.mxu0
        %v1935 = vadd.f32 %v1292, %v1934
        %v1936 = vpop.f32.mrf.mxu0
        %1937 = vmatprep.mubr.f32.mxu0 0.0
        %v1938 = vand.u32 %v650, 4294901760
        %1939 = vmatmul.mubr.f32.gmra.mxu0 %v1938
        %v1940 = vpop.f32.mrf.mxu0
        %v1941 = vadd.f32 %v1302, %v1940
        %v1942 = vpop.f32.mrf.mxu0
        %1943 = vmatprep.mubr.f32.mxu0 0.0
        %v1944 = vand.u32 %v651, 4294901760
        %1945 = vmatmul.mubr.f32.gmra.mxu0 %v1944
        %v1946 = vpop.f32.mrf.mxu0
        %v1947 = vadd.f32 %v1312, %v1946
        %v1948 = vpop.f32.mrf.mxu0
        %1949 = vmatprep.mubr.f32.mxu0 0.0
        %v1950 = vand.u32 %v652, 4294901760
        %1951 = vmatmul.mubr.f32.gmra.mxu0 %v1950
        %v1952 = vpop.f32.mrf.mxu0
        %v1953 = vadd.f32 %v1322, %v1952
        %v1954 = vpop.f32.mrf.mxu0
        %1955 = vmatprep.mubr.f32.mxu0 0.0
        %v1956 = vand.u32 %v653, 4294901760
        %1957 = vmatmul.mubr.f32.gmra.mxu0 %v1956
        %v1958 = vpop.f32.mrf.mxu0
        %v1959 = vadd.f32 %v1332, %v1958
        %v1960 = vpop.f32.mrf.mxu0
        %1961 = vmatprep.mubr.f32.mxu0 0.0
        %v1962 = vand.u32 %v654, 4294901760
        %1963 = vmatmul.mubr.f32.gmra.mxu0 %v1962
        %v1964 = vpop.f32.mrf.mxu0
        %v1965 = vadd.f32 %v1342, %v1964
        %v1966 = vpop.f32.mrf.mxu0
        %1967 = vmatprep.mubr.f32.mxu0 0.0
        %v1968 = vand.u32 %v655, 4294901760
        %1969 = vmatmul.mubr.f32.gmra.mxu0 %v1968
        %v1970 = vpop.f32.mrf.mxu0
        %v1971 = vadd.f32 %v1352, %v1970
        %v1972 = vpop.f32.mrf.mxu0
        %1973 = vmatprep.mubr.f32.mxu0 0.0
        %v1974 = vand.u32 %v656, 4294901760
        %1975 = vmatmul.mubr.f32.gmra.mxu0 %v1974
        %v1976 = vpop.f32.mrf.mxu0
        %v1977 = vadd.f32 %v1362, %v1976
        %v1978 = vpop.f32.mrf.mxu0
        %1979 = vmatprep.mubr.f32.mxu0 0.0
        %v1980 = vand.u32 %v657, 4294901760
        %1981 = vmatmul.mubr.f32.gmra.mxu0 %v1980
        %v1982 = vpop.f32.mrf.mxu0
        %v1983 = vadd.f32 %v1372, %v1982
        %v1984 = vpop.f32.mrf.mxu0
        %1985 = vmatprep.mubr.f32.mxu0 0.0
        %v1986 = vand.u32 %v658, 4294901760
        %1987 = vmatmul.mubr.f32.gmra.mxu0 %v1986
        %v1988 = vpop.f32.mrf.mxu0
        %v1989 = vadd.f32 %v1382, %v1988
        %v1990 = vpop.f32.mrf.mxu0
        %1991 = vmatprep.mubr.f32.mxu0 0.0
        %v1992 = vand.u32 %v659, 4294901760
        %1993 = vmatmul.mubr.f32.gmra.mxu0 %v1992
        %v1994 = vpop.f32.mrf.mxu0
        %v1995 = vadd.f32 %v1392, %v1994
        %v1996 = vpop.f32.mrf.mxu0
        %1997 = vmatprep.mubr.f32.mxu0 0.0
        %v1998 = vand.u32 %v660, 4294901760
        %1999 = vmatmul.mubr.f32.gmra.mxu0 %v1998
        %v2000 = vpop.f32.mrf.mxu0
        %v2001 = vadd.f32 %v1402, %v2000
        %v2002 = vpop.f32.mrf.mxu0
        %2003 = vmatprep.mubr.f32.mxu0 0.0
        %v2004 = vand.u32 %v661, 4294901760
        %2005 = vmatmul.mubr.f32.gmra.mxu0 %v2004
        %v2006 = vpop.f32.mrf.mxu0
        %v2007 = vadd.f32 %v1412, %v2006
        %v2008 = vpop.f32.mrf.mxu0
        %2009 = vmatprep.mubr.f32.mxu0 0.0
        %v2010 = vand.u32 %v662, 4294901760
        %2011 = vmatmul.mubr.f32.gmra.mxu0 %v2010
        %v2012 = vpop.f32.mrf.mxu0
        %v2013 = vadd.f32 %v1422, %v2012
        %v2014 = vpop.f32.mrf.mxu0
        %2015 = vmatprep.mubr.f32.mxu0 0.0
        %v2016 = vand.u32 %v663, 4294901760
        %2017 = vmatmul.mubr.f32.gmra.mxu0 %v2016
        %v2018 = vpop.f32.mrf.mxu0
        %v2019 = vadd.f32 %v1432, %v2018
        %v2020 = vpop.f32.mrf.mxu0
        %2021 = vmatprep.mubr.f32.mxu0 0.0
        %v2022 = vand.u32 %v664, 4294901760
        %2023 = vmatmul.mubr.f32.gmra.mxu0 %v2022
        %v2024 = vpop.f32.mrf.mxu0
        %v2025 = vadd.f32 %v1442, %v2024
        %v2026 = vpop.f32.mrf.mxu0
        %2027 = vmatprep.mubr.f32.mxu0 0.0
        %v2028 = vand.u32 %v665, 4294901760
        %2029 = vmatmul.mubr.f32.gmra.mxu0 %v2028
        %v2030 = vpop.f32.mrf.mxu0
        %v2031 = vadd.f32 %v1452, %v2030
        %v2032 = vpop.f32.mrf.mxu0
        %2033 = vmatprep.mubr.f32.mxu0 0.0
        %v2034 = vand.u32 %v666, 4294901760
        %2035 = vmatmul.mubr.f32.gmra.mxu0 %v2034
        %v2036 = vpop.f32.mrf.mxu0
        %v2037 = vadd.f32 %v1462, %v2036
        %v2038 = vpop.f32.mrf.mxu0
        %2039 = vmatprep.mubr.f32.mxu0 0.0
        %v2040 = vand.u32 %v667, 4294901760
        %2041 = vmatmul.mubr.f32.gmra.mxu0 %v2040
        %v2042 = vpop.f32.mrf.mxu0
        %v2043 = vadd.f32 %v1472, %v2042
        %v2044 = vpop.f32.mrf.mxu0
        %2045 = vdwg.mxu0
        %2046 = vmatprep.subr.mxu0 0.0
        %v2047 = vand.u32 %v683, 4294901760
        %v2048 = vsub.f32 %v683, %v2047
        %2049 = vmatpush1.msra.mxu0 %v2048
        %2050 = vmatprep.subr.mxu0 0.0
        %v2051 = vand.u32 %v682, 4294901760
        %v2052 = vsub.f32 %v682, %v2051
        %2053 = vmatpush1.msra.mxu0 %v2052
        %2054 = vmatprep.subr.mxu0 0.0
        %v2055 = vand.u32 %v681, 4294901760
        %v2056 = vsub.f32 %v681, %v2055
        %2057 = vmatpush1.msra.mxu0 %v2056
        %2058 = vmatprep.subr.mxu0 0.0
        %v2059 = vand.u32 %v680, 4294901760
        %v2060 = vsub.f32 %v680, %v2059
        %2061 = vmatpush1.msra.mxu0 %v2060
        %2062 = vmatprep.subr.mxu0 0.0
        %v2063 = vand.u32 %v679, 4294901760
        %v2064 = vsub.f32 %v679, %v2063
        %2065 = vmatpush1.msra.mxu0 %v2064
        %2066 = vmatprep.subr.mxu0 0.0
        %v2067 = vand.u32 %v678, 4294901760
        %v2068 = vsub.f32 %v678, %v2067
        %2069 = vmatpush1.msra.mxu0 %v2068
        %2070 = vmatprep.subr.mxu0 0.0
        %v2071 = vand.u32 %v677, 4294901760
        %v2072 = vsub.f32 %v677, %v2071
        %2073 = vmatpush1.msra.mxu0 %v2072
        %2074 = vmatprep.subr.mxu0 0.0
        %v2075 = vand.u32 %v676, 4294901760
        %v2076 = vsub.f32 %v676, %v2075
        %2077 = vmatpush1.msra.mxu0 %v2076
        %2078 = vmatprep.subr.mxu0 0.0
        %v2079 = vand.u32 %v675, 4294901760
        %v2080 = vsub.f32 %v675, %v2079
        %2081 = vmatpush1.msra.mxu0 %v2080
        %2082 = vmatprep.subr.mxu0 0.0
        %v2083 = vand.u32 %v674, 4294901760
        %v2084 = vsub.f32 %v674, %v2083
        %2085 = vmatpush1.msra.mxu0 %v2084
        %2086 = vmatprep.subr.mxu0 0.0
        %v2087 = vand.u32 %v673, 4294901760
        %v2088 = vsub.f32 %v673, %v2087
        %2089 = vmatpush1.msra.mxu0 %v2088
        %2090 = vmatprep.subr.mxu0 0.0
        %v2091 = vand.u32 %v672, 4294901760
        %v2092 = vsub.f32 %v672, %v2091
        %2093 = vmatpush1.msra.mxu0 %v2092
        %2094 = vmatprep.subr.mxu0 0.0
        %v2095 = vand.u32 %v671, 4294901760
        %v2096 = vsub.f32 %v671, %v2095
        %2097 = vmatpush1.msra.mxu0 %v2096
        %2098 = vmatprep.subr.mxu0 0.0
        %v2099 = vand.u32 %v670, 4294901760
        %v2100 = vsub.f32 %v670, %v2099
        %2101 = vmatpush1.msra.mxu0 %v2100
        %2102 = vmatprep.subr.mxu0 0.0
        %v2103 = vand.u32 %v669, 4294901760
        %v2104 = vsub.f32 %v669, %v2103
        %2105 = vmatpush1.msra.mxu0 %v2104
        %2106 = vmatprep.subr.mxu0 0.0
        %v2107 = vand.u32 %v668, 4294901760
        %v2108 = vsub.f32 %v668, %v2107
        %2109 = vmatpush1.msra.mxu0 %v2108
        %2110 = vmatprep.subr.mxu0 0.0
        %2111 = vmatpush2.msra.mxu0 0.0
        %2112 = vmatprep.subr.mxu0 0.0
        %2113 = vmatpush2.msra.mxu0 0.0
        %2114 = vmatprep.subr.mxu0 0.0
        %2115 = vmatpush2.msra.mxu0 0.0
        %2116 = vmatprep.subr.mxu0 0.0
        %2117 = vmatpush2.msra.mxu0 0.0
        %2118 = vmatprep.subr.mxu0 0.0
        %2119 = vmatpush2.msra.mxu0 0.0
        %2120 = vmatprep.subr.mxu0 0.0
        %2121 = vmatpush2.msra.mxu0 0.0
        %2122 = vmatprep.subr.mxu0 0.0
        %2123 = vmatpush2.msra.mxu0 0.0
        %2124 = vmatprep.subr.mxu0 0.0
        %2125 = vmatpush2.msra.mxu0 0.0
        %2126 = vmatprep.subr.mxu0 0.0
        %2127 = vmatpush2.msra.mxu0 0.0
        %2128 = vmatprep.subr.mxu0 0.0
        %2129 = vmatpush2.msra.mxu0 0.0
        %2130 = vmatprep.subr.mxu0 0.0
        %2131 = vmatpush2.msra.mxu0 0.0
        %2132 = vmatprep.subr.mxu0 0.0
        %2133 = vmatpush2.msra.mxu0 0.0
        %2134 = vmatprep.subr.mxu0 0.0
        %2135 = vmatpush2.msra.mxu0 0.0
        %2136 = vmatprep.subr.mxu0 0.0
        %2137 = vmatpush2.msra.mxu0 0.0
        %2138 = vmatprep.subr.mxu0 0.0
        %2139 = vmatpush2.msra.mxu0 0.0
        %2140 = vmatprep.subr.mxu0 0.0
        %2141 = vmatpush2.msra.mxu0 0.0
        %2142 = vmatprep.mubr.f32.mxu0 0.0
        %v2143 = vand.u32 %v597, 4294901760
        %v2144 = vsub.f32 %v597, %v2143
        %2145 = vmatmul.mubr.f32.gmra.mxu0 %v2144
        %v2146 = vpop.f32.mrf.mxu0
        %v2147 = vadd.f32 %v1623, %v2146
        %v2148 = vpop.f32.mrf.mxu0
        %2149 = vmatprep.mubr.f32.mxu0 0.0
        %v2150 = vand.u32 %v598, 4294901760
        %v2151 = vsub.f32 %v598, %v2150
        %2152 = vmatmul.mubr.f32.gmra.mxu0 %v2151
        %v2153 = vpop.f32.mrf.mxu0
        %v2154 = vadd.f32 %v1629, %v2153
        %v2155 = vpop.f32.mrf.mxu0
        %2156 = vmatprep.mubr.f32.mxu0 0.0
        %v2157 = vand.u32 %v599, 4294901760
        %v2158 = vsub.f32 %v599, %v2157
        %2159 = vmatmul.mubr.f32.gmra.mxu0 %v2158
        %v2160 = vpop.f32.mrf.mxu0
        %v2161 = vadd.f32 %v1635, %v2160
        %v2162 = vpop.f32.mrf.mxu0
        %2163 = vmatprep.mubr.f32.mxu0 0.0
        %v2164 = vand.u32 %v600, 4294901760
        %v2165 = vsub.f32 %v600, %v2164
        %2166 = vmatmul.mubr.f32.gmra.mxu0 %v2165
        %v2167 = vpop.f32.mrf.mxu0
        %v2168 = vadd.f32 %v1641, %v2167
        %v2169 = vpop.f32.mrf.mxu0
        %2170 = vmatprep.mubr.f32.mxu0 0.0
        %v2171 = vand.u32 %v601, 4294901760
        %v2172 = vsub.f32 %v601, %v2171
        %2173 = vmatmul.mubr.f32.gmra.mxu0 %v2172
        %v2174 = vpop.f32.mrf.mxu0
        %v2175 = vadd.f32 %v1647, %v2174
        %v2176 = vpop.f32.mrf.mxu0
        %2177 = vmatprep.mubr.f32.mxu0 0.0
        %v2178 = vand.u32 %v602, 4294901760
        %v2179 = vsub.f32 %v602, %v2178
        %2180 = vmatmul.mubr.f32.gmra.mxu0 %v2179
        %v2181 = vpop.f32.mrf.mxu0
        %v2182 = vadd.f32 %v1653, %v2181
        %v2183 = vpop.f32.mrf.mxu0
        %2184 = vmatprep.mubr.f32.mxu0 0.0
        %v2185 = vand.u32 %v603, 4294901760
        %v2186 = vsub.f32 %v603, %v2185
        %2187 = vmatmul.mubr.f32.gmra.mxu0 %v2186
        %v2188 = vpop.f32.mrf.mxu0
        %v2189 = vadd.f32 %v1659, %v2188
        %v2190 = vpop.f32.mrf.mxu0
        %2191 = vmatprep.mubr.f32.mxu0 0.0
        %v2192 = vand.u32 %v604, 4294901760
        %v2193 = vsub.f32 %v604, %v2192
        %2194 = vmatmul.mubr.f32.gmra.mxu0 %v2193
        %v2195 = vpop.f32.mrf.mxu0
        %v2196 = vadd.f32 %v1665, %v2195
        %v2197 = vpop.f32.mrf.mxu0
        %2198 = vmatprep.mubr.f32.mxu0 0.0
        %v2199 = vand.u32 %v605, 4294901760
        %v2200 = vsub.f32 %v605, %v2199
        %2201 = vmatmul.mubr.f32.gmra.mxu0 %v2200
        %v2202 = vpop.f32.mrf.mxu0
        %v2203 = vadd.f32 %v1671, %v2202
        %v2204 = vpop.f32.mrf.mxu0
        %2205 = vmatprep.mubr.f32.mxu0 0.0
        %v2206 = vand.u32 %v606, 4294901760
        %v2207 = vsub.f32 %v606, %v2206
        %2208 = vmatmul.mubr.f32.gmra.mxu0 %v2207
        %v2209 = vpop.f32.mrf.mxu0
        %v2210 = vadd.f32 %v1677, %v2209
        %v2211 = vpop.f32.mrf.mxu0
        %2212 = vmatprep.mubr.f32.mxu0 0.0
        %v2213 = vand.u32 %v607, 4294901760
        %v2214 = vsub.f32 %v607, %v2213
        %2215 = vmatmul.mubr.f32.gmra.mxu0 %v2214
        %v2216 = vpop.f32.mrf.mxu0
        %v2217 = vadd.f32 %v1683, %v2216
        %v2218 = vpop.f32.mrf.mxu0
        %2219 = vmatprep.mubr.f32.mxu0 0.0
        %v2220 = vand.u32 %v608, 4294901760
        %v2221 = vsub.f32 %v608, %v2220
        %2222 = vmatmul.mubr.f32.gmra.mxu0 %v2221
        %v2223 = vpop.f32.mrf.mxu0
        %v2224 = vadd.f32 %v1689, %v2223
        %v2225 = vpop.f32.mrf.mxu0
        %2226 = vmatprep.mubr.f32.mxu0 0.0
        %v2227 = vand.u32 %v609, 4294901760
        %v2228 = vsub.f32 %v609, %v2227
        %2229 = vmatmul.mubr.f32.gmra.mxu0 %v2228
        %v2230 = vpop.f32.mrf.mxu0
        %v2231 = vadd.f32 %v1695, %v2230
        %v2232 = vpop.f32.mrf.mxu0
        %2233 = vmatprep.mubr.f32.mxu0 0.0
        %v2234 = vand.u32 %v610, 4294901760
        %v2235 = vsub.f32 %v610, %v2234
        %2236 = vmatmul.mubr.f32.gmra.mxu0 %v2235
        %v2237 = vpop.f32.mrf.mxu0
        %v2238 = vadd.f32 %v1701, %v2237
        %v2239 = vpop.f32.mrf.mxu0
        %2240 = vmatprep.mubr.f32.mxu0 0.0
        %v2241 = vand.u32 %v611, 4294901760
        %v2242 = vsub.f32 %v611, %v2241
        %2243 = vmatmul.mubr.f32.gmra.mxu0 %v2242
        %v2244 = vpop.f32.mrf.mxu0
        %v2245 = vadd.f32 %v1707, %v2244
        %v2246 = vpop.f32.mrf.mxu0
        %2247 = vmatprep.mubr.f32.mxu0 0.0
        %v2248 = vand.u32 %v612, 4294901760
        %v2249 = vsub.f32 %v612, %v2248
        %2250 = vmatmul.mubr.f32.gmra.mxu0 %v2249
        %v2251 = vpop.f32.mrf.mxu0
        %v2252 = vadd.f32 %v1713, %v2251
        %v2253 = vpop.f32.mrf.mxu0
        %2254 = vmatprep.mubr.f32.mxu0 0.0
        %v2255 = vand.u32 %v613, 4294901760
        %v2256 = vsub.f32 %v613, %v2255
        %2257 = vmatmul.mubr.f32.gmra.mxu0 %v2256
        %v2258 = vpop.f32.mrf.mxu0
        %v2259 = vadd.f32 %v1719, %v2258
        %v2260 = vpop.f32.mrf.mxu0
        %2261 = vmatprep.mubr.f32.mxu0 0.0
        %v2262 = vand.u32 %v614, 4294901760
        %v2263 = vsub.f32 %v614, %v2262
        %2264 = vmatmul.mubr.f32.gmra.mxu0 %v2263
        %v2265 = vpop.f32.mrf.mxu0
        %v2266 = vadd.f32 %v1725, %v2265
        %v2267 = vpop.f32.mrf.mxu0
        %2268 = vmatprep.mubr.f32.mxu0 0.0
        %v2269 = vand.u32 %v615, 4294901760
        %v2270 = vsub.f32 %v615, %v2269
        %2271 = vmatmul.mubr.f32.gmra.mxu0 %v2270
        %v2272 = vpop.f32.mrf.mxu0
        %v2273 = vadd.f32 %v1731, %v2272
        %v2274 = vpop.f32.mrf.mxu0
        %2275 = vmatprep.mubr.f32.mxu0 0.0
        %v2276 = vand.u32 %v616, 4294901760
        %v2277 = vsub.f32 %v616, %v2276
        %2278 = vmatmul.mubr.f32.gmra.mxu0 %v2277
        %v2279 = vpop.f32.mrf.mxu0
        %v2280 = vadd.f32 %v1737, %v2279
        %v2281 = vpop.f32.mrf.mxu0
        %2282 = vmatprep.mubr.f32.mxu0 0.0
        %v2283 = vand.u32 %v617, 4294901760
        %v2284 = vsub.f32 %v617, %v2283
        %2285 = vmatmul.mubr.f32.gmra.mxu0 %v2284
        %v2286 = vpop.f32.mrf.mxu0
        %v2287 = vadd.f32 %v1743, %v2286
        %v2288 = vpop.f32.mrf.mxu0
        %2289 = vmatprep.mubr.f32.mxu0 0.0
        %v2290 = vand.u32 %v618, 4294901760
        %v2291 = vsub.f32 %v618, %v2290
        %2292 = vmatmul.mubr.f32.gmra.mxu0 %v2291
        %v2293 = vpop.f32.mrf.mxu0
        %v2294 = vadd.f32 %v1749, %v2293
        %v2295 = vpop.f32.mrf.mxu0
        %2296 = vmatprep.mubr.f32.mxu0 0.0
        %v2297 = vand.u32 %v619, 4294901760
        %v2298 = vsub.f32 %v619, %v2297
        %2299 = vmatmul.mubr.f32.gmra.mxu0 %v2298
        %v2300 = vpop.f32.mrf.mxu0
        %v2301 = vadd.f32 %v1755, %v2300
        %v2302 = vpop.f32.mrf.mxu0
        %2303 = vmatprep.mubr.f32.mxu0 0.0
        %v2304 = vand.u32 %v620, 4294901760
        %v2305 = vsub.f32 %v620, %v2304
        %2306 = vmatmul.mubr.f32.gmra.mxu0 %v2305
        %v2307 = vpop.f32.mrf.mxu0
        %v2308 = vadd.f32 %v1761, %v2307
        %v2309 = vpop.f32.mrf.mxu0
        %2310 = vmatprep.mubr.f32.mxu0 0.0
        %v2311 = vand.u32 %v621, 4294901760
        %v2312 = vsub.f32 %v621, %v2311
        %2313 = vmatmul.mubr.f32.gmra.mxu0 %v2312
        %v2314 = vpop.f32.mrf.mxu0
        %v2315 = vadd.f32 %v1767, %v2314
        %v2316 = vpop.f32.mrf.mxu0
        %2317 = vmatprep.mubr.f32.mxu0 0.0
        %v2318 = vand.u32 %v622, 4294901760
        %v2319 = vsub.f32 %v622, %v2318
        %2320 = vmatmul.mubr.f32.gmra.mxu0 %v2319
        %v2321 = vpop.f32.mrf.mxu0
        %v2322 = vadd.f32 %v1773, %v2321
        %v2323 = vpop.f32.mrf.mxu0
        %2324 = vmatprep.mubr.f32.mxu0 0.0
        %v2325 = vand.u32 %v623, 4294901760
        %v2326 = vsub.f32 %v623, %v2325
        %2327 = vmatmul.mubr.f32.gmra.mxu0 %v2326
        %v2328 = vpop.f32.mrf.mxu0
        %v2329 = vadd.f32 %v1779, %v2328
        %v2330 = vpop.f32.mrf.mxu0
        %2331 = vmatprep.mubr.f32.mxu0 0.0
        %v2332 = vand.u32 %v624, 4294901760
        %v2333 = vsub.f32 %v624, %v2332
        %2334 = vmatmul.mubr.f32.gmra.mxu0 %v2333
        %v2335 = vpop.f32.mrf.mxu0
        %v2336 = vadd.f32 %v1785, %v2335
        %v2337 = vpop.f32.mrf.mxu0
        %2338 = vmatprep.mubr.f32.mxu0 0.0
        %v2339 = vand.u32 %v625, 4294901760
        %v2340 = vsub.f32 %v625, %v2339
        %2341 = vmatmul.mubr.f32.gmra.mxu0 %v2340
        %v2342 = vpop.f32.mrf.mxu0
        %v2343 = vadd.f32 %v1791, %v2342
        %v2344 = vpop.f32.mrf.mxu0
        %2345 = vmatprep.mubr.f32.mxu0 0.0
        %v2346 = vand.u32 %v626, 4294901760
        %v2347 = vsub.f32 %v626, %v2346
        %2348 = vmatmul.mubr.f32.gmra.mxu0 %v2347
        %v2349 = vpop.f32.mrf.mxu0
        %v2350 = vadd.f32 %v1797, %v2349
        %v2351 = vpop.f32.mrf.mxu0
        %2352 = vmatprep.mubr.f32.mxu0 0.0
        %v2353 = vand.u32 %v627, 4294901760
        %v2354 = vsub.f32 %v627, %v2353
        %2355 = vmatmul.mubr.f32.gmra.mxu0 %v2354
        %v2356 = vpop.f32.mrf.mxu0
        %v2357 = vadd.f32 %v1803, %v2356
        %v2358 = vpop.f32.mrf.mxu0
        %2359 = vmatprep.mubr.f32.mxu0 0.0
        %v2360 = vand.u32 %v628, 4294901760
        %v2361 = vsub.f32 %v628, %v2360
        %2362 = vmatmul.mubr.f32.gmra.mxu0 %v2361
        %v2363 = vpop.f32.mrf.mxu0
        %v2364 = vadd.f32 %v1809, %v2363
        %v2365 = vpop.f32.mrf.mxu0
        %2366 = vmatprep.mubr.f32.mxu0 0.0
        %v2367 = vand.u32 %v629, 4294901760
        %v2368 = vsub.f32 %v629, %v2367
        %2369 = vmatmul.mubr.f32.gmra.mxu0 %v2368
        %v2370 = vpop.f32.mrf.mxu0
        %v2371 = vadd.f32 %v1815, %v2370
        %v2372 = vpop.f32.mrf.mxu0
        %2373 = vmatprep.mubr.f32.mxu0 0.0
        %v2374 = vand.u32 %v630, 4294901760
        %v2375 = vsub.f32 %v630, %v2374
        %2376 = vmatmul.mubr.f32.gmra.mxu0 %v2375
        %v2377 = vpop.f32.mrf.mxu0
        %v2378 = vadd.f32 %v1821, %v2377
        %v2379 = vpop.f32.mrf.mxu0
        %2380 = vmatprep.mubr.f32.mxu0 0.0
        %v2381 = vand.u32 %v631, 4294901760
        %v2382 = vsub.f32 %v631, %v2381
        %2383 = vmatmul.mubr.f32.gmra.mxu0 %v2382
        %v2384 = vpop.f32.mrf.mxu0
        %v2385 = vadd.f32 %v1827, %v2384
        %v2386 = vpop.f32.mrf.mxu0
        %2387 = vmatprep.mubr.f32.mxu0 0.0
        %v2388 = vand.u32 %v632, 4294901760
        %v2389 = vsub.f32 %v632, %v2388
        %2390 = vmatmul.mubr.f32.gmra.mxu0 %v2389
        %v2391 = vpop.f32.mrf.mxu0
        %v2392 = vadd.f32 %v1833, %v2391
        %v2393 = vpop.f32.mrf.mxu0
        %2394 = vmatprep.mubr.f32.mxu0 0.0
        %v2395 = vand.u32 %v633, 4294901760
        %v2396 = vsub.f32 %v633, %v2395
        %2397 = vmatmul.mubr.f32.gmra.mxu0 %v2396
        %v2398 = vpop.f32.mrf.mxu0
        %v2399 = vadd.f32 %v1839, %v2398
        %v2400 = vpop.f32.mrf.mxu0
        %2401 = vmatprep.mubr.f32.mxu0 0.0
        %v2402 = vand.u32 %v634, 4294901760
        %v2403 = vsub.f32 %v634, %v2402
        %2404 = vmatmul.mubr.f32.gmra.mxu0 %v2403
        %v2405 = vpop.f32.mrf.mxu0
        %v2406 = vadd.f32 %v1845, %v2405
        %v2407 = vpop.f32.mrf.mxu0
        %2408 = vmatprep.mubr.f32.mxu0 0.0
        %v2409 = vand.u32 %v635, 4294901760
        %v2410 = vsub.f32 %v635, %v2409
        %2411 = vmatmul.mubr.f32.gmra.mxu0 %v2410
        %v2412 = vpop.f32.mrf.mxu0
        %v2413 = vadd.f32 %v1851, %v2412
        %v2414 = vpop.f32.mrf.mxu0
        %2415 = vmatprep.mubr.f32.mxu0 0.0
        %v2416 = vand.u32 %v636, 4294901760
        %v2417 = vsub.f32 %v636, %v2416
        %2418 = vmatmul.mubr.f32.gmra.mxu0 %v2417
        %v2419 = vpop.f32.mrf.mxu0
        %v2420 = vadd.f32 %v1857, %v2419
        %v2421 = vpop.f32.mrf.mxu0
        %2422 = vmatprep.mubr.f32.mxu0 0.0
        %v2423 = vand.u32 %v637, 4294901760
        %v2424 = vsub.f32 %v637, %v2423
        %2425 = vmatmul.mubr.f32.gmra.mxu0 %v2424
        %v2426 = vpop.f32.mrf.mxu0
        %v2427 = vadd.f32 %v1863, %v2426
        %v2428 = vpop.f32.mrf.mxu0
        %2429 = vmatprep.mubr.f32.mxu0 0.0
        %v2430 = vand.u32 %v638, 4294901760
        %v2431 = vsub.f32 %v638, %v2430
        %2432 = vmatmul.mubr.f32.gmra.mxu0 %v2431
        %v2433 = vpop.f32.mrf.mxu0
        %v2434 = vadd.f32 %v1869, %v2433
        %v2435 = vpop.f32.mrf.mxu0
        %2436 = vmatprep.mubr.f32.mxu0 0.0
        %v2437 = vand.u32 %v639, 4294901760
        %v2438 = vsub.f32 %v639, %v2437
        %2439 = vmatmul.mubr.f32.gmra.mxu0 %v2438
        %v2440 = vpop.f32.mrf.mxu0
        %v2441 = vadd.f32 %v1875, %v2440
        %v2442 = vpop.f32.mrf.mxu0
        %2443 = vmatprep.mubr.f32.mxu0 0.0
        %v2444 = vand.u32 %v640, 4294901760
        %v2445 = vsub.f32 %v640, %v2444
        %2446 = vmatmul.mubr.f32.gmra.mxu0 %v2445
        %v2447 = vpop.f32.mrf.mxu0
        %v2448 = vadd.f32 %v1881, %v2447
        %v2449 = vpop.f32.mrf.mxu0
        %2450 = vmatprep.mubr.f32.mxu0 0.0
        %v2451 = vand.u32 %v641, 4294901760
        %v2452 = vsub.f32 %v641, %v2451
        %2453 = vmatmul.mubr.f32.gmra.mxu0 %v2452
        %v2454 = vpop.f32.mrf.mxu0
        %v2455 = vadd.f32 %v1887, %v2454
        %v2456 = vpop.f32.mrf.mxu0
        %2457 = vmatprep.mubr.f32.mxu0 0.0
        %v2458 = vand.u32 %v642, 4294901760
        %v2459 = vsub.f32 %v642, %v2458
        %2460 = vmatmul.mubr.f32.gmra.mxu0 %v2459
        %v2461 = vpop.f32.mrf.mxu0
        %v2462 = vadd.f32 %v1893, %v2461
        %v2463 = vpop.f32.mrf.mxu0
        %2464 = vmatprep.mubr.f32.mxu0 0.0
        %v2465 = vand.u32 %v643, 4294901760
        %v2466 = vsub.f32 %v643, %v2465
        %2467 = vmatmul.mubr.f32.gmra.mxu0 %v2466
        %v2468 = vpop.f32.mrf.mxu0
        %v2469 = vadd.f32 %v1899, %v2468
        %v2470 = vpop.f32.mrf.mxu0
        %2471 = vmatprep.mubr.f32.mxu0 0.0
        %v2472 = vand.u32 %v644, 4294901760
        %v2473 = vsub.f32 %v644, %v2472
        %2474 = vmatmul.mubr.f32.gmra.mxu0 %v2473
        %v2475 = vpop.f32.mrf.mxu0
        %v2476 = vadd.f32 %v1905, %v2475
        %v2477 = vpop.f32.mrf.mxu0
        %2478 = vmatprep.mubr.f32.mxu0 0.0
        %v2479 = vand.u32 %v645, 4294901760
        %v2480 = vsub.f32 %v645, %v2479
        %2481 = vmatmul.mubr.f32.gmra.mxu0 %v2480
        %v2482 = vpop.f32.mrf.mxu0
        %v2483 = vadd.f32 %v1911, %v2482
        %v2484 = vpop.f32.mrf.mxu0
        %2485 = vmatprep.mubr.f32.mxu0 0.0
        %v2486 = vand.u32 %v646, 4294901760
        %v2487 = vsub.f32 %v646, %v2486
        %2488 = vmatmul.mubr.f32.gmra.mxu0 %v2487
        %v2489 = vpop.f32.mrf.mxu0
        %v2490 = vadd.f32 %v1917, %v2489
        %v2491 = vpop.f32.mrf.mxu0
        %2492 = vmatprep.mubr.f32.mxu0 0.0
        %v2493 = vand.u32 %v647, 4294901760
        %v2494 = vsub.f32 %v647, %v2493
        %2495 = vmatmul.mubr.f32.gmra.mxu0 %v2494
        %v2496 = vpop.f32.mrf.mxu0
        %v2497 = vadd.f32 %v1923, %v2496
        %v2498 = vpop.f32.mrf.mxu0
        %2499 = vmatprep.mubr.f32.mxu0 0.0
        %v2500 = vand.u32 %v648, 4294901760
        %v2501 = vsub.f32 %v648, %v2500
        %2502 = vmatmul.mubr.f32.gmra.mxu0 %v2501
        %v2503 = vpop.f32.mrf.mxu0
        %v2504 = vadd.f32 %v1929, %v2503
        %v2505 = vpop.f32.mrf.mxu0
        %2506 = vmatprep.mubr.f32.mxu0 0.0
        %v2507 = vand.u32 %v649, 4294901760
        %v2508 = vsub.f32 %v649, %v2507
        %2509 = vmatmul.mubr.f32.gmra.mxu0 %v2508
        %v2510 = vpop.f32.mrf.mxu0
        %v2511 = vadd.f32 %v1935, %v2510
        %v2512 = vpop.f32.mrf.mxu0
        %2513 = vmatprep.mubr.f32.mxu0 0.0
        %v2514 = vand.u32 %v650, 4294901760
        %v2515 = vsub.f32 %v650, %v2514
        %2516 = vmatmul.mubr.f32.gmra.mxu0 %v2515
        %v2517 = vpop.f32.mrf.mxu0
        %v2518 = vadd.f32 %v1941, %v2517
        %v2519 = vpop.f32.mrf.mxu0
        %2520 = vmatprep.mubr.f32.mxu0 0.0
        %v2521 = vand.u32 %v651, 4294901760
        %v2522 = vsub.f32 %v651, %v2521
        %2523 = vmatmul.mubr.f32.gmra.mxu0 %v2522
        %v2524 = vpop.f32.mrf.mxu0
        %v2525 = vadd.f32 %v1947, %v2524
        %v2526 = vpop.f32.mrf.mxu0
        %2527 = vmatprep.mubr.f32.mxu0 0.0
        %v2528 = vand.u32 %v652, 4294901760
        %v2529 = vsub.f32 %v652, %v2528
        %2530 = vmatmul.mubr.f32.gmra.mxu0 %v2529
        %v2531 = vpop.f32.mrf.mxu0
        %v2532 = vadd.f32 %v1953, %v2531
        %v2533 = vpop.f32.mrf.mxu0
        %2534 = vmatprep.mubr.f32.mxu0 0.0
        %v2535 = vand.u32 %v653, 4294901760
        %v2536 = vsub.f32 %v653, %v2535
        %2537 = vmatmul.mubr.f32.gmra.mxu0 %v2536
        %v2538 = vpop.f32.mrf.mxu0
        %v2539 = vadd.f32 %v1959, %v2538
        %v2540 = vpop.f32.mrf.mxu0
        %2541 = vmatprep.mubr.f32.mxu0 0.0
        %v2542 = vand.u32 %v654, 4294901760
        %v2543 = vsub.f32 %v654, %v2542
        %2544 = vmatmul.mubr.f32.gmra.mxu0 %v2543
        %v2545 = vpop.f32.mrf.mxu0
        %v2546 = vadd.f32 %v1965, %v2545
        %v2547 = vpop.f32.mrf.mxu0
        %2548 = vmatprep.mubr.f32.mxu0 0.0
        %v2549 = vand.u32 %v655, 4294901760
        %v2550 = vsub.f32 %v655, %v2549
        %2551 = vmatmul.mubr.f32.gmra.mxu0 %v2550
        %v2552 = vpop.f32.mrf.mxu0
        %v2553 = vadd.f32 %v1971, %v2552
        %v2554 = vpop.f32.mrf.mxu0
        %2555 = vmatprep.mubr.f32.mxu0 0.0
        %v2556 = vand.u32 %v656, 4294901760
        %v2557 = vsub.f32 %v656, %v2556
        %2558 = vmatmul.mubr.f32.gmra.mxu0 %v2557
        %v2559 = vpop.f32.mrf.mxu0
        %v2560 = vadd.f32 %v1977, %v2559
        %v2561 = vpop.f32.mrf.mxu0
        %2562 = vmatprep.mubr.f32.mxu0 0.0
        %v2563 = vand.u32 %v657, 4294901760
        %v2564 = vsub.f32 %v657, %v2563
        %2565 = vmatmul.mubr.f32.gmra.mxu0 %v2564
        %v2566 = vpop.f32.mrf.mxu0
        %v2567 = vadd.f32 %v1983, %v2566
        %v2568 = vpop.f32.mrf.mxu0
        %2569 = vmatprep.mubr.f32.mxu0 0.0
        %v2570 = vand.u32 %v658, 4294901760
        %v2571 = vsub.f32 %v658, %v2570
        %2572 = vmatmul.mubr.f32.gmra.mxu0 %v2571
        %v2573 = vpop.f32.mrf.mxu0
        %v2574 = vadd.f32 %v1989, %v2573
        %v2575 = vpop.f32.mrf.mxu0
        %2576 = vmatprep.mubr.f32.mxu0 0.0
        %v2577 = vand.u32 %v659, 4294901760
        %v2578 = vsub.f32 %v659, %v2577
        %2579 = vmatmul.mubr.f32.gmra.mxu0 %v2578
        %v2580 = vpop.f32.mrf.mxu0
        %v2581 = vadd.f32 %v1995, %v2580
        %v2582 = vpop.f32.mrf.mxu0
        %2583 = vmatprep.mubr.f32.mxu0 0.0
        %v2584 = vand.u32 %v660, 4294901760
        %v2585 = vsub.f32 %v660, %v2584
        %2586 = vmatmul.mubr.f32.gmra.mxu0 %v2585
        %v2587 = vpop.f32.mrf.mxu0
        %v2588 = vadd.f32 %v2001, %v2587
        %v2589 = vpop.f32.mrf.mxu0
        %2590 = vmatprep.mubr.f32.mxu0 0.0
        %v2591 = vand.u32 %v661, 4294901760
        %v2592 = vsub.f32 %v661, %v2591
        %2593 = vmatmul.mubr.f32.gmra.mxu0 %v2592
        %v2594 = vpop.f32.mrf.mxu0
        %v2595 = vadd.f32 %v2007, %v2594
        %v2596 = vpop.f32.mrf.mxu0
        %2597 = vmatprep.mubr.f32.mxu0 0.0
        %v2598 = vand.u32 %v662, 4294901760
        %v2599 = vsub.f32 %v662, %v2598
        %2600 = vmatmul.mubr.f32.gmra.mxu0 %v2599
        %v2601 = vpop.f32.mrf.mxu0
        %v2602 = vadd.f32 %v2013, %v2601
        %v2603 = vpop.f32.mrf.mxu0
        %2604 = vmatprep.mubr.f32.mxu0 0.0
        %v2605 = vand.u32 %v663, 4294901760
        %v2606 = vsub.f32 %v663, %v2605
        %2607 = vmatmul.mubr.f32.gmra.mxu0 %v2606
        %v2608 = vpop.f32.mrf.mxu0
        %v2609 = vadd.f32 %v2019, %v2608
        %v2610 = vpop.f32.mrf.mxu0
        %2611 = vmatprep.mubr.f32.mxu0 0.0
        %v2612 = vand.u32 %v664, 4294901760
        %v2613 = vsub.f32 %v664, %v2612
        %2614 = vmatmul.mubr.f32.gmra.mxu0 %v2613
        %v2615 = vpop.f32.mrf.mxu0
        %v2616 = vadd.f32 %v2025, %v2615
        %v2617 = vpop.f32.mrf.mxu0
        %2618 = vmatprep.mubr.f32.mxu0 0.0
        %v2619 = vand.u32 %v665, 4294901760
        %v2620 = vsub.f32 %v665, %v2619
        %2621 = vmatmul.mubr.f32.gmra.mxu0 %v2620
        %v2622 = vpop.f32.mrf.mxu0
        %v2623 = vadd.f32 %v2031, %v2622
        %v2624 = vpop.f32.mrf.mxu0
        %2625 = vmatprep.mubr.f32.mxu0 0.0
        %v2626 = vand.u32 %v666, 4294901760
        %v2627 = vsub.f32 %v666, %v2626
        %2628 = vmatmul.mubr.f32.gmra.mxu0 %v2627
        %v2629 = vpop.f32.mrf.mxu0
        %v2630 = vadd.f32 %v2037, %v2629
        %v2631 = vpop.f32.mrf.mxu0
        %2632 = vmatprep.mubr.f32.mxu0 0.0
        %v2633 = vand.u32 %v667, 4294901760
        %v2634 = vsub.f32 %v667, %v2633
        %2635 = vmatmul.mubr.f32.gmra.mxu0 %v2634
        %v2636 = vpop.f32.mrf.mxu0
        %v2637 = vadd.f32 %v2043, %v2636
        %v2638 = vpop.f32.mrf.mxu0
        %2639 = vdwg.mxu0
        %2640 = vmatprep.subr.mxu0 0.0
        %v2641 = vand.u32 %v683, 4294901760
        %2642 = vmatpush1.msra.mxu0 %v2641
        %2643 = vmatprep.subr.mxu0 0.0
        %v2644 = vand.u32 %v682, 4294901760
        %2645 = vmatpush1.msra.mxu0 %v2644
        %2646 = vmatprep.subr.mxu0 0.0
        %v2647 = vand.u32 %v681, 4294901760
        %2648 = vmatpush1.msra.mxu0 %v2647
        %2649 = vmatprep.subr.mxu0 0.0
        %v2650 = vand.u32 %v680, 4294901760
        %2651 = vmatpush1.msra.mxu0 %v2650
        %2652 = vmatprep.subr.mxu0 0.0
        %v2653 = vand.u32 %v679, 4294901760
        %2654 = vmatpush1.msra.mxu0 %v2653
        %2655 = vmatprep.subr.mxu0 0.0
        %v2656 = vand.u32 %v678, 4294901760
        %2657 = vmatpush1.msra.mxu0 %v2656
        %2658 = vmatprep.subr.mxu0 0.0
        %v2659 = vand.u32 %v677, 4294901760
        %2660 = vmatpush1.msra.mxu0 %v2659
        %2661 = vmatprep.subr.mxu0 0.0
        %v2662 = vand.u32 %v676, 4294901760
        %2663 = vmatpush1.msra.mxu0 %v2662
        %2664 = vmatprep.subr.mxu0 0.0
        %v2665 = vand.u32 %v675, 4294901760
        %2666 = vmatpush1.msra.mxu0 %v2665
        %2667 = vmatprep.subr.mxu0 0.0
        %v2668 = vand.u32 %v674, 4294901760
        %2669 = vmatpush1.msra.mxu0 %v2668
        %2670 = vmatprep.subr.mxu0 0.0
        %v2671 = vand.u32 %v673, 4294901760
        %2672 = vmatpush1.msra.mxu0 %v2671
        %2673 = vmatprep.subr.mxu0 0.0
        %v2674 = vand.u32 %v672, 4294901760
        %2675 = vmatpush1.msra.mxu0 %v2674
        %2676 = vmatprep.subr.mxu0 0.0
        %v2677 = vand.u32 %v671, 4294901760
        %2678 = vmatpush1.msra.mxu0 %v2677
        %2679 = vmatprep.subr.mxu0 0.0
        %v2680 = vand.u32 %v670, 4294901760
        %2681 = vmatpush1.msra.mxu0 %v2680
        %2682 = vmatprep.subr.mxu0 0.0
        %v2683 = vand.u32 %v669, 4294901760
        %2684 = vmatpush1.msra.mxu0 %v2683
        %2685 = vmatprep.subr.mxu0 0.0
        %v2686 = vand.u32 %v668, 4294901760
        %2687 = vmatpush1.msra.mxu0 %v2686
        %2688 = vmatprep.subr.mxu0 0.0
        %2689 = vmatpush2.msra.mxu0 0.0
        %2690 = vmatprep.subr.mxu0 0.0
        %2691 = vmatpush2.msra.mxu0 0.0
        %2692 = vmatprep.subr.mxu0 0.0
        %2693 = vmatpush2.msra.mxu0 0.0
        %2694 = vmatprep.subr.mxu0 0.0
        %2695 = vmatpush2.msra.mxu0 0.0
        %2696 = vmatprep.subr.mxu0 0.0
        %2697 = vmatpush2.msra.mxu0 0.0
        %2698 = vmatprep.subr.mxu0 0.0
        %2699 = vmatpush2.msra.mxu0 0.0
        %2700 = vmatprep.subr.mxu0 0.0
        %2701 = vmatpush2.msra.mxu0 0.0
        %2702 = vmatprep.subr.mxu0 0.0
        %2703 = vmatpush2.msra.mxu0 0.0
        %2704 = vmatprep.subr.mxu0 0.0
        %2705 = vmatpush2.msra.mxu0 0.0
        %2706 = vmatprep.subr.mxu0 0.0
        %2707 = vmatpush2.msra.mxu0 0.0
        %2708 = vmatprep.subr.mxu0 0.0
        %2709 = vmatpush2.msra.mxu0 0.0
        %2710 = vmatprep.subr.mxu0 0.0
        %2711 = vmatpush2.msra.mxu0 0.0
        %2712 = vmatprep.subr.mxu0 0.0
        %2713 = vmatpush2.msra.mxu0 0.0
        %2714 = vmatprep.subr.mxu0 0.0
        %2715 = vmatpush2.msra.mxu0 0.0
        %2716 = vmatprep.subr.mxu0 0.0
        %2717 = vmatpush2.msra.mxu0 0.0
        %2718 = vmatprep.subr.mxu0 0.0
        %2719 = vmatpush2.msra.mxu0 0.0
        %2720 = vmatprep.mubr.f32.mxu0 0.0
        %v2721 = vand.u32 %v597, 4294901760
        %v2722 = vsub.f32 %v597, %v2721
        %v2723 = vand.u32 %v2722, 4294901760
        %2724 = vmatmul.mubr.f32.gmra.mxu0 %v2723
        %v2725 = vpop.f32.mrf.mxu0
        %v2726 = vadd.f32 %v2147, %v2725
        %v2727 = vpop.f32.mrf.mxu0
        %2728 = vmatprep.mubr.f32.mxu0 0.0
        %v2729 = vand.u32 %v598, 4294901760
        %v2730 = vsub.f32 %v598, %v2729
        %v2731 = vand.u32 %v2730, 4294901760
        %2732 = vmatmul.mubr.f32.gmra.mxu0 %v2731
        %v2733 = vpop.f32.mrf.mxu0
        %v2734 = vadd.f32 %v2154, %v2733
        %v2735 = vpop.f32.mrf.mxu0
        %2736 = vmatprep.mubr.f32.mxu0 0.0
        %v2737 = vand.u32 %v599, 4294901760
        %v2738 = vsub.f32 %v599, %v2737
        %v2739 = vand.u32 %v2738, 4294901760
        %2740 = vmatmul.mubr.f32.gmra.mxu0 %v2739
        %v2741 = vpop.f32.mrf.mxu0
        %v2742 = vadd.f32 %v2161, %v2741
        %v2743 = vpop.f32.mrf.mxu0
        %2744 = vmatprep.mubr.f32.mxu0 0.0
        %v2745 = vand.u32 %v600, 4294901760
        %v2746 = vsub.f32 %v600, %v2745
        %v2747 = vand.u32 %v2746, 4294901760
        %2748 = vmatmul.mubr.f32.gmra.mxu0 %v2747
        %v2749 = vpop.f32.mrf.mxu0
        %v2750 = vadd.f32 %v2168, %v2749
        %v2751 = vpop.f32.mrf.mxu0
        %2752 = vmatprep.mubr.f32.mxu0 0.0
        %v2753 = vand.u32 %v601, 4294901760
        %v2754 = vsub.f32 %v601, %v2753
        %v2755 = vand.u32 %v2754, 4294901760
        %2756 = vmatmul.mubr.f32.gmra.mxu0 %v2755
        %v2757 = vpop.f32.mrf.mxu0
        %v2758 = vadd.f32 %v2175, %v2757
        %v2759 = vpop.f32.mrf.mxu0
        %2760 = vmatprep.mubr.f32.mxu0 0.0
        %v2761 = vand.u32 %v602, 4294901760
        %v2762 = vsub.f32 %v602, %v2761
        %v2763 = vand.u32 %v2762, 4294901760
        %2764 = vmatmul.mubr.f32.gmra.mxu0 %v2763
        %v2765 = vpop.f32.mrf.mxu0
        %v2766 = vadd.f32 %v2182, %v2765
        %v2767 = vpop.f32.mrf.mxu0
        %2768 = vmatprep.mubr.f32.mxu0 0.0
        %v2769 = vand.u32 %v603, 4294901760
        %v2770 = vsub.f32 %v603, %v2769
        %v2771 = vand.u32 %v2770, 4294901760
        %2772 = vmatmul.mubr.f32.gmra.mxu0 %v2771
        %v2773 = vpop.f32.mrf.mxu0
        %v2774 = vadd.f32 %v2189, %v2773
        %v2775 = vpop.f32.mrf.mxu0
        %2776 = vmatprep.mubr.f32.mxu0 0.0
        %v2777 = vand.u32 %v604, 4294901760
        %v2778 = vsub.f32 %v604, %v2777
        %v2779 = vand.u32 %v2778, 4294901760
        %2780 = vmatmul.mubr.f32.gmra.mxu0 %v2779
        %v2781 = vpop.f32.mrf.mxu0
        %v2782 = vadd.f32 %v2196, %v2781
        %v2783 = vpop.f32.mrf.mxu0
        %2784 = vmatprep.mubr.f32.mxu0 0.0
        %v2785 = vand.u32 %v605, 4294901760
        %v2786 = vsub.f32 %v605, %v2785
        %v2787 = vand.u32 %v2786, 4294901760
        %2788 = vmatmul.mubr.f32.gmra.mxu0 %v2787
        %v2789 = vpop.f32.mrf.mxu0
        %v2790 = vadd.f32 %v2203, %v2789
        %v2791 = vpop.f32.mrf.mxu0
        %2792 = vmatprep.mubr.f32.mxu0 0.0
        %v2793 = vand.u32 %v606, 4294901760
        %v2794 = vsub.f32 %v606, %v2793
        %v2795 = vand.u32 %v2794, 4294901760
        %2796 = vmatmul.mubr.f32.gmra.mxu0 %v2795
        %v2797 = vpop.f32.mrf.mxu0
        %v2798 = vadd.f32 %v2210, %v2797
        %v2799 = vpop.f32.mrf.mxu0
        %2800 = vmatprep.mubr.f32.mxu0 0.0
        %v2801 = vand.u32 %v607, 4294901760
        %v2802 = vsub.f32 %v607, %v2801
        %v2803 = vand.u32 %v2802, 4294901760
        %2804 = vmatmul.mubr.f32.gmra.mxu0 %v2803
        %v2805 = vpop.f32.mrf.mxu0
        %v2806 = vadd.f32 %v2217, %v2805
        %v2807 = vpop.f32.mrf.mxu0
        %2808 = vmatprep.mubr.f32.mxu0 0.0
        %v2809 = vand.u32 %v608, 4294901760
        %v2810 = vsub.f32 %v608, %v2809
        %v2811 = vand.u32 %v2810, 4294901760
        %2812 = vmatmul.mubr.f32.gmra.mxu0 %v2811
        %v2813 = vpop.f32.mrf.mxu0
        %v2814 = vadd.f32 %v2224, %v2813
        %v2815 = vpop.f32.mrf.mxu0
        %2816 = vmatprep.mubr.f32.mxu0 0.0
        %v2817 = vand.u32 %v609, 4294901760
        %v2818 = vsub.f32 %v609, %v2817
        %v2819 = vand.u32 %v2818, 4294901760
        %2820 = vmatmul.mubr.f32.gmra.mxu0 %v2819
        %v2821 = vpop.f32.mrf.mxu0
        %v2822 = vadd.f32 %v2231, %v2821
        %v2823 = vpop.f32.mrf.mxu0
        %2824 = vmatprep.mubr.f32.mxu0 0.0
        %v2825 = vand.u32 %v610, 4294901760
        %v2826 = vsub.f32 %v610, %v2825
        %v2827 = vand.u32 %v2826, 4294901760
        %2828 = vmatmul.mubr.f32.gmra.mxu0 %v2827
        %v2829 = vpop.f32.mrf.mxu0
        %v2830 = vadd.f32 %v2238, %v2829
        %v2831 = vpop.f32.mrf.mxu0
        %2832 = vmatprep.mubr.f32.mxu0 0.0
        %v2833 = vand.u32 %v611, 4294901760
        %v2834 = vsub.f32 %v611, %v2833
        %v2835 = vand.u32 %v2834, 4294901760
        %2836 = vmatmul.mubr.f32.gmra.mxu0 %v2835
        %v2837 = vpop.f32.mrf.mxu0
        %v2838 = vadd.f32 %v2245, %v2837
        %v2839 = vpop.f32.mrf.mxu0
        %2840 = vmatprep.mubr.f32.mxu0 0.0
        %v2841 = vand.u32 %v612, 4294901760
        %v2842 = vsub.f32 %v612, %v2841
        %v2843 = vand.u32 %v2842, 4294901760
        %2844 = vmatmul.mubr.f32.gmra.mxu0 %v2843
        %v2845 = vpop.f32.mrf.mxu0
        %v2846 = vadd.f32 %v2252, %v2845
        %v2847 = vpop.f32.mrf.mxu0
        %2848 = vmatprep.mubr.f32.mxu0 0.0
        %v2849 = vand.u32 %v613, 4294901760
        %v2850 = vsub.f32 %v613, %v2849
        %v2851 = vand.u32 %v2850, 4294901760
        %2852 = vmatmul.mubr.f32.gmra.mxu0 %v2851
        %v2853 = vpop.f32.mrf.mxu0
        %v2854 = vadd.f32 %v2259, %v2853
        %v2855 = vpop.f32.mrf.mxu0
        %2856 = vmatprep.mubr.f32.mxu0 0.0
        %v2857 = vand.u32 %v614, 4294901760
        %v2858 = vsub.f32 %v614, %v2857
        %v2859 = vand.u32 %v2858, 4294901760
        %2860 = vmatmul.mubr.f32.gmra.mxu0 %v2859
        %v2861 = vpop.f32.mrf.mxu0
        %v2862 = vadd.f32 %v2266, %v2861
        %v2863 = vpop.f32.mrf.mxu0
        %2864 = vmatprep.mubr.f32.mxu0 0.0
        %v2865 = vand.u32 %v615, 4294901760
        %v2866 = vsub.f32 %v615, %v2865
        %v2867 = vand.u32 %v2866, 4294901760
        %2868 = vmatmul.mubr.f32.gmra.mxu0 %v2867
        %v2869 = vpop.f32.mrf.mxu0
        %v2870 = vadd.f32 %v2273, %v2869
        %v2871 = vpop.f32.mrf.mxu0
        %2872 = vmatprep.mubr.f32.mxu0 0.0
        %v2873 = vand.u32 %v616, 4294901760
        %v2874 = vsub.f32 %v616, %v2873
        %v2875 = vand.u32 %v2874, 4294901760
        %2876 = vmatmul.mubr.f32.gmra.mxu0 %v2875
        %v2877 = vpop.f32.mrf.mxu0
        %v2878 = vadd.f32 %v2280, %v2877
        %v2879 = vpop.f32.mrf.mxu0
        %2880 = vmatprep.mubr.f32.mxu0 0.0
        %v2881 = vand.u32 %v617, 4294901760
        %v2882 = vsub.f32 %v617, %v2881
        %v2883 = vand.u32 %v2882, 4294901760
        %2884 = vmatmul.mubr.f32.gmra.mxu0 %v2883
        %v2885 = vpop.f32.mrf.mxu0
        %v2886 = vadd.f32 %v2287, %v2885
        %v2887 = vpop.f32.mrf.mxu0
        %2888 = vmatprep.mubr.f32.mxu0 0.0
        %v2889 = vand.u32 %v618, 4294901760
        %v2890 = vsub.f32 %v618, %v2889
        %v2891 = vand.u32 %v2890, 4294901760
        %2892 = vmatmul.mubr.f32.gmra.mxu0 %v2891
        %v2893 = vpop.f32.mrf.mxu0
        %v2894 = vadd.f32 %v2294, %v2893
        %v2895 = vpop.f32.mrf.mxu0
        %2896 = vmatprep.mubr.f32.mxu0 0.0
        %v2897 = vand.u32 %v619, 4294901760
        %v2898 = vsub.f32 %v619, %v2897
        %v2899 = vand.u32 %v2898, 4294901760
        %2900 = vmatmul.mubr.f32.gmra.mxu0 %v2899
        %v2901 = vpop.f32.mrf.mxu0
        %v2902 = vadd.f32 %v2301, %v2901
        %v2903 = vpop.f32.mrf.mxu0
        %2904 = vmatprep.mubr.f32.mxu0 0.0
        %v2905 = vand.u32 %v620, 4294901760
        %v2906 = vsub.f32 %v620, %v2905
        %v2907 = vand.u32 %v2906, 4294901760
        %2908 = vmatmul.mubr.f32.gmra.mxu0 %v2907
        %v2909 = vpop.f32.mrf.mxu0
        %v2910 = vadd.f32 %v2308, %v2909
        %v2911 = vpop.f32.mrf.mxu0
        %2912 = vmatprep.mubr.f32.mxu0 0.0
        %v2913 = vand.u32 %v621, 4294901760
        %v2914 = vsub.f32 %v621, %v2913
        %v2915 = vand.u32 %v2914, 4294901760
        %2916 = vmatmul.mubr.f32.gmra.mxu0 %v2915
        %v2917 = vpop.f32.mrf.mxu0
        %v2918 = vadd.f32 %v2315, %v2917
        %v2919 = vpop.f32.mrf.mxu0
        %2920 = vmatprep.mubr.f32.mxu0 0.0
        %v2921 = vand.u32 %v622, 4294901760
        %v2922 = vsub.f32 %v622, %v2921
        %v2923 = vand.u32 %v2922, 4294901760
        %2924 = vmatmul.mubr.f32.gmra.mxu0 %v2923
        %v2925 = vpop.f32.mrf.mxu0
        %v2926 = vadd.f32 %v2322, %v2925
        %v2927 = vpop.f32.mrf.mxu0
        %2928 = vmatprep.mubr.f32.mxu0 0.0
        %v2929 = vand.u32 %v623, 4294901760
        %v2930 = vsub.f32 %v623, %v2929
        %v2931 = vand.u32 %v2930, 4294901760
        %2932 = vmatmul.mubr.f32.gmra.mxu0 %v2931
        %v2933 = vpop.f32.mrf.mxu0
        %v2934 = vadd.f32 %v2329, %v2933
        %v2935 = vpop.f32.mrf.mxu0
        %2936 = vmatprep.mubr.f32.mxu0 0.0
        %v2937 = vand.u32 %v624, 4294901760
        %v2938 = vsub.f32 %v624, %v2937
        %v2939 = vand.u32 %v2938, 4294901760
        %2940 = vmatmul.mubr.f32.gmra.mxu0 %v2939
        %v2941 = vpop.f32.mrf.mxu0
        %v2942 = vadd.f32 %v2336, %v2941
        %v2943 = vpop.f32.mrf.mxu0
        %2944 = vmatprep.mubr.f32.mxu0 0.0
        %v2945 = vand.u32 %v625, 4294901760
        %v2946 = vsub.f32 %v625, %v2945
        %v2947 = vand.u32 %v2946, 4294901760
        %2948 = vmatmul.mubr.f32.gmra.mxu0 %v2947
        %v2949 = vpop.f32.mrf.mxu0
        %v2950 = vadd.f32 %v2343, %v2949
        %v2951 = vpop.f32.mrf.mxu0
        %2952 = vmatprep.mubr.f32.mxu0 0.0
        %v2953 = vand.u32 %v626, 4294901760
        %v2954 = vsub.f32 %v626, %v2953
        %v2955 = vand.u32 %v2954, 4294901760
        %2956 = vmatmul.mubr.f32.gmra.mxu0 %v2955
        %v2957 = vpop.f32.mrf.mxu0
        %v2958 = vadd.f32 %v2350, %v2957
        %v2959 = vpop.f32.mrf.mxu0
        %2960 = vmatprep.mubr.f32.mxu0 0.0
        %v2961 = vand.u32 %v627, 4294901760
        %v2962 = vsub.f32 %v627, %v2961
        %v2963 = vand.u32 %v2962, 4294901760
        %2964 = vmatmul.mubr.f32.gmra.mxu0 %v2963
        %v2965 = vpop.f32.mrf.mxu0
        %v2966 = vadd.f32 %v2357, %v2965
        %v2967 = vpop.f32.mrf.mxu0
        %2968 = vmatprep.mubr.f32.mxu0 0.0
        %v2969 = vand.u32 %v628, 4294901760
        %v2970 = vsub.f32 %v628, %v2969
        %v2971 = vand.u32 %v2970, 4294901760
        %2972 = vmatmul.mubr.f32.gmra.mxu0 %v2971
        %v2973 = vpop.f32.mrf.mxu0
        %v2974 = vadd.f32 %v2364, %v2973
        %v2975 = vpop.f32.mrf.mxu0
        %2976 = vmatprep.mubr.f32.mxu0 0.0
        %v2977 = vand.u32 %v629, 4294901760
        %v2978 = vsub.f32 %v629, %v2977
        %v2979 = vand.u32 %v2978, 4294901760
        %2980 = vmatmul.mubr.f32.gmra.mxu0 %v2979
        %v2981 = vpop.f32.mrf.mxu0
        %v2982 = vadd.f32 %v2371, %v2981
        %v2983 = vpop.f32.mrf.mxu0
        %2984 = vmatprep.mubr.f32.mxu0 0.0
        %v2985 = vand.u32 %v630, 4294901760
        %v2986 = vsub.f32 %v630, %v2985
        %v2987 = vand.u32 %v2986, 4294901760
        %2988 = vmatmul.mubr.f32.gmra.mxu0 %v2987
        %v2989 = vpop.f32.mrf.mxu0
        %v2990 = vadd.f32 %v2378, %v2989
        %v2991 = vpop.f32.mrf.mxu0
        %2992 = vmatprep.mubr.f32.mxu0 0.0
        %v2993 = vand.u32 %v631, 4294901760
        %v2994 = vsub.f32 %v631, %v2993
        %v2995 = vand.u32 %v2994, 4294901760
        %2996 = vmatmul.mubr.f32.gmra.mxu0 %v2995
        %v2997 = vpop.f32.mrf.mxu0
        %v2998 = vadd.f32 %v2385, %v2997
        %v2999 = vpop.f32.mrf.mxu0
        %3000 = vmatprep.mubr.f32.mxu0 0.0
        %v3001 = vand.u32 %v632, 4294901760
        %v3002 = vsub.f32 %v632, %v3001
        %v3003 = vand.u32 %v3002, 4294901760
        %3004 = vmatmul.mubr.f32.gmra.mxu0 %v3003
        %v3005 = vpop.f32.mrf.mxu0
        %v3006 = vadd.f32 %v2392, %v3005
        %v3007 = vpop.f32.mrf.mxu0
        %3008 = vmatprep.mubr.f32.mxu0 0.0
        %v3009 = vand.u32 %v633, 4294901760
        %v3010 = vsub.f32 %v633, %v3009
        %v3011 = vand.u32 %v3010, 4294901760
        %3012 = vmatmul.mubr.f32.gmra.mxu0 %v3011
        %v3013 = vpop.f32.mrf.mxu0
        %v3014 = vadd.f32 %v2399, %v3013
        %v3015 = vpop.f32.mrf.mxu0
        %3016 = vmatprep.mubr.f32.mxu0 0.0
        %v3017 = vand.u32 %v634, 4294901760
        %v3018 = vsub.f32 %v634, %v3017
        %v3019 = vand.u32 %v3018, 4294901760
        %3020 = vmatmul.mubr.f32.gmra.mxu0 %v3019
        %v3021 = vpop.f32.mrf.mxu0
        %v3022 = vadd.f32 %v2406, %v3021
        %v3023 = vpop.f32.mrf.mxu0
        %3024 = vmatprep.mubr.f32.mxu0 0.0
        %v3025 = vand.u32 %v635, 4294901760
        %v3026 = vsub.f32 %v635, %v3025
        %v3027 = vand.u32 %v3026, 4294901760
        %3028 = vmatmul.mubr.f32.gmra.mxu0 %v3027
        %v3029 = vpop.f32.mrf.mxu0
        %v3030 = vadd.f32 %v2413, %v3029
        %v3031 = vpop.f32.mrf.mxu0
        %3032 = vmatprep.mubr.f32.mxu0 0.0
        %v3033 = vand.u32 %v636, 4294901760
        %v3034 = vsub.f32 %v636, %v3033
        %v3035 = vand.u32 %v3034, 4294901760
        %3036 = vmatmul.mubr.f32.gmra.mxu0 %v3035
        %v3037 = vpop.f32.mrf.mxu0
        %v3038 = vadd.f32 %v2420, %v3037
        %v3039 = vpop.f32.mrf.mxu0
        %3040 = vmatprep.mubr.f32.mxu0 0.0
        %v3041 = vand.u32 %v637, 4294901760
        %v3042 = vsub.f32 %v637, %v3041
        %v3043 = vand.u32 %v3042, 4294901760
        %3044 = vmatmul.mubr.f32.gmra.mxu0 %v3043
        %v3045 = vpop.f32.mrf.mxu0
        %v3046 = vadd.f32 %v2427, %v3045
        %v3047 = vpop.f32.mrf.mxu0
        %3048 = vmatprep.mubr.f32.mxu0 0.0
        %v3049 = vand.u32 %v638, 4294901760
        %v3050 = vsub.f32 %v638, %v3049
        %v3051 = vand.u32 %v3050, 4294901760
        %3052 = vmatmul.mubr.f32.gmra.mxu0 %v3051
        %v3053 = vpop.f32.mrf.mxu0
        %v3054 = vadd.f32 %v2434, %v3053
        %v3055 = vpop.f32.mrf.mxu0
        %3056 = vmatprep.mubr.f32.mxu0 0.0
        %v3057 = vand.u32 %v639, 4294901760
        %v3058 = vsub.f32 %v639, %v3057
        %v3059 = vand.u32 %v3058, 4294901760
        %3060 = vmatmul.mubr.f32.gmra.mxu0 %v3059
        %v3061 = vpop.f32.mrf.mxu0
        %v3062 = vadd.f32 %v2441, %v3061
        %v3063 = vpop.f32.mrf.mxu0
        %3064 = vmatprep.mubr.f32.mxu0 0.0
        %v3065 = vand.u32 %v640, 4294901760
        %v3066 = vsub.f32 %v640, %v3065
        %v3067 = vand.u32 %v3066, 4294901760
        %3068 = vmatmul.mubr.f32.gmra.mxu0 %v3067
        %v3069 = vpop.f32.mrf.mxu0
        %v3070 = vadd.f32 %v2448, %v3069
        %v3071 = vpop.f32.mrf.mxu0
        %3072 = vmatprep.mubr.f32.mxu0 0.0
        %v3073 = vand.u32 %v641, 4294901760
        %v3074 = vsub.f32 %v641, %v3073
        %v3075 = vand.u32 %v3074, 4294901760
        %3076 = vmatmul.mubr.f32.gmra.mxu0 %v3075
        %v3077 = vpop.f32.mrf.mxu0
        %v3078 = vadd.f32 %v2455, %v3077
        %v3079 = vpop.f32.mrf.mxu0
        %3080 = vmatprep.mubr.f32.mxu0 0.0
        %v3081 = vand.u32 %v642, 4294901760
        %v3082 = vsub.f32 %v642, %v3081
        %v3083 = vand.u32 %v3082, 4294901760
        %3084 = vmatmul.mubr.f32.gmra.mxu0 %v3083
        %v3085 = vpop.f32.mrf.mxu0
        %v3086 = vadd.f32 %v2462, %v3085
        %v3087 = vpop.f32.mrf.mxu0
        %3088 = vmatprep.mubr.f32.mxu0 0.0
        %v3089 = vand.u32 %v643, 4294901760
        %v3090 = vsub.f32 %v643, %v3089
        %v3091 = vand.u32 %v3090, 4294901760
        %3092 = vmatmul.mubr.f32.gmra.mxu0 %v3091
        %v3093 = vpop.f32.mrf.mxu0
        %v3094 = vadd.f32 %v2469, %v3093
        %v3095 = vpop.f32.mrf.mxu0
        %3096 = vmatprep.mubr.f32.mxu0 0.0
        %v3097 = vand.u32 %v644, 4294901760
        %v3098 = vsub.f32 %v644, %v3097
        %v3099 = vand.u32 %v3098, 4294901760
        %3100 = vmatmul.mubr.f32.gmra.mxu0 %v3099
        %v3101 = vpop.f32.mrf.mxu0
        %v3102 = vadd.f32 %v2476, %v3101
        %v3103 = vpop.f32.mrf.mxu0
        %3104 = vmatprep.mubr.f32.mxu0 0.0
        %v3105 = vand.u32 %v645, 4294901760
        %v3106 = vsub.f32 %v645, %v3105
        %v3107 = vand.u32 %v3106, 4294901760
        %3108 = vmatmul.mubr.f32.gmra.mxu0 %v3107
        %v3109 = vpop.f32.mrf.mxu0
        %v3110 = vadd.f32 %v2483, %v3109
        %v3111 = vpop.f32.mrf.mxu0
        %3112 = vmatprep.mubr.f32.mxu0 0.0
        %v3113 = vand.u32 %v646, 4294901760
        %v3114 = vsub.f32 %v646, %v3113
        %v3115 = vand.u32 %v3114, 4294901760
        %3116 = vmatmul.mubr.f32.gmra.mxu0 %v3115
        %v3117 = vpop.f32.mrf.mxu0
        %v3118 = vadd.f32 %v2490, %v3117
        %v3119 = vpop.f32.mrf.mxu0
        %3120 = vmatprep.mubr.f32.mxu0 0.0
        %v3121 = vand.u32 %v647, 4294901760
        %v3122 = vsub.f32 %v647, %v3121
        %v3123 = vand.u32 %v3122, 4294901760
        %3124 = vmatmul.mubr.f32.gmra.mxu0 %v3123
        %v3125 = vpop.f32.mrf.mxu0
        %v3126 = vadd.f32 %v2497, %v3125
        %v3127 = vpop.f32.mrf.mxu0
        %3128 = vmatprep.mubr.f32.mxu0 0.0
        %v3129 = vand.u32 %v648, 4294901760
        %v3130 = vsub.f32 %v648, %v3129
        %v3131 = vand.u32 %v3130, 4294901760
        %3132 = vmatmul.mubr.f32.gmra.mxu0 %v3131
        %v3133 = vpop.f32.mrf.mxu0
        %v3134 = vadd.f32 %v2504, %v3133
        %v3135 = vpop.f32.mrf.mxu0
        %3136 = vmatprep.mubr.f32.mxu0 0.0
        %v3137 = vand.u32 %v649, 4294901760
        %v3138 = vsub.f32 %v649, %v3137
        %v3139 = vand.u32 %v3138, 4294901760
        %3140 = vmatmul.mubr.f32.gmra.mxu0 %v3139
        %v3141 = vpop.f32.mrf.mxu0
        %v3142 = vadd.f32 %v2511, %v3141
        %v3143 = vpop.f32.mrf.mxu0
        %3144 = vmatprep.mubr.f32.mxu0 0.0
        %v3145 = vand.u32 %v650, 4294901760
        %v3146 = vsub.f32 %v650, %v3145
        %v3147 = vand.u32 %v3146, 4294901760
        %3148 = vmatmul.mubr.f32.gmra.mxu0 %v3147
        %v3149 = vpop.f32.mrf.mxu0
        %v3150 = vadd.f32 %v2518, %v3149
        %v3151 = vpop.f32.mrf.mxu0
        %3152 = vmatprep.mubr.f32.mxu0 0.0
        %v3153 = vand.u32 %v651, 4294901760
        %v3154 = vsub.f32 %v651, %v3153
        %v3155 = vand.u32 %v3154, 4294901760
        %3156 = vmatmul.mubr.f32.gmra.mxu0 %v3155
        %v3157 = vpop.f32.mrf.mxu0
        %v3158 = vadd.f32 %v2525, %v3157
        %v3159 = vpop.f32.mrf.mxu0
        %3160 = vmatprep.mubr.f32.mxu0 0.0
        %v3161 = vand.u32 %v652, 4294901760
        %v3162 = vsub.f32 %v652, %v3161
        %v3163 = vand.u32 %v3162, 4294901760
        %3164 = vmatmul.mubr.f32.gmra.mxu0 %v3163
        %v3165 = vpop.f32.mrf.mxu0
        %v3166 = vadd.f32 %v2532, %v3165
        %v3167 = vpop.f32.mrf.mxu0
        %3168 = vmatprep.mubr.f32.mxu0 0.0
        %v3169 = vand.u32 %v653, 4294901760
        %v3170 = vsub.f32 %v653, %v3169
        %v3171 = vand.u32 %v3170, 4294901760
        %3172 = vmatmul.mubr.f32.gmra.mxu0 %v3171
        %v3173 = vpop.f32.mrf.mxu0
        %v3174 = vadd.f32 %v2539, %v3173
        %v3175 = vpop.f32.mrf.mxu0
        %3176 = vmatprep.mubr.f32.mxu0 0.0
        %v3177 = vand.u32 %v654, 4294901760
        %v3178 = vsub.f32 %v654, %v3177
        %v3179 = vand.u32 %v3178, 4294901760
        %3180 = vmatmul.mubr.f32.gmra.mxu0 %v3179
        %v3181 = vpop.f32.mrf.mxu0
        %v3182 = vadd.f32 %v2546, %v3181
        %v3183 = vpop.f32.mrf.mxu0
        %3184 = vmatprep.mubr.f32.mxu0 0.0
        %v3185 = vand.u32 %v655, 4294901760
        %v3186 = vsub.f32 %v655, %v3185
        %v3187 = vand.u32 %v3186, 4294901760
        %3188 = vmatmul.mubr.f32.gmra.mxu0 %v3187
        %v3189 = vpop.f32.mrf.mxu0
        %v3190 = vadd.f32 %v2553, %v3189
        %v3191 = vpop.f32.mrf.mxu0
        %3192 = vmatprep.mubr.f32.mxu0 0.0
        %v3193 = vand.u32 %v656, 4294901760
        %v3194 = vsub.f32 %v656, %v3193
        %v3195 = vand.u32 %v3194, 4294901760
        %3196 = vmatmul.mubr.f32.gmra.mxu0 %v3195
        %v3197 = vpop.f32.mrf.mxu0
        %v3198 = vadd.f32 %v2560, %v3197
        %v3199 = vpop.f32.mrf.mxu0
        %3200 = vmatprep.mubr.f32.mxu0 0.0
        %v3201 = vand.u32 %v657, 4294901760
        %v3202 = vsub.f32 %v657, %v3201
        %v3203 = vand.u32 %v3202, 4294901760
        %3204 = vmatmul.mubr.f32.gmra.mxu0 %v3203
        %v3205 = vpop.f32.mrf.mxu0
        %v3206 = vadd.f32 %v2567, %v3205
        %v3207 = vpop.f32.mrf.mxu0
        %3208 = vmatprep.mubr.f32.mxu0 0.0
        %v3209 = vand.u32 %v658, 4294901760
        %v3210 = vsub.f32 %v658, %v3209
        %v3211 = vand.u32 %v3210, 4294901760
        %3212 = vmatmul.mubr.f32.gmra.mxu0 %v3211
        %v3213 = vpop.f32.mrf.mxu0
        %v3214 = vadd.f32 %v2574, %v3213
        %v3215 = vpop.f32.mrf.mxu0
        %3216 = vmatprep.mubr.f32.mxu0 0.0
        %v3217 = vand.u32 %v659, 4294901760
        %v3218 = vsub.f32 %v659, %v3217
        %v3219 = vand.u32 %v3218, 4294901760
        %3220 = vmatmul.mubr.f32.gmra.mxu0 %v3219
        %v3221 = vpop.f32.mrf.mxu0
        %v3222 = vadd.f32 %v2581, %v3221
        %v3223 = vpop.f32.mrf.mxu0
        %3224 = vmatprep.mubr.f32.mxu0 0.0
        %v3225 = vand.u32 %v660, 4294901760
        %v3226 = vsub.f32 %v660, %v3225
        %v3227 = vand.u32 %v3226, 4294901760
        %3228 = vmatmul.mubr.f32.gmra.mxu0 %v3227
        %v3229 = vpop.f32.mrf.mxu0
        %v3230 = vadd.f32 %v2588, %v3229
        %v3231 = vpop.f32.mrf.mxu0
        %3232 = vmatprep.mubr.f32.mxu0 0.0
        %v3233 = vand.u32 %v661, 4294901760
        %v3234 = vsub.f32 %v661, %v3233
        %v3235 = vand.u32 %v3234, 4294901760
        %3236 = vmatmul.mubr.f32.gmra.mxu0 %v3235
        %v3237 = vpop.f32.mrf.mxu0
        %v3238 = vadd.f32 %v2595, %v3237
        %v3239 = vpop.f32.mrf.mxu0
        %3240 = vmatprep.mubr.f32.mxu0 0.0
        %v3241 = vand.u32 %v662, 4294901760
        %v3242 = vsub.f32 %v662, %v3241
        %v3243 = vand.u32 %v3242, 4294901760
        %3244 = vmatmul.mubr.f32.gmra.mxu0 %v3243
        %v3245 = vpop.f32.mrf.mxu0
        %v3246 = vadd.f32 %v2602, %v3245
        %v3247 = vpop.f32.mrf.mxu0
        %3248 = vmatprep.mubr.f32.mxu0 0.0
        %v3249 = vand.u32 %v663, 4294901760
        %v3250 = vsub.f32 %v663, %v3249
        %v3251 = vand.u32 %v3250, 4294901760
        %3252 = vmatmul.mubr.f32.gmra.mxu0 %v3251
        %v3253 = vpop.f32.mrf.mxu0
        %v3254 = vadd.f32 %v2609, %v3253
        %v3255 = vpop.f32.mrf.mxu0
        %3256 = vmatprep.mubr.f32.mxu0 0.0
        %v3257 = vand.u32 %v664, 4294901760
        %v3258 = vsub.f32 %v664, %v3257
        %v3259 = vand.u32 %v3258, 4294901760
        %3260 = vmatmul.mubr.f32.gmra.mxu0 %v3259
        %v3261 = vpop.f32.mrf.mxu0
        %v3262 = vadd.f32 %v2616, %v3261
        %v3263 = vpop.f32.mrf.mxu0
        %3264 = vmatprep.mubr.f32.mxu0 0.0
        %v3265 = vand.u32 %v665, 4294901760
        %v3266 = vsub.f32 %v665, %v3265
        %v3267 = vand.u32 %v3266, 4294901760
        %3268 = vmatmul.mubr.f32.gmra.mxu0 %v3267
        %v3269 = vpop.f32.mrf.mxu0
        %v3270 = vadd.f32 %v2623, %v3269
        %v3271 = vpop.f32.mrf.mxu0
        %3272 = vmatprep.mubr.f32.mxu0 0.0
        %v3273 = vand.u32 %v666, 4294901760
        %v3274 = vsub.f32 %v666, %v3273
        %v3275 = vand.u32 %v3274, 4294901760
        %3276 = vmatmul.mubr.f32.gmra.mxu0 %v3275
        %v3277 = vpop.f32.mrf.mxu0
        %v3278 = vadd.f32 %v2630, %v3277
        %v3279 = vpop.f32.mrf.mxu0
        %3280 = vmatprep.mubr.f32.mxu0 0.0
        %v3281 = vand.u32 %v667, 4294901760
        %v3282 = vsub.f32 %v667, %v3281
        %v3283 = vand.u32 %v3282, 4294901760
        %3284 = vmatmul.mubr.f32.gmra.mxu0 %v3283
        %v3285 = vpop.f32.mrf.mxu0
        %v3286 = vadd.f32 %v2637, %v3285
        %v3287 = vpop.f32.mrf.mxu0
        %3288 = vdwg.mxu0
        %3289 = vmatprep.subr.mxu0 0.0
        %v3290 = vand.u32 %v683, 4294901760
        %v3291 = vsub.f32 %v683, %v3290
        %v3292 = vand.u32 %v3291, 4294901760
        %3293 = vmatpush1.msra.mxu0 %v3292
        %3294 = vmatprep.subr.mxu0 0.0
        %v3295 = vand.u32 %v682, 4294901760
        %v3296 = vsub.f32 %v682, %v3295
        %v3297 = vand.u32 %v3296, 4294901760
        %3298 = vmatpush1.msra.mxu0 %v3297
        %3299 = vmatprep.subr.mxu0 0.0
        %v3300 = vand.u32 %v681, 4294901760
        %v3301 = vsub.f32 %v681, %v3300
        %v3302 = vand.u32 %v3301, 4294901760
        %3303 = vmatpush1.msra.mxu0 %v3302
        %3304 = vmatprep.subr.mxu0 0.0
        %v3305 = vand.u32 %v680, 4294901760
        %v3306 = vsub.f32 %v680, %v3305
        %v3307 = vand.u32 %v3306, 4294901760
        %3308 = vmatpush1.msra.mxu0 %v3307
        %3309 = vmatprep.subr.mxu0 0.0
        %v3310 = vand.u32 %v679, 4294901760
        %v3311 = vsub.f32 %v679, %v3310
        %v3312 = vand.u32 %v3311, 4294901760
        %3313 = vmatpush1.msra.mxu0 %v3312
        %3314 = vmatprep.subr.mxu0 0.0
        %v3315 = vand.u32 %v678, 4294901760
        %v3316 = vsub.f32 %v678, %v3315
        %v3317 = vand.u32 %v3316, 4294901760
        %3318 = vmatpush1.msra.mxu0 %v3317
        %3319 = vmatprep.subr.mxu0 0.0
        %v3320 = vand.u32 %v677, 4294901760
        %v3321 = vsub.f32 %v677, %v3320
        %v3322 = vand.u32 %v3321, 4294901760
        %3323 = vmatpush1.msra.mxu0 %v3322
        %3324 = vmatprep.subr.mxu0 0.0
        %v3325 = vand.u32 %v676, 4294901760
        %v3326 = vsub.f32 %v676, %v3325
        %v3327 = vand.u32 %v3326, 4294901760
        %3328 = vmatpush1.msra.mxu0 %v3327
        %3329 = vmatprep.subr.mxu0 0.0
        %v3330 = vand.u32 %v675, 4294901760
        %v3331 = vsub.f32 %v675, %v3330
        %v3332 = vand.u32 %v3331, 4294901760
        %3333 = vmatpush1.msra.mxu0 %v3332
        %3334 = vmatprep.subr.mxu0 0.0
        %v3335 = vand.u32 %v674, 4294901760
        %v3336 = vsub.f32 %v674, %v3335
        %v3337 = vand.u32 %v3336, 4294901760
        %3338 = vmatpush1.msra.mxu0 %v3337
        %3339 = vmatprep.subr.mxu0 0.0
        %v3340 = vand.u32 %v673, 4294901760
        %v3341 = vsub.f32 %v673, %v3340
        %v3342 = vand.u32 %v3341, 4294901760
        %3343 = vmatpush1.msra.mxu0 %v3342
        %3344 = vmatprep.subr.mxu0 0.0
        %v3345 = vand.u32 %v672, 4294901760
        %v3346 = vsub.f32 %v672, %v3345
        %v3347 = vand.u32 %v3346, 4294901760
        %3348 = vmatpush1.msra.mxu0 %v3347
        %3349 = vmatprep.subr.mxu0 0.0
        %v3350 = vand.u32 %v671, 4294901760
        %v3351 = vsub.f32 %v671, %v3350
        %v3352 = vand.u32 %v3351, 4294901760
        %3353 = vmatpush1.msra.mxu0 %v3352
        %3354 = vmatprep.subr.mxu0 0.0
        %v3355 = vand.u32 %v670, 4294901760
        %v3356 = vsub.f32 %v670, %v3355
        %v3357 = vand.u32 %v3356, 4294901760
        %3358 = vmatpush1.msra.mxu0 %v3357
        %3359 = vmatprep.subr.mxu0 0.0
        %v3360 = vand.u32 %v669, 4294901760
        %v3361 = vsub.f32 %v669, %v3360
        %v3362 = vand.u32 %v3361, 4294901760
        %3363 = vmatpush1.msra.mxu0 %v3362
        %3364 = vmatprep.subr.mxu0 0.0
        %v3365 = vand.u32 %v668, 4294901760
        %v3366 = vsub.f32 %v668, %v3365
        %v3367 = vand.u32 %v3366, 4294901760
        %3368 = vmatpush1.msra.mxu0 %v3367
        %3369 = vmatprep.subr.mxu0 0.0
        %3370 = vmatpush2.msra.mxu0 0.0
        %3371 = vmatprep.subr.mxu0 0.0
        %3372 = vmatpush2.msra.mxu0 0.0
        %3373 = vmatprep.subr.mxu0 0.0
        %3374 = vmatpush2.msra.mxu0 0.0
        %3375 = vmatprep.subr.mxu0 0.0
        %3376 = vmatpush2.msra.mxu0 0.0
        %3377 = vmatprep.subr.mxu0 0.0
        %3378 = vmatpush2.msra.mxu0 0.0
        %3379 = vmatprep.subr.mxu0 0.0
        %3380 = vmatpush2.msra.mxu0 0.0
        %3381 = vmatprep.subr.mxu0 0.0
        %3382 = vmatpush2.msra.mxu0 0.0
        %3383 = vmatprep.subr.mxu0 0.0
        %3384 = vmatpush2.msra.mxu0 0.0
        %3385 = vmatprep.subr.mxu0 0.0
        %3386 = vmatpush2.msra.mxu0 0.0
        %3387 = vmatprep.subr.mxu0 0.0
        %3388 = vmatpush2.msra.mxu0 0.0
        %3389 = vmatprep.subr.mxu0 0.0
        %3390 = vmatpush2.msra.mxu0 0.0
        %3391 = vmatprep.subr.mxu0 0.0
        %3392 = vmatpush2.msra.mxu0 0.0
        %3393 = vmatprep.subr.mxu0 0.0
        %3394 = vmatpush2.msra.mxu0 0.0
        %3395 = vmatprep.subr.mxu0 0.0
        %3396 = vmatpush2.msra.mxu0 0.0
        %3397 = vmatprep.subr.mxu0 0.0
        %3398 = vmatpush2.msra.mxu0 0.0
        %3399 = vmatprep.subr.mxu0 0.0
        %3400 = vmatpush2.msra.mxu0 0.0
        %3401 = vmatprep.mubr.f32.mxu0 0.0
        %v3402 = vand.u32 %v597, 4294901760
        %3403 = vmatmul.mubr.f32.gmra.mxu0 %v3402
        %v3404 = vpop.f32.mrf.mxu0
        %v3405 = vadd.f32 %v2726, %v3404
        %v3406 = vpop.f32.mrf.mxu0
        %3407 = vmatprep.mubr.f32.mxu0 0.0
        %v3408 = vand.u32 %v598, 4294901760
        %3409 = vmatmul.mubr.f32.gmra.mxu0 %v3408
        %v3410 = vpop.f32.mrf.mxu0
        %v3411 = vadd.f32 %v2734, %v3410
        %v3412 = vpop.f32.mrf.mxu0
        %3413 = vmatprep.mubr.f32.mxu0 0.0
        %v3414 = vand.u32 %v599, 4294901760
        %3415 = vmatmul.mubr.f32.gmra.mxu0 %v3414
        %v3416 = vpop.f32.mrf.mxu0
        %v3417 = vadd.f32 %v2742, %v3416
        %v3418 = vpop.f32.mrf.mxu0
        %3419 = vmatprep.mubr.f32.mxu0 0.0
        %v3420 = vand.u32 %v600, 4294901760
        %3421 = vmatmul.mubr.f32.gmra.mxu0 %v3420
        %v3422 = vpop.f32.mrf.mxu0
        %v3423 = vadd.f32 %v2750, %v3422
        %v3424 = vpop.f32.mrf.mxu0
        %3425 = vmatprep.mubr.f32.mxu0 0.0
        %v3426 = vand.u32 %v601, 4294901760
        %3427 = vmatmul.mubr.f32.gmra.mxu0 %v3426
        %v3428 = vpop.f32.mrf.mxu0
        %v3429 = vadd.f32 %v2758, %v3428
        %v3430 = vpop.f32.mrf.mxu0
        %3431 = vmatprep.mubr.f32.mxu0 0.0
        %v3432 = vand.u32 %v602, 4294901760
        %3433 = vmatmul.mubr.f32.gmra.mxu0 %v3432
        %v3434 = vpop.f32.mrf.mxu0
        %v3435 = vadd.f32 %v2766, %v3434
        %v3436 = vpop.f32.mrf.mxu0
        %3437 = vmatprep.mubr.f32.mxu0 0.0
        %v3438 = vand.u32 %v603, 4294901760
        %3439 = vmatmul.mubr.f32.gmra.mxu0 %v3438
        %v3440 = vpop.f32.mrf.mxu0
        %v3441 = vadd.f32 %v2774, %v3440
        %v3442 = vpop.f32.mrf.mxu0
        %3443 = vmatprep.mubr.f32.mxu0 0.0
        %v3444 = vand.u32 %v604, 4294901760
        %3445 = vmatmul.mubr.f32.gmra.mxu0 %v3444
        %v3446 = vpop.f32.mrf.mxu0
        %v3447 = vadd.f32 %v2782, %v3446
        %v3448 = vpop.f32.mrf.mxu0
        %3449 = vmatprep.mubr.f32.mxu0 0.0
        %v3450 = vand.u32 %v605, 4294901760
        %3451 = vmatmul.mubr.f32.gmra.mxu0 %v3450
        %v3452 = vpop.f32.mrf.mxu0
        %v3453 = vadd.f32 %v2790, %v3452
        %v3454 = vpop.f32.mrf.mxu0
        %3455 = vmatprep.mubr.f32.mxu0 0.0
        %v3456 = vand.u32 %v606, 4294901760
        %3457 = vmatmul.mubr.f32.gmra.mxu0 %v3456
        %v3458 = vpop.f32.mrf.mxu0
        %v3459 = vadd.f32 %v2798, %v3458
        %v3460 = vpop.f32.mrf.mxu0
        %3461 = vmatprep.mubr.f32.mxu0 0.0
        %v3462 = vand.u32 %v607, 4294901760
        %3463 = vmatmul.mubr.f32.gmra.mxu0 %v3462
        %v3464 = vpop.f32.mrf.mxu0
        %v3465 = vadd.f32 %v2806, %v3464
        %v3466 = vpop.f32.mrf.mxu0
        %3467 = vmatprep.mubr.f32.mxu0 0.0
        %v3468 = vand.u32 %v608, 4294901760
        %3469 = vmatmul.mubr.f32.gmra.mxu0 %v3468
        %v3470 = vpop.f32.mrf.mxu0
        %v3471 = vadd.f32 %v2814, %v3470
        %v3472 = vpop.f32.mrf.mxu0
        %3473 = vmatprep.mubr.f32.mxu0 0.0
        %v3474 = vand.u32 %v609, 4294901760
        %3475 = vmatmul.mubr.f32.gmra.mxu0 %v3474
        %v3476 = vpop.f32.mrf.mxu0
        %v3477 = vadd.f32 %v2822, %v3476
        %v3478 = vpop.f32.mrf.mxu0
        %3479 = vmatprep.mubr.f32.mxu0 0.0
        %v3480 = vand.u32 %v610, 4294901760
        %3481 = vmatmul.mubr.f32.gmra.mxu0 %v3480
        %v3482 = vpop.f32.mrf.mxu0
        %v3483 = vadd.f32 %v2830, %v3482
        %v3484 = vpop.f32.mrf.mxu0
        %3485 = vmatprep.mubr.f32.mxu0 0.0
        %v3486 = vand.u32 %v611, 4294901760
        %3487 = vmatmul.mubr.f32.gmra.mxu0 %v3486
        %v3488 = vpop.f32.mrf.mxu0
        %v3489 = vadd.f32 %v2838, %v3488
        %v3490 = vpop.f32.mrf.mxu0
        %3491 = vmatprep.mubr.f32.mxu0 0.0
        %v3492 = vand.u32 %v612, 4294901760
        %3493 = vmatmul.mubr.f32.gmra.mxu0 %v3492
        %v3494 = vpop.f32.mrf.mxu0
        %v3495 = vadd.f32 %v2846, %v3494
        %v3496 = vpop.f32.mrf.mxu0
        %3497 = vmatprep.mubr.f32.mxu0 0.0
        %v3498 = vand.u32 %v613, 4294901760
        %3499 = vmatmul.mubr.f32.gmra.mxu0 %v3498
        %v3500 = vpop.f32.mrf.mxu0
        %v3501 = vadd.f32 %v2854, %v3500
        %v3502 = vpop.f32.mrf.mxu0
        %3503 = vmatprep.mubr.f32.mxu0 0.0
        %v3504 = vand.u32 %v614, 4294901760
        %3505 = vmatmul.mubr.f32.gmra.mxu0 %v3504
        %v3506 = vpop.f32.mrf.mxu0
        %v3507 = vadd.f32 %v2862, %v3506
        %v3508 = vpop.f32.mrf.mxu0
        %3509 = vmatprep.mubr.f32.mxu0 0.0
        %v3510 = vand.u32 %v615, 4294901760
        %3511 = vmatmul.mubr.f32.gmra.mxu0 %v3510
        %v3512 = vpop.f32.mrf.mxu0
        %v3513 = vadd.f32 %v2870, %v3512
        %v3514 = vpop.f32.mrf.mxu0
        %3515 = vmatprep.mubr.f32.mxu0 0.0
        %v3516 = vand.u32 %v616, 4294901760
        %3517 = vmatmul.mubr.f32.gmra.mxu0 %v3516
        %v3518 = vpop.f32.mrf.mxu0
        %v3519 = vadd.f32 %v2878, %v3518
        %v3520 = vpop.f32.mrf.mxu0
        %3521 = vmatprep.mubr.f32.mxu0 0.0
        %v3522 = vand.u32 %v617, 4294901760
        %3523 = vmatmul.mubr.f32.gmra.mxu0 %v3522
        %v3524 = vpop.f32.mrf.mxu0
        %v3525 = vadd.f32 %v2886, %v3524
        %v3526 = vpop.f32.mrf.mxu0
        %3527 = vmatprep.mubr.f32.mxu0 0.0
        %v3528 = vand.u32 %v618, 4294901760
        %3529 = vmatmul.mubr.f32.gmra.mxu0 %v3528
        %v3530 = vpop.f32.mrf.mxu0
        %v3531 = vadd.f32 %v2894, %v3530
        %v3532 = vpop.f32.mrf.mxu0
        %3533 = vmatprep.mubr.f32.mxu0 0.0
        %v3534 = vand.u32 %v619, 4294901760
        %3535 = vmatmul.mubr.f32.gmra.mxu0 %v3534
        %v3536 = vpop.f32.mrf.mxu0
        %v3537 = vadd.f32 %v2902, %v3536
        %v3538 = vpop.f32.mrf.mxu0
        %3539 = vmatprep.mubr.f32.mxu0 0.0
        %v3540 = vand.u32 %v620, 4294901760
        %3541 = vmatmul.mubr.f32.gmra.mxu0 %v3540
        %v3542 = vpop.f32.mrf.mxu0
        %v3543 = vadd.f32 %v2910, %v3542
        %v3544 = vpop.f32.mrf.mxu0
        %3545 = vmatprep.mubr.f32.mxu0 0.0
        %v3546 = vand.u32 %v621, 4294901760
        %3547 = vmatmul.mubr.f32.gmra.mxu0 %v3546
        %v3548 = vpop.f32.mrf.mxu0
        %v3549 = vadd.f32 %v2918, %v3548
        %v3550 = vpop.f32.mrf.mxu0
        %3551 = vmatprep.mubr.f32.mxu0 0.0
        %v3552 = vand.u32 %v622, 4294901760
        %3553 = vmatmul.mubr.f32.gmra.mxu0 %v3552
        %v3554 = vpop.f32.mrf.mxu0
        %v3555 = vadd.f32 %v2926, %v3554
        %v3556 = vpop.f32.mrf.mxu0
        %3557 = vmatprep.mubr.f32.mxu0 0.0
        %v3558 = vand.u32 %v623, 4294901760
        %3559 = vmatmul.mubr.f32.gmra.mxu0 %v3558
        %v3560 = vpop.f32.mrf.mxu0
        %v3561 = vadd.f32 %v2934, %v3560
        %v3562 = vpop.f32.mrf.mxu0
        %3563 = vmatprep.mubr.f32.mxu0 0.0
        %v3564 = vand.u32 %v624, 4294901760
        %3565 = vmatmul.mubr.f32.gmra.mxu0 %v3564
        %v3566 = vpop.f32.mrf.mxu0
        %v3567 = vadd.f32 %v2942, %v3566
        %v3568 = vpop.f32.mrf.mxu0
        %3569 = vmatprep.mubr.f32.mxu0 0.0
        %v3570 = vand.u32 %v625, 4294901760
        %3571 = vmatmul.mubr.f32.gmra.mxu0 %v3570
        %v3572 = vpop.f32.mrf.mxu0
        %v3573 = vadd.f32 %v2950, %v3572
        %v3574 = vpop.f32.mrf.mxu0
        %3575 = vmatprep.mubr.f32.mxu0 0.0
        %v3576 = vand.u32 %v626, 4294901760
        %3577 = vmatmul.mubr.f32.gmra.mxu0 %v3576
        %v3578 = vpop.f32.mrf.mxu0
        %v3579 = vadd.f32 %v2958, %v3578
        %v3580 = vpop.f32.mrf.mxu0
        %3581 = vmatprep.mubr.f32.mxu0 0.0
        %v3582 = vand.u32 %v627, 4294901760
        %3583 = vmatmul.mubr.f32.gmra.mxu0 %v3582
        %v3584 = vpop.f32.mrf.mxu0
        %v3585 = vadd.f32 %v2966, %v3584
        %v3586 = vpop.f32.mrf.mxu0
        %3587 = vmatprep.mubr.f32.mxu0 0.0
        %v3588 = vand.u32 %v628, 4294901760
        %3589 = vmatmul.mubr.f32.gmra.mxu0 %v3588
        %v3590 = vpop.f32.mrf.mxu0
        %v3591 = vadd.f32 %v2974, %v3590
        %v3592 = vpop.f32.mrf.mxu0
        %3593 = vmatprep.mubr.f32.mxu0 0.0
        %v3594 = vand.u32 %v629, 4294901760
        %3595 = vmatmul.mubr.f32.gmra.mxu0 %v3594
        %v3596 = vpop.f32.mrf.mxu0
        %v3597 = vadd.f32 %v2982, %v3596
        %v3598 = vpop.f32.mrf.mxu0
        %3599 = vmatprep.mubr.f32.mxu0 0.0
        %v3600 = vand.u32 %v630, 4294901760
        %3601 = vmatmul.mubr.f32.gmra.mxu0 %v3600
        %v3602 = vpop.f32.mrf.mxu0
        %v3603 = vadd.f32 %v2990, %v3602
        %v3604 = vpop.f32.mrf.mxu0
        %3605 = vmatprep.mubr.f32.mxu0 0.0
        %v3606 = vand.u32 %v631, 4294901760
        %3607 = vmatmul.mubr.f32.gmra.mxu0 %v3606
        %v3608 = vpop.f32.mrf.mxu0
        %v3609 = vadd.f32 %v2998, %v3608
        %v3610 = vpop.f32.mrf.mxu0
        %3611 = vmatprep.mubr.f32.mxu0 0.0
        %v3612 = vand.u32 %v632, 4294901760
        %3613 = vmatmul.mubr.f32.gmra.mxu0 %v3612
        %v3614 = vpop.f32.mrf.mxu0
        %v3615 = vadd.f32 %v3006, %v3614
        %v3616 = vpop.f32.mrf.mxu0
        %3617 = vmatprep.mubr.f32.mxu0 0.0
        %v3618 = vand.u32 %v633, 4294901760
        %3619 = vmatmul.mubr.f32.gmra.mxu0 %v3618
        %v3620 = vpop.f32.mrf.mxu0
        %v3621 = vadd.f32 %v3014, %v3620
        %v3622 = vpop.f32.mrf.mxu0
        %3623 = vmatprep.mubr.f32.mxu0 0.0
        %v3624 = vand.u32 %v634, 4294901760
        %3625 = vmatmul.mubr.f32.gmra.mxu0 %v3624
        %v3626 = vpop.f32.mrf.mxu0
        %v3627 = vadd.f32 %v3022, %v3626
        %v3628 = vpop.f32.mrf.mxu0
        %3629 = vmatprep.mubr.f32.mxu0 0.0
        %v3630 = vand.u32 %v635, 4294901760
        %3631 = vmatmul.mubr.f32.gmra.mxu0 %v3630
        %v3632 = vpop.f32.mrf.mxu0
        %v3633 = vadd.f32 %v3030, %v3632
        %v3634 = vpop.f32.mrf.mxu0
        %3635 = vmatprep.mubr.f32.mxu0 0.0
        %v3636 = vand.u32 %v636, 4294901760
        %3637 = vmatmul.mubr.f32.gmra.mxu0 %v3636
        %v3638 = vpop.f32.mrf.mxu0
        %v3639 = vadd.f32 %v3038, %v3638
        %v3640 = vpop.f32.mrf.mxu0
        %3641 = vmatprep.mubr.f32.mxu0 0.0
        %v3642 = vand.u32 %v637, 4294901760
        %3643 = vmatmul.mubr.f32.gmra.mxu0 %v3642
        %v3644 = vpop.f32.mrf.mxu0
        %v3645 = vadd.f32 %v3046, %v3644
        %v3646 = vpop.f32.mrf.mxu0
        %3647 = vmatprep.mubr.f32.mxu0 0.0
        %v3648 = vand.u32 %v638, 4294901760
        %3649 = vmatmul.mubr.f32.gmra.mxu0 %v3648
        %v3650 = vpop.f32.mrf.mxu0
        %v3651 = vadd.f32 %v3054, %v3650
        %v3652 = vpop.f32.mrf.mxu0
        %3653 = vmatprep.mubr.f32.mxu0 0.0
        %v3654 = vand.u32 %v639, 4294901760
        %3655 = vmatmul.mubr.f32.gmra.mxu0 %v3654
        %v3656 = vpop.f32.mrf.mxu0
        %v3657 = vadd.f32 %v3062, %v3656
        %v3658 = vpop.f32.mrf.mxu0
        %3659 = vmatprep.mubr.f32.mxu0 0.0
        %v3660 = vand.u32 %v640, 4294901760
        %3661 = vmatmul.mubr.f32.gmra.mxu0 %v3660
        %v3662 = vpop.f32.mrf.mxu0
        %v3663 = vadd.f32 %v3070, %v3662
        %v3664 = vpop.f32.mrf.mxu0
        %3665 = vmatprep.mubr.f32.mxu0 0.0
        %v3666 = vand.u32 %v641, 4294901760
        %3667 = vmatmul.mubr.f32.gmra.mxu0 %v3666
        %v3668 = vpop.f32.mrf.mxu0
        %v3669 = vadd.f32 %v3078, %v3668
        %v3670 = vpop.f32.mrf.mxu0
        %3671 = vmatprep.mubr.f32.mxu0 0.0
        %v3672 = vand.u32 %v642, 4294901760
        %3673 = vmatmul.mubr.f32.gmra.mxu0 %v3672
        %v3674 = vpop.f32.mrf.mxu0
        %v3675 = vadd.f32 %v3086, %v3674
        %v3676 = vpop.f32.mrf.mxu0
        %3677 = vmatprep.mubr.f32.mxu0 0.0
        %v3678 = vand.u32 %v643, 4294901760
        %3679 = vmatmul.mubr.f32.gmra.mxu0 %v3678
        %v3680 = vpop.f32.mrf.mxu0
        %v3681 = vadd.f32 %v3094, %v3680
        %v3682 = vpop.f32.mrf.mxu0
        %3683 = vmatprep.mubr.f32.mxu0 0.0
        %v3684 = vand.u32 %v644, 4294901760
        %3685 = vmatmul.mubr.f32.gmra.mxu0 %v3684
        %v3686 = vpop.f32.mrf.mxu0
        %v3687 = vadd.f32 %v3102, %v3686
        %v3688 = vpop.f32.mrf.mxu0
        %3689 = vmatprep.mubr.f32.mxu0 0.0
        %v3690 = vand.u32 %v645, 4294901760
        %3691 = vmatmul.mubr.f32.gmra.mxu0 %v3690
        %v3692 = vpop.f32.mrf.mxu0
        %v3693 = vadd.f32 %v3110, %v3692
        %v3694 = vpop.f32.mrf.mxu0
        %3695 = vmatprep.mubr.f32.mxu0 0.0
        %v3696 = vand.u32 %v646, 4294901760
        %3697 = vmatmul.mubr.f32.gmra.mxu0 %v3696
        %v3698 = vpop.f32.mrf.mxu0
        %v3699 = vadd.f32 %v3118, %v3698
        %v3700 = vpop.f32.mrf.mxu0
        %3701 = vmatprep.mubr.f32.mxu0 0.0
        %v3702 = vand.u32 %v647, 4294901760
        %3703 = vmatmul.mubr.f32.gmra.mxu0 %v3702
        %v3704 = vpop.f32.mrf.mxu0
        %v3705 = vadd.f32 %v3126, %v3704
        %v3706 = vpop.f32.mrf.mxu0
        %3707 = vmatprep.mubr.f32.mxu0 0.0
        %v3708 = vand.u32 %v648, 4294901760
        %3709 = vmatmul.mubr.f32.gmra.mxu0 %v3708
        %v3710 = vpop.f32.mrf.mxu0
        %v3711 = vadd.f32 %v3134, %v3710
        %v3712 = vpop.f32.mrf.mxu0
        %3713 = vmatprep.mubr.f32.mxu0 0.0
        %v3714 = vand.u32 %v649, 4294901760
        %3715 = vmatmul.mubr.f32.gmra.mxu0 %v3714
        %v3716 = vpop.f32.mrf.mxu0
        %v3717 = vadd.f32 %v3142, %v3716
        %v3718 = vpop.f32.mrf.mxu0
        %3719 = vmatprep.mubr.f32.mxu0 0.0
        %v3720 = vand.u32 %v650, 4294901760
        %3721 = vmatmul.mubr.f32.gmra.mxu0 %v3720
        %v3722 = vpop.f32.mrf.mxu0
        %v3723 = vadd.f32 %v3150, %v3722
        %v3724 = vpop.f32.mrf.mxu0
        %3725 = vmatprep.mubr.f32.mxu0 0.0
        %v3726 = vand.u32 %v651, 4294901760
        %3727 = vmatmul.mubr.f32.gmra.mxu0 %v3726
        %v3728 = vpop.f32.mrf.mxu0
        %v3729 = vadd.f32 %v3158, %v3728
        %v3730 = vpop.f32.mrf.mxu0
        %3731 = vmatprep.mubr.f32.mxu0 0.0
        %v3732 = vand.u32 %v652, 4294901760
        %3733 = vmatmul.mubr.f32.gmra.mxu0 %v3732
        %v3734 = vpop.f32.mrf.mxu0
        %v3735 = vadd.f32 %v3166, %v3734
        %v3736 = vpop.f32.mrf.mxu0
        %3737 = vmatprep.mubr.f32.mxu0 0.0
        %v3738 = vand.u32 %v653, 4294901760
        %3739 = vmatmul.mubr.f32.gmra.mxu0 %v3738
        %v3740 = vpop.f32.mrf.mxu0
        %v3741 = vadd.f32 %v3174, %v3740
        %v3742 = vpop.f32.mrf.mxu0
        %3743 = vmatprep.mubr.f32.mxu0 0.0
        %v3744 = vand.u32 %v654, 4294901760
        %3745 = vmatmul.mubr.f32.gmra.mxu0 %v3744
        %v3746 = vpop.f32.mrf.mxu0
        %v3747 = vadd.f32 %v3182, %v3746
        %v3748 = vpop.f32.mrf.mxu0
        %3749 = vmatprep.mubr.f32.mxu0 0.0
        %v3750 = vand.u32 %v655, 4294901760
        %3751 = vmatmul.mubr.f32.gmra.mxu0 %v3750
        %v3752 = vpop.f32.mrf.mxu0
        %v3753 = vadd.f32 %v3190, %v3752
        %v3754 = vpop.f32.mrf.mxu0
        %3755 = vmatprep.mubr.f32.mxu0 0.0
        %v3756 = vand.u32 %v656, 4294901760
        %3757 = vmatmul.mubr.f32.gmra.mxu0 %v3756
        %v3758 = vpop.f32.mrf.mxu0
        %v3759 = vadd.f32 %v3198, %v3758
        %v3760 = vpop.f32.mrf.mxu0
        %3761 = vmatprep.mubr.f32.mxu0 0.0
        %v3762 = vand.u32 %v657, 4294901760
        %3763 = vmatmul.mubr.f32.gmra.mxu0 %v3762
        %v3764 = vpop.f32.mrf.mxu0
        %v3765 = vadd.f32 %v3206, %v3764
        %v3766 = vpop.f32.mrf.mxu0
        %3767 = vmatprep.mubr.f32.mxu0 0.0
        %v3768 = vand.u32 %v658, 4294901760
        %3769 = vmatmul.mubr.f32.gmra.mxu0 %v3768
        %v3770 = vpop.f32.mrf.mxu0
        %v3771 = vadd.f32 %v3214, %v3770
        %v3772 = vpop.f32.mrf.mxu0
        %3773 = vmatprep.mubr.f32.mxu0 0.0
        %v3774 = vand.u32 %v659, 4294901760
        %3775 = vmatmul.mubr.f32.gmra.mxu0 %v3774
        %v3776 = vpop.f32.mrf.mxu0
        %v3777 = vadd.f32 %v3222, %v3776
        %v3778 = vpop.f32.mrf.mxu0
        %3779 = vmatprep.mubr.f32.mxu0 0.0
        %v3780 = vand.u32 %v660, 4294901760
        %3781 = vmatmul.mubr.f32.gmra.mxu0 %v3780
        %v3782 = vpop.f32.mrf.mxu0
        %v3783 = vadd.f32 %v3230, %v3782
        %v3784 = vpop.f32.mrf.mxu0
        %3785 = vmatprep.mubr.f32.mxu0 0.0
        %v3786 = vand.u32 %v661, 4294901760
        %3787 = vmatmul.mubr.f32.gmra.mxu0 %v3786
        %v3788 = vpop.f32.mrf.mxu0
        %v3789 = vadd.f32 %v3238, %v3788
        %v3790 = vpop.f32.mrf.mxu0
        %3791 = vmatprep.mubr.f32.mxu0 0.0
        %v3792 = vand.u32 %v662, 4294901760
        %3793 = vmatmul.mubr.f32.gmra.mxu0 %v3792
        %v3794 = vpop.f32.mrf.mxu0
        %v3795 = vadd.f32 %v3246, %v3794
        %v3796 = vpop.f32.mrf.mxu0
        %3797 = vmatprep.mubr.f32.mxu0 0.0
        %v3798 = vand.u32 %v663, 4294901760
        %3799 = vmatmul.mubr.f32.gmra.mxu0 %v3798
        %v3800 = vpop.f32.mrf.mxu0
        %v3801 = vadd.f32 %v3254, %v3800
        %v3802 = vpop.f32.mrf.mxu0
        %3803 = vmatprep.mubr.f32.mxu0 0.0
        %v3804 = vand.u32 %v664, 4294901760
        %3805 = vmatmul.mubr.f32.gmra.mxu0 %v3804
        %v3806 = vpop.f32.mrf.mxu0
        %v3807 = vadd.f32 %v3262, %v3806
        %v3808 = vpop.f32.mrf.mxu0
        %3809 = vmatprep.mubr.f32.mxu0 0.0
        %v3810 = vand.u32 %v665, 4294901760
        %3811 = vmatmul.mubr.f32.gmra.mxu0 %v3810
        %v3812 = vpop.f32.mrf.mxu0
        %v3813 = vadd.f32 %v3270, %v3812
        %v3814 = vpop.f32.mrf.mxu0
        %3815 = vmatprep.mubr.f32.mxu0 0.0
        %v3816 = vand.u32 %v666, 4294901760
        %3817 = vmatmul.mubr.f32.gmra.mxu0 %v3816
        %v3818 = vpop.f32.mrf.mxu0
        %v3819 = vadd.f32 %v3278, %v3818
        %v3820 = vpop.f32.mrf.mxu0
        %3821 = vmatprep.mubr.f32.mxu0 0.0
        %v3822 = vand.u32 %v667, 4294901760
        %3823 = vmatmul.mubr.f32.gmra.mxu0 %v3822
        %v3824 = vpop.f32.mrf.mxu0
        %v3825 = vadd.f32 %v3286, %v3824
        %v3826 = vpop.f32.mrf.mxu0
        %3827 = vdwg.mxu0
        %3828 = vmatprep.subr.mxu0 0.0
        %v3829 = vand.u32 %v683, 4294901760
        %3830 = vmatpush1.msra.mxu0 %v3829
        %3831 = vmatprep.subr.mxu0 0.0
        %v3832 = vand.u32 %v682, 4294901760
        %3833 = vmatpush1.msra.mxu0 %v3832
        %3834 = vmatprep.subr.mxu0 0.0
        %v3835 = vand.u32 %v681, 4294901760
        %3836 = vmatpush1.msra.mxu0 %v3835
        %3837 = vmatprep.subr.mxu0 0.0
        %v3838 = vand.u32 %v680, 4294901760
        %3839 = vmatpush1.msra.mxu0 %v3838
        %3840 = vmatprep.subr.mxu0 0.0
        %v3841 = vand.u32 %v679, 4294901760
        %3842 = vmatpush1.msra.mxu0 %v3841
        %3843 = vmatprep.subr.mxu0 0.0
        %v3844 = vand.u32 %v678, 4294901760
        %3845 = vmatpush1.msra.mxu0 %v3844
        %3846 = vmatprep.subr.mxu0 0.0
        %v3847 = vand.u32 %v677, 4294901760
        %3848 = vmatpush1.msra.mxu0 %v3847
        %3849 = vmatprep.subr.mxu0 0.0
        %v3850 = vand.u32 %v676, 4294901760
        %3851 = vmatpush1.msra.mxu0 %v3850
        %3852 = vmatprep.subr.mxu0 0.0
        %v3853 = vand.u32 %v675, 4294901760
        %3854 = vmatpush1.msra.mxu0 %v3853
        %3855 = vmatprep.subr.mxu0 0.0
        %v3856 = vand.u32 %v674, 4294901760
        %3857 = vmatpush1.msra.mxu0 %v3856
        %3858 = vmatprep.subr.mxu0 0.0
        %v3859 = vand.u32 %v673, 4294901760
        %3860 = vmatpush1.msra.mxu0 %v3859
        %3861 = vmatprep.subr.mxu0 0.0
        %v3862 = vand.u32 %v672, 4294901760
        %3863 = vmatpush1.msra.mxu0 %v3862
        %3864 = vmatprep.subr.mxu0 0.0
        %v3865 = vand.u32 %v671, 4294901760
        %3866 = vmatpush1.msra.mxu0 %v3865
        %3867 = vmatprep.subr.mxu0 0.0
        %v3868 = vand.u32 %v670, 4294901760
        %3869 = vmatpush1.msra.mxu0 %v3868
        %3870 = vmatprep.subr.mxu0 0.0
        %v3871 = vand.u32 %v669, 4294901760
        %3872 = vmatpush1.msra.mxu0 %v3871
        %3873 = vmatprep.subr.mxu0 0.0
        %v3874 = vand.u32 %v668, 4294901760
        %3875 = vmatpush1.msra.mxu0 %v3874
        %3876 = vmatprep.subr.mxu0 0.0
        %3877 = vmatpush2.msra.mxu0 0.0
        %3878 = vmatprep.subr.mxu0 0.0
        %3879 = vmatpush2.msra.mxu0 0.0
        %3880 = vmatprep.subr.mxu0 0.0
        %3881 = vmatpush2.msra.mxu0 0.0
        %3882 = vmatprep.subr.mxu0 0.0
        %3883 = vmatpush2.msra.mxu0 0.0
        %3884 = vmatprep.subr.mxu0 0.0
        %3885 = vmatpush2.msra.mxu0 0.0
        %3886 = vmatprep.subr.mxu0 0.0
        %3887 = vmatpush2.msra.mxu0 0.0
        %3888 = vmatprep.subr.mxu0 0.0
        %3889 = vmatpush2.msra.mxu0 0.0
        %3890 = vmatprep.subr.mxu0 0.0
        %3891 = vmatpush2.msra.mxu0 0.0
        %3892 = vmatprep.subr.mxu0 0.0
        %3893 = vmatpush2.msra.mxu0 0.0
        %3894 = vmatprep.subr.mxu0 0.0
        %3895 = vmatpush2.msra.mxu0 0.0
        %3896 = vmatprep.subr.mxu0 0.0
        %3897 = vmatpush2.msra.mxu0 0.0
        %3898 = vmatprep.subr.mxu0 0.0
        %3899 = vmatpush2.msra.mxu0 0.0
        %3900 = vmatprep.subr.mxu0 0.0
        %3901 = vmatpush2.msra.mxu0 0.0
        %3902 = vmatprep.subr.mxu0 0.0
        %3903 = vmatpush2.msra.mxu0 0.0
        %3904 = vmatprep.subr.mxu0 0.0
        %3905 = vmatpush2.msra.mxu0 0.0
        %3906 = vmatprep.subr.mxu0 0.0
        %3907 = vmatpush2.msra.mxu0 0.0
        %3908 = vmatprep.mubr.f32.mxu0 0.0
        %v3909 = vand.u32 %v597, 4294901760
        %3910 = vmatmul.mubr.f32.gmra.mxu0 %v3909
        %v3911 = vpop.f32.mrf.mxu0
        %v3912 = vadd.f32 %v3405, %v3911
        %v3913 = vpop.f32.mrf.mxu0
        %3914 = vmatprep.mubr.f32.mxu0 0.0
        %v3915 = vand.u32 %v598, 4294901760
        %3916 = vmatmul.mubr.f32.gmra.mxu0 %v3915
        %v3917 = vpop.f32.mrf.mxu0
        %v3918 = vadd.f32 %v3411, %v3917
        %v3919 = vpop.f32.mrf.mxu0
        %3920 = vmatprep.mubr.f32.mxu0 0.0
        %v3921 = vand.u32 %v599, 4294901760
        %3922 = vmatmul.mubr.f32.gmra.mxu0 %v3921
        %v3923 = vpop.f32.mrf.mxu0
        %v3924 = vadd.f32 %v3417, %v3923
        %v3925 = vpop.f32.mrf.mxu0
        %3926 = vmatprep.mubr.f32.mxu0 0.0
        %v3927 = vand.u32 %v600, 4294901760
        %3928 = vmatmul.mubr.f32.gmra.mxu0 %v3927
        %v3929 = vpop.f32.mrf.mxu0
        %v3930 = vadd.f32 %v3423, %v3929
        %v3931 = vpop.f32.mrf.mxu0
        %3932 = vmatprep.mubr.f32.mxu0 0.0
        %v3933 = vand.u32 %v601, 4294901760
        %3934 = vmatmul.mubr.f32.gmra.mxu0 %v3933
        %v3935 = vpop.f32.mrf.mxu0
        %v3936 = vadd.f32 %v3429, %v3935
        %v3937 = vpop.f32.mrf.mxu0
        %3938 = vmatprep.mubr.f32.mxu0 0.0
        %v3939 = vand.u32 %v602, 4294901760
        %3940 = vmatmul.mubr.f32.gmra.mxu0 %v3939
        %v3941 = vpop.f32.mrf.mxu0
        %v3942 = vadd.f32 %v3435, %v3941
        %v3943 = vpop.f32.mrf.mxu0
        %3944 = vmatprep.mubr.f32.mxu0 0.0
        %v3945 = vand.u32 %v603, 4294901760
        %3946 = vmatmul.mubr.f32.gmra.mxu0 %v3945
        %v3947 = vpop.f32.mrf.mxu0
        %v3948 = vadd.f32 %v3441, %v3947
        %v3949 = vpop.f32.mrf.mxu0
        %3950 = vmatprep.mubr.f32.mxu0 0.0
        %v3951 = vand.u32 %v604, 4294901760
        %3952 = vmatmul.mubr.f32.gmra.mxu0 %v3951
        %v3953 = vpop.f32.mrf.mxu0
        %v3954 = vadd.f32 %v3447, %v3953
        %v3955 = vpop.f32.mrf.mxu0
        %3956 = vmatprep.mubr.f32.mxu0 0.0
        %v3957 = vand.u32 %v605, 4294901760
        %3958 = vmatmul.mubr.f32.gmra.mxu0 %v3957
        %v3959 = vpop.f32.mrf.mxu0
        %v3960 = vadd.f32 %v3453, %v3959
        %v3961 = vpop.f32.mrf.mxu0
        %3962 = vmatprep.mubr.f32.mxu0 0.0
        %v3963 = vand.u32 %v606, 4294901760
        %3964 = vmatmul.mubr.f32.gmra.mxu0 %v3963
        %v3965 = vpop.f32.mrf.mxu0
        %v3966 = vadd.f32 %v3459, %v3965
        %v3967 = vpop.f32.mrf.mxu0
        %3968 = vmatprep.mubr.f32.mxu0 0.0
        %v3969 = vand.u32 %v607, 4294901760
        %3970 = vmatmul.mubr.f32.gmra.mxu0 %v3969
        %v3971 = vpop.f32.mrf.mxu0
        %v3972 = vadd.f32 %v3465, %v3971
        %v3973 = vpop.f32.mrf.mxu0
        %3974 = vmatprep.mubr.f32.mxu0 0.0
        %v3975 = vand.u32 %v608, 4294901760
        %3976 = vmatmul.mubr.f32.gmra.mxu0 %v3975
        %v3977 = vpop.f32.mrf.mxu0
        %v3978 = vadd.f32 %v3471, %v3977
        %v3979 = vpop.f32.mrf.mxu0
        %3980 = vmatprep.mubr.f32.mxu0 0.0
        %v3981 = vand.u32 %v609, 4294901760
        %3982 = vmatmul.mubr.f32.gmra.mxu0 %v3981
        %v3983 = vpop.f32.mrf.mxu0
        %v3984 = vadd.f32 %v3477, %v3983
        %v3985 = vpop.f32.mrf.mxu0
        %3986 = vmatprep.mubr.f32.mxu0 0.0
        %v3987 = vand.u32 %v610, 4294901760
        %3988 = vmatmul.mubr.f32.gmra.mxu0 %v3987
        %v3989 = vpop.f32.mrf.mxu0
        %v3990 = vadd.f32 %v3483, %v3989
        %v3991 = vpop.f32.mrf.mxu0
        %3992 = vmatprep.mubr.f32.mxu0 0.0
        %v3993 = vand.u32 %v611, 4294901760
        %3994 = vmatmul.mubr.f32.gmra.mxu0 %v3993
        %v3995 = vpop.f32.mrf.mxu0
        %v3996 = vadd.f32 %v3489, %v3995
        %v3997 = vpop.f32.mrf.mxu0
        %3998 = vmatprep.mubr.f32.mxu0 0.0
        %v3999 = vand.u32 %v612, 4294901760
        %4000 = vmatmul.mubr.f32.gmra.mxu0 %v3999
        %v4001 = vpop.f32.mrf.mxu0
        %v4002 = vadd.f32 %v3495, %v4001
        %v4003 = vpop.f32.mrf.mxu0
        %4004 = vmatprep.mubr.f32.mxu0 0.0
        %v4005 = vand.u32 %v613, 4294901760
        %4006 = vmatmul.mubr.f32.gmra.mxu0 %v4005
        %v4007 = vpop.f32.mrf.mxu0
        %v4008 = vadd.f32 %v3501, %v4007
        %v4009 = vpop.f32.mrf.mxu0
        %4010 = vmatprep.mubr.f32.mxu0 0.0
        %v4011 = vand.u32 %v614, 4294901760
        %4012 = vmatmul.mubr.f32.gmra.mxu0 %v4011
        %v4013 = vpop.f32.mrf.mxu0
        %v4014 = vadd.f32 %v3507, %v4013
        %v4015 = vpop.f32.mrf.mxu0
        %4016 = vmatprep.mubr.f32.mxu0 0.0
        %v4017 = vand.u32 %v615, 4294901760
        %4018 = vmatmul.mubr.f32.gmra.mxu0 %v4017
        %v4019 = vpop.f32.mrf.mxu0
        %v4020 = vadd.f32 %v3513, %v4019
        %v4021 = vpop.f32.mrf.mxu0
        %4022 = vmatprep.mubr.f32.mxu0 0.0
        %v4023 = vand.u32 %v616, 4294901760
        %4024 = vmatmul.mubr.f32.gmra.mxu0 %v4023
        %v4025 = vpop.f32.mrf.mxu0
        %v4026 = vadd.f32 %v3519, %v4025
        %v4027 = vpop.f32.mrf.mxu0
        %4028 = vmatprep.mubr.f32.mxu0 0.0
        %v4029 = vand.u32 %v617, 4294901760
        %4030 = vmatmul.mubr.f32.gmra.mxu0 %v4029
        %v4031 = vpop.f32.mrf.mxu0
        %v4032 = vadd.f32 %v3525, %v4031
        %v4033 = vpop.f32.mrf.mxu0
        %4034 = vmatprep.mubr.f32.mxu0 0.0
        %v4035 = vand.u32 %v618, 4294901760
        %4036 = vmatmul.mubr.f32.gmra.mxu0 %v4035
        %v4037 = vpop.f32.mrf.mxu0
        %v4038 = vadd.f32 %v3531, %v4037
        %v4039 = vpop.f32.mrf.mxu0
        %4040 = vmatprep.mubr.f32.mxu0 0.0
        %v4041 = vand.u32 %v619, 4294901760
        %4042 = vmatmul.mubr.f32.gmra.mxu0 %v4041
        %v4043 = vpop.f32.mrf.mxu0
        %v4044 = vadd.f32 %v3537, %v4043
        %v4045 = vpop.f32.mrf.mxu0
        %4046 = vmatprep.mubr.f32.mxu0 0.0
        %v4047 = vand.u32 %v620, 4294901760
        %4048 = vmatmul.mubr.f32.gmra.mxu0 %v4047
        %v4049 = vpop.f32.mrf.mxu0
        %v4050 = vadd.f32 %v3543, %v4049
        %v4051 = vpop.f32.mrf.mxu0
        %4052 = vmatprep.mubr.f32.mxu0 0.0
        %v4053 = vand.u32 %v621, 4294901760
        %4054 = vmatmul.mubr.f32.gmra.mxu0 %v4053
        %v4055 = vpop.f32.mrf.mxu0
        %v4056 = vadd.f32 %v3549, %v4055
        %v4057 = vpop.f32.mrf.mxu0
        %4058 = vmatprep.mubr.f32.mxu0 0.0
        %v4059 = vand.u32 %v622, 4294901760
        %4060 = vmatmul.mubr.f32.gmra.mxu0 %v4059
        %v4061 = vpop.f32.mrf.mxu0
        %v4062 = vadd.f32 %v3555, %v4061
        %v4063 = vpop.f32.mrf.mxu0
        %4064 = vmatprep.mubr.f32.mxu0 0.0
        %v4065 = vand.u32 %v623, 4294901760
        %4066 = vmatmul.mubr.f32.gmra.mxu0 %v4065
        %v4067 = vpop.f32.mrf.mxu0
        %v4068 = vadd.f32 %v3561, %v4067
        %v4069 = vpop.f32.mrf.mxu0
        %4070 = vmatprep.mubr.f32.mxu0 0.0
        %v4071 = vand.u32 %v624, 4294901760
        %4072 = vmatmul.mubr.f32.gmra.mxu0 %v4071
        %v4073 = vpop.f32.mrf.mxu0
        %v4074 = vadd.f32 %v3567, %v4073
        %v4075 = vpop.f32.mrf.mxu0
        %4076 = vmatprep.mubr.f32.mxu0 0.0
        %v4077 = vand.u32 %v625, 4294901760
        %4078 = vmatmul.mubr.f32.gmra.mxu0 %v4077
        %v4079 = vpop.f32.mrf.mxu0
        %v4080 = vadd.f32 %v3573, %v4079
        %v4081 = vpop.f32.mrf.mxu0
        %4082 = vmatprep.mubr.f32.mxu0 0.0
        %v4083 = vand.u32 %v626, 4294901760
        %4084 = vmatmul.mubr.f32.gmra.mxu0 %v4083
        %v4085 = vpop.f32.mrf.mxu0
        %v4086 = vadd.f32 %v3579, %v4085
        %v4087 = vpop.f32.mrf.mxu0
        %4088 = vmatprep.mubr.f32.mxu0 0.0
        %v4089 = vand.u32 %v627, 4294901760
        %4090 = vmatmul.mubr.f32.gmra.mxu0 %v4089
        %v4091 = vpop.f32.mrf.mxu0
        %v4092 = vadd.f32 %v3585, %v4091
        %v4093 = vpop.f32.mrf.mxu0
        %4094 = vmatprep.mubr.f32.mxu0 0.0
        %v4095 = vand.u32 %v628, 4294901760
        %4096 = vmatmul.mubr.f32.gmra.mxu0 %v4095
        %v4097 = vpop.f32.mrf.mxu0
        %v4098 = vadd.f32 %v3591, %v4097
        %v4099 = vpop.f32.mrf.mxu0
        %4100 = vmatprep.mubr.f32.mxu0 0.0
        %v4101 = vand.u32 %v629, 4294901760
        %4102 = vmatmul.mubr.f32.gmra.mxu0 %v4101
        %v4103 = vpop.f32.mrf.mxu0
        %v4104 = vadd.f32 %v3597, %v4103
        %v4105 = vpop.f32.mrf.mxu0
        %4106 = vmatprep.mubr.f32.mxu0 0.0
        %v4107 = vand.u32 %v630, 4294901760
        %4108 = vmatmul.mubr.f32.gmra.mxu0 %v4107
        %v4109 = vpop.f32.mrf.mxu0
        %v4110 = vadd.f32 %v3603, %v4109
        %v4111 = vpop.f32.mrf.mxu0
        %4112 = vmatprep.mubr.f32.mxu0 0.0
        %v4113 = vand.u32 %v631, 4294901760
        %4114 = vmatmul.mubr.f32.gmra.mxu0 %v4113
        %v4115 = vpop.f32.mrf.mxu0
        %v4116 = vadd.f32 %v3609, %v4115
        %v4117 = vpop.f32.mrf.mxu0
        %4118 = vmatprep.mubr.f32.mxu0 0.0
        %v4119 = vand.u32 %v632, 4294901760
        %4120 = vmatmul.mubr.f32.gmra.mxu0 %v4119
        %v4121 = vpop.f32.mrf.mxu0
        %v4122 = vadd.f32 %v3615, %v4121
        %v4123 = vpop.f32.mrf.mxu0
        %4124 = vmatprep.mubr.f32.mxu0 0.0
        %v4125 = vand.u32 %v633, 4294901760
        %4126 = vmatmul.mubr.f32.gmra.mxu0 %v4125
        %v4127 = vpop.f32.mrf.mxu0
        %v4128 = vadd.f32 %v3621, %v4127
        %v4129 = vpop.f32.mrf.mxu0
        %4130 = vmatprep.mubr.f32.mxu0 0.0
        %v4131 = vand.u32 %v634, 4294901760
        %4132 = vmatmul.mubr.f32.gmra.mxu0 %v4131
        %v4133 = vpop.f32.mrf.mxu0
        %v4134 = vadd.f32 %v3627, %v4133
        %v4135 = vpop.f32.mrf.mxu0
        %4136 = vmatprep.mubr.f32.mxu0 0.0
        %v4137 = vand.u32 %v635, 4294901760
        %4138 = vmatmul.mubr.f32.gmra.mxu0 %v4137
        %v4139 = vpop.f32.mrf.mxu0
        %v4140 = vadd.f32 %v3633, %v4139
        %v4141 = vpop.f32.mrf.mxu0
        %4142 = vmatprep.mubr.f32.mxu0 0.0
        %v4143 = vand.u32 %v636, 4294901760
        %4144 = vmatmul.mubr.f32.gmra.mxu0 %v4143
        %v4145 = vpop.f32.mrf.mxu0
        %v4146 = vadd.f32 %v3639, %v4145
        %v4147 = vpop.f32.mrf.mxu0
        %4148 = vmatprep.mubr.f32.mxu0 0.0
        %v4149 = vand.u32 %v637, 4294901760
        %4150 = vmatmul.mubr.f32.gmra.mxu0 %v4149
        %v4151 = vpop.f32.mrf.mxu0
        %v4152 = vadd.f32 %v3645, %v4151
        %v4153 = vpop.f32.mrf.mxu0
        %4154 = vmatprep.mubr.f32.mxu0 0.0
        %v4155 = vand.u32 %v638, 4294901760
        %4156 = vmatmul.mubr.f32.gmra.mxu0 %v4155
        %v4157 = vpop.f32.mrf.mxu0
        %v4158 = vadd.f32 %v3651, %v4157
        %v4159 = vpop.f32.mrf.mxu0
        %4160 = vmatprep.mubr.f32.mxu0 0.0
        %v4161 = vand.u32 %v639, 4294901760
        %4162 = vmatmul.mubr.f32.gmra.mxu0 %v4161
        %v4163 = vpop.f32.mrf.mxu0
        %v4164 = vadd.f32 %v3657, %v4163
        %v4165 = vpop.f32.mrf.mxu0
        %4166 = vmatprep.mubr.f32.mxu0 0.0
        %v4167 = vand.u32 %v640, 4294901760
        %4168 = vmatmul.mubr.f32.gmra.mxu0 %v4167
        %v4169 = vpop.f32.mrf.mxu0
        %v4170 = vadd.f32 %v3663, %v4169
        %v4171 = vpop.f32.mrf.mxu0
        %4172 = vmatprep.mubr.f32.mxu0 0.0
        %v4173 = vand.u32 %v641, 4294901760
        %4174 = vmatmul.mubr.f32.gmra.mxu0 %v4173
        %v4175 = vpop.f32.mrf.mxu0
        %v4176 = vadd.f32 %v3669, %v4175
        %v4177 = vpop.f32.mrf.mxu0
        %4178 = vmatprep.mubr.f32.mxu0 0.0
        %v4179 = vand.u32 %v642, 4294901760
        %4180 = vmatmul.mubr.f32.gmra.mxu0 %v4179
        %v4181 = vpop.f32.mrf.mxu0
        %v4182 = vadd.f32 %v3675, %v4181
        %v4183 = vpop.f32.mrf.mxu0
        %4184 = vmatprep.mubr.f32.mxu0 0.0
        %v4185 = vand.u32 %v643, 4294901760
        %4186 = vmatmul.mubr.f32.gmra.mxu0 %v4185
        %v4187 = vpop.f32.mrf.mxu0
        %v4188 = vadd.f32 %v3681, %v4187
        %v4189 = vpop.f32.mrf.mxu0
        %4190 = vmatprep.mubr.f32.mxu0 0.0
        %v4191 = vand.u32 %v644, 4294901760
        %4192 = vmatmul.mubr.f32.gmra.mxu0 %v4191
        %v4193 = vpop.f32.mrf.mxu0
        %v4194 = vadd.f32 %v3687, %v4193
        %v4195 = vpop.f32.mrf.mxu0
        %4196 = vmatprep.mubr.f32.mxu0 0.0
        %v4197 = vand.u32 %v645, 4294901760
        %4198 = vmatmul.mubr.f32.gmra.mxu0 %v4197
        %v4199 = vpop.f32.mrf.mxu0
        %v4200 = vadd.f32 %v3693, %v4199
        %v4201 = vpop.f32.mrf.mxu0
        %4202 = vmatprep.mubr.f32.mxu0 0.0
        %v4203 = vand.u32 %v646, 4294901760
        %4204 = vmatmul.mubr.f32.gmra.mxu0 %v4203
        %v4205 = vpop.f32.mrf.mxu0
        %v4206 = vadd.f32 %v3699, %v4205
        %v4207 = vpop.f32.mrf.mxu0
        %4208 = vmatprep.mubr.f32.mxu0 0.0
        %v4209 = vand.u32 %v647, 4294901760
        %4210 = vmatmul.mubr.f32.gmra.mxu0 %v4209
        %v4211 = vpop.f32.mrf.mxu0
        %v4212 = vadd.f32 %v3705, %v4211
        %v4213 = vpop.f32.mrf.mxu0
        %4214 = vmatprep.mubr.f32.mxu0 0.0
        %v4215 = vand.u32 %v648, 4294901760
        %4216 = vmatmul.mubr.f32.gmra.mxu0 %v4215
        %v4217 = vpop.f32.mrf.mxu0
        %v4218 = vadd.f32 %v3711, %v4217
        %v4219 = vpop.f32.mrf.mxu0
        %4220 = vmatprep.mubr.f32.mxu0 0.0
        %v4221 = vand.u32 %v649, 4294901760
        %4222 = vmatmul.mubr.f32.gmra.mxu0 %v4221
        %v4223 = vpop.f32.mrf.mxu0
        %v4224 = vadd.f32 %v3717, %v4223
        %v4225 = vpop.f32.mrf.mxu0
        %4226 = vmatprep.mubr.f32.mxu0 0.0
        %v4227 = vand.u32 %v650, 4294901760
        %4228 = vmatmul.mubr.f32.gmra.mxu0 %v4227
        %v4229 = vpop.f32.mrf.mxu0
        %v4230 = vadd.f32 %v3723, %v4229
        %v4231 = vpop.f32.mrf.mxu0
        %4232 = vmatprep.mubr.f32.mxu0 0.0
        %v4233 = vand.u32 %v651, 4294901760
        %4234 = vmatmul.mubr.f32.gmra.mxu0 %v4233
        %v4235 = vpop.f32.mrf.mxu0
        %v4236 = vadd.f32 %v3729, %v4235
        %v4237 = vpop.f32.mrf.mxu0
        %4238 = vmatprep.mubr.f32.mxu0 0.0
        %v4239 = vand.u32 %v652, 4294901760
        %4240 = vmatmul.mubr.f32.gmra.mxu0 %v4239
        %v4241 = vpop.f32.mrf.mxu0
        %v4242 = vadd.f32 %v3735, %v4241
        %v4243 = vpop.f32.mrf.mxu0
        %4244 = vmatprep.mubr.f32.mxu0 0.0
        %v4245 = vand.u32 %v653, 4294901760
        %4246 = vmatmul.mubr.f32.gmra.mxu0 %v4245
        %v4247 = vpop.f32.mrf.mxu0
        %v4248 = vadd.f32 %v3741, %v4247
        %v4249 = vpop.f32.mrf.mxu0
        %4250 = vmatprep.mubr.f32.mxu0 0.0
        %v4251 = vand.u32 %v654, 4294901760
        %4252 = vmatmul.mubr.f32.gmra.mxu0 %v4251
        %v4253 = vpop.f32.mrf.mxu0
        %v4254 = vadd.f32 %v3747, %v4253
        %v4255 = vpop.f32.mrf.mxu0
        %4256 = vmatprep.mubr.f32.mxu0 0.0
        %v4257 = vand.u32 %v655, 4294901760
        %4258 = vmatmul.mubr.f32.gmra.mxu0 %v4257
        %v4259 = vpop.f32.mrf.mxu0
        %v4260 = vadd.f32 %v3753, %v4259
        %v4261 = vpop.f32.mrf.mxu0
        %4262 = vmatprep.mubr.f32.mxu0 0.0
        %v4263 = vand.u32 %v656, 4294901760
        %4264 = vmatmul.mubr.f32.gmra.mxu0 %v4263
        %v4265 = vpop.f32.mrf.mxu0
        %v4266 = vadd.f32 %v3759, %v4265
        %v4267 = vpop.f32.mrf.mxu0
        %4268 = vmatprep.mubr.f32.mxu0 0.0
        %v4269 = vand.u32 %v657, 4294901760
        %4270 = vmatmul.mubr.f32.gmra.mxu0 %v4269
        %v4271 = vpop.f32.mrf.mxu0
        %v4272 = vadd.f32 %v3765, %v4271
        %v4273 = vpop.f32.mrf.mxu0
        %4274 = vmatprep.mubr.f32.mxu0 0.0
        %v4275 = vand.u32 %v658, 4294901760
        %4276 = vmatmul.mubr.f32.gmra.mxu0 %v4275
        %v4277 = vpop.f32.mrf.mxu0
        %v4278 = vadd.f32 %v3771, %v4277
        %v4279 = vpop.f32.mrf.mxu0
        %4280 = vmatprep.mubr.f32.mxu0 0.0
        %v4281 = vand.u32 %v659, 4294901760
        %4282 = vmatmul.mubr.f32.gmra.mxu0 %v4281
        %v4283 = vpop.f32.mrf.mxu0
        %v4284 = vadd.f32 %v3777, %v4283
        %v4285 = vpop.f32.mrf.mxu0
        %4286 = vmatprep.mubr.f32.mxu0 0.0
        %v4287 = vand.u32 %v660, 4294901760
        %4288 = vmatmul.mubr.f32.gmra.mxu0 %v4287
        %v4289 = vpop.f32.mrf.mxu0
        %v4290 = vadd.f32 %v3783, %v4289
        %v4291 = vpop.f32.mrf.mxu0
        %4292 = vmatprep.mubr.f32.mxu0 0.0
        %v4293 = vand.u32 %v661, 4294901760
        %4294 = vmatmul.mubr.f32.gmra.mxu0 %v4293
        %v4295 = vpop.f32.mrf.mxu0
        %v4296 = vadd.f32 %v3789, %v4295
        %v4297 = vpop.f32.mrf.mxu0
        %4298 = vmatprep.mubr.f32.mxu0 0.0
        %v4299 = vand.u32 %v662, 4294901760
        %4300 = vmatmul.mubr.f32.gmra.mxu0 %v4299
        %v4301 = vpop.f32.mrf.mxu0
        %v4302 = vadd.f32 %v3795, %v4301
        %v4303 = vpop.f32.mrf.mxu0
        %4304 = vmatprep.mubr.f32.mxu0 0.0
        %v4305 = vand.u32 %v663, 4294901760
        %4306 = vmatmul.mubr.f32.gmra.mxu0 %v4305
        %v4307 = vpop.f32.mrf.mxu0
        %v4308 = vadd.f32 %v3801, %v4307
        %v4309 = vpop.f32.mrf.mxu0
        %4310 = vmatprep.mubr.f32.mxu0 0.0
        %v4311 = vand.u32 %v664, 4294901760
        %4312 = vmatmul.mubr.f32.gmra.mxu0 %v4311
        %v4313 = vpop.f32.mrf.mxu0
        %v4314 = vadd.f32 %v3807, %v4313
        %v4315 = vpop.f32.mrf.mxu0
        %4316 = vmatprep.mubr.f32.mxu0 0.0
        %v4317 = vand.u32 %v665, 4294901760
        %4318 = vmatmul.mubr.f32.gmra.mxu0 %v4317
        %v4319 = vpop.f32.mrf.mxu0
        %v4320 = vadd.f32 %v3813, %v4319
        %v4321 = vpop.f32.mrf.mxu0
        %4322 = vmatprep.mubr.f32.mxu0 0.0
        %v4323 = vand.u32 %v666, 4294901760
        %4324 = vmatmul.mubr.f32.gmra.mxu0 %v4323
        %v4325 = vpop.f32.mrf.mxu0
        %v4326 = vadd.f32 %v3819, %v4325
        %v4327 = vpop.f32.mrf.mxu0
        %4328 = vmatprep.mubr.f32.mxu0 0.0
        %v4329 = vand.u32 %v667, 4294901760
        %4330 = vmatmul.mubr.f32.gmra.mxu0 %v4329
        %v4331 = vpop.f32.mrf.mxu0
        %v4332 = vadd.f32 %v3825, %v4331
        %v4333 = vpop.f32.mrf.mxu0
        %4334 = vdwg.mxu0
        %4335 = vst [vmem:[%s149] sm:$0xff] %v3912
        %4336 = vst [vmem:[%s149 + $0x8] sm:$0xff] %v3918
        %4337 = vst [vmem:[%s149 + $0x10] sm:$0xff] %v3924
        %4338 = vst [vmem:[%s149 + $0x18] sm:$0xff] %v3930
        %4339 = vst [vmem:[%s149 + $0x20] sm:$0xff] %v3936
        %4340 = vst [vmem:[%s149 + $0x28] sm:$0xff] %v3942
        %4341 = vst [vmem:[%s149 + $0x30] sm:$0xff] %v3948
        %4342 = vst [vmem:[%s149 + $0x38] sm:$0xff] %v3954
        %4343 = vst [vmem:[%s149 + $0x40] sm:$0xff] %v3960
        %4344 = vst [vmem:[%s149 + $0x48] sm:$0xff] %v3966
        %4345 = vst [vmem:[%s149 + $0x50] sm:$0xff] %v3972
        %4346 = vst [vmem:[%s149 + $0x58] sm:$0xff] %v3978
        %4347 = vst [vmem:[%s149 + $0x60] sm:$0xff] %v3984
        %4348 = vst [vmem:[%s149 + $0x68] sm:$0xff] %v3990
        %4349 = vst [vmem:[%s149 + $0x70] sm:$0xff] %v3996
        %4350 = vst [vmem:[%s149 + $0x78] sm:$0xff] %v4002
        %4351 = vst [vmem:[%s149 + $0x80] sm:$0xff] %v4008
        %4352 = vst [vmem:[%s149 + $0x88] sm:$0xff] %v4014
        %4353 = vst [vmem:[%s149 + $0x90] sm:$0xff] %v4020
        %4354 = vst [vmem:[%s149 + $0x98] sm:$0xff] %v4026
        %4355 = vst [vmem:[%s149 + $0xa0] sm:$0xff] %v4032
        %4356 = vst [vmem:[%s149 + $0xa8] sm:$0xff] %v4038
        %4357 = vst [vmem:[%s149 + $0xb0] sm:$0xff] %v4044
        %4358 = vst [vmem:[%s149 + $0xb8] sm:$0xff] %v4050
        %4359 = vst [vmem:[%s149 + $0xc0] sm:$0xff] %v4056
        %4360 = vst [vmem:[%s149 + $0xc8] sm:$0xff] %v4062
        %4361 = vst [vmem:[%s149 + $0xd0] sm:$0xff] %v4068
        %4362 = vst [vmem:[%s149 + $0xd8] sm:$0xff] %v4074
        %4363 = vst [vmem:[%s149 + $0xe0] sm:$0xff] %v4080
        %4364 = vst [vmem:[%s149 + $0xe8] sm:$0xff] %v4086
        %4365 = vst [vmem:[%s149 + $0xf0] sm:$0xff] %v4092
        %4366 = vst [vmem:[%s149 + $0xf8] sm:$0xff] %v4098
        %4367 = vst [vmem:[%s149 + $0x100] sm:$0xff] %v4104
        %4368 = vst [vmem:[%s149 + $0x108] sm:$0xff] %v4110
        %4369 = vst [vmem:[%s149 + $0x110] sm:$0xff] %v4116
        %4370 = vst [vmem:[%s149 + $0x118] sm:$0xff] %v4122
        %4371 = vst [vmem:[%s149 + $0x120] sm:$0xff] %v4128
        %4372 = vst [vmem:[%s149 + $0x128] sm:$0xff] %v4134
        %4373 = vst [vmem:[%s149 + $0x130] sm:$0xff] %v4140
        %4374 = vst [vmem:[%s149 + $0x138] sm:$0xff] %v4146
        %4375 = vst [vmem:[%s149 + $0x140] sm:$0xff] %v4152
        %4376 = vst [vmem:[%s149 + $0x148] sm:$0xff] %v4158
        %4377 = vst [vmem:[%s149 + $0x150] sm:$0xff] %v4164
        %4378 = vst [vmem:[%s149 + $0x158] sm:$0xff] %v4170
        %4379 = vst [vmem:[%s149 + $0x160] sm:$0xff] %v4176
        %4380 = vst [vmem:[%s149 + $0x168] sm:$0xff] %v4182
        %4381 = vst [vmem:[%s149 + $0x170] sm:$0xff] %v4188
        %4382 = vst [vmem:[%s149 + $0x178] sm:$0xff] %v4194
        %4383 = vst [vmem:[%s149 + $0x180] sm:$0xff] %v4200
        %4384 = vst [vmem:[%s149 + $0x188] sm:$0xff] %v4206
        %4385 = vst [vmem:[%s149 + $0x190] sm:$0xff] %v4212
        %4386 = vst [vmem:[%s149 + $0x198] sm:$0xff] %v4218
        %4387 = vst [vmem:[%s149 + $0x1a0] sm:$0xff] %v4224
        %4388 = vst [vmem:[%s149 + $0x1a8] sm:$0xff] %v4230
        %4389 = vst [vmem:[%s149 + $0x1b0] sm:$0xff] %v4236
        %4390 = vst [vmem:[%s149 + $0x1b8] sm:$0xff] %v4242
        %4391 = vst [vmem:[%s149 + $0x1c0] sm:$0xff] %v4248
        %4392 = vst [vmem:[%s149 + $0x1c8] sm:$0xff] %v4254
        %4393 = vst [vmem:[%s149 + $0x1d0] sm:$0xff] %v4260
        %4394 = vst [vmem:[%s149 + $0x1d8] sm:$0xff] %v4266
        %4395 = vst [vmem:[%s149 + $0x1e0] sm:$0xff] %v4272
        %4396 = vst [vmem:[%s149 + $0x1e8] sm:$0xff] %v4278
        %4397 = vst [vmem:[%s149 + $0x1f0] sm:$0xff] %v4284
        %4398 = vst [vmem:[%s149 + $0x1f8] sm:$0xff] %v4290
        %4399 = vst [vmem:[%s149 + $0x200] sm:$0xff] %v4296
        %4400 = vst [vmem:[%s149 + $0x208] sm:$0xff] %v4302
        %4401 = vst [vmem:[%s149 + $0x210] sm:$0xff] %v4308
        %4402 = vst [vmem:[%s149 + $0x218] sm:$0xff] %v4314
        %4403 = vst [vmem:[%s149 + $0x220] sm:$0xff] %v4320
        %4404 = vst [vmem:[%s149 + $0x228] sm:$0xff] %v4326
        %4405 = vst [vmem:[%s149 + $0x230] sm:$0xff] %v4332
        %s4406 = sand.u32 %s71, 1
        %s4407 = scalar_lea.sflag [#allocation3], %s4406
        %s4408 = sand.u32 %s71, 1
        %s4409 = smul.addr %s4408, 568
        %s4410 = scalar_lea.vmem [#allocation2], %s4409
        // Predicated region
        $region29: #{tpu_custom_call.1} parent=27 // pred_check
          %p4411 = pneg %p81
        $region30: #{tpu_custom_call.1} parent=27 // pred_check_branch
          %4413 = sbr.rel (%p4411) target = $region32
        $region31: #{tpu_custom_call.1} parent=27 // pred_region
          %s4414 = smul.u32 71, %s16
          %s4415 = ssub.s32 143, %s4414
          %p4416 = scmp.lt.s32.totalorder %s4415, 71
          %s4417 = scalar_select %p4416, %s4415, 71
          %s4418 = smul.u32 128, %s4417
          %s4420 = ssub.s32 9088, %s4418
          %4421 = vsyncadd %s4407, %s4420
          %p4422 = scmp.ne.s32.totalorder 0, %s4418
          %s4423 = smul.addr %s4414, 128
          %s4424 = scalar_lea.hbm %s2, %s4423
          %s4425 = smul.u32 8, %s4417
          %s4426 = sshll.u32 %s4410, 4
          %s4427 = int_to_ptr.vmem [resolvable:$true] %s4426
          %s4428 = sshll.u32 %s4425, 4
          %4432 = dma.vmem_to_hbm [thread:$0]  (%p4422), %s4427, %s4428, %s4424, %s4407, 128, 128, 8
        $region32: #{tpu_custom_call.1} parent=27 // pred_fallthru
          _
      $region28: #{tpu_custom_call.1} parent=5 // pred_fallthru
        _
      %p4433 = scmp.le.s32.totalorder 2, %s11
      // Predicated region
      $region33: #{tpu_custom_call.1} parent=5 // pred_check
        %p4434 = pneg %p4433
      $region34: #{tpu_custom_call.1} parent=5 // pred_check_branch
        %4436 = sbr.rel (%p4434) target = $region36
      $region35: #{tpu_custom_call.1} parent=5 // pred_region
        %s4437 = ssub.s32 %s11, 2
        // Predicated region
        $region37: #{tpu_custom_call.1} parent=35 // pred_check
          %p4438 = pneg %p87
        $region38: #{tpu_custom_call.1} parent=35 // pred_check_branch
          %4440 = sbr.rel (%p4438) target = $region40
        $region39: #{tpu_custom_call.1} parent=35 // pred_region
          %s4441 = sand.u32 %s72, 1
          %s4442 = scalar_lea.sflag [#allocation3], %s4441
          %s4443 = sand.u32 %s72, 1
          %s4444 = smul.addr %s4443, 568
          %s4445 = scalar_lea.vmem [#allocation2], %s4444
          %4446 = dma.done %s4442, 9088
        $region40: #{tpu_custom_call.1} parent=35 // pred_fallthru
          _
      $region36: #{tpu_custom_call.1} parent=5 // pred_fallthru
        _
    $region6: #{tpu_custom_call.1} parent=1 // loop_footer
      %s15 = sadd.s32 1, %s11
    $region7: #{tpu_custom_call.1} parent=1 // loop_footer_branch
      %10 = sbr.rel target = $region3
    $region8: #{tpu_custom_call.1} parent=1 // loop_exit
      _
    %4447 = vsyncpa [#allocation3], 1
    %s4448 = scalar_lea.sflag [#allocation3], 1
    %4449 = vsyncpa %s4448, 1

</llo_original>
